<compile_context>
chip_gen: v7x
topology: tpu7x:2x2x1
jax: 0.10.0
libtpu: 0.0.40
codegen_flags: <defaults>
</compile_context>

<pallas_src>
import functools

import jax
import jax.numpy as jnp
from jax import lax
from jax.experimental import pallas as pl
from jax.experimental.pallas import tpu as pltpu


def _round_up(x, m):
    return (x + m - 1) // m * m


def _talking_head_kernel(x_ref, wq_ref, wk_ref, wv_ref, wl_ref, ww_ref,
                         bw_ref, wp_ref, bp_ref, o_ref,
                         q_sc, k_sc, v_sc, *, num_heads, seq_len, tq):
    """One (batch, query-tile) grid step.  x_ref: (1, Np, C) (full sequence)."""
    H = num_heads
    Np, C = k_sc.shape
    qt = pl.program_id(1)

    # QKV projection for the whole (padded) sequence, computed once per batch
    # element at the first query tile (qt is the innermost grid axis) and kept
    # in persistent bf16 VMEM scratch for the remaining tiles.
    @pl.when(qt == 0)
    def _():
        xb = x_ref[0].astype(jnp.bfloat16)                         # (Np, C)
        q_sc[...] = jnp.dot(xb, wq_ref[...],
                            preferred_element_type=jnp.float32).astype(jnp.bfloat16)
        k_sc[...] = jnp.dot(xb, wk_ref[...],
                            preferred_element_type=jnp.float32).astype(jnp.bfloat16)
        v_sc[...] = jnp.dot(xb, wv_ref[...],
                            preferred_element_type=jnp.float32).astype(jnp.bfloat16)

    row0 = pl.multiple_of(qt * tq, tq)
    q_t = q_sc[pl.ds(row0, tq), :]                                 # (TQ, C) bf16
    k = k_sc[...]                                                  # (Np, C) bf16
    v = v_sc[...]                                                  # (Np, C) bf16

    # proj_w bias term: bw[h] * sum_j V_h[j, :]  (padded V rows are exactly 0).
    v_colsum = jnp.sum(v.astype(jnp.float32), axis=0, keepdims=True)   # (1, C)

    if seq_len < Np:
        key_ok = lax.broadcasted_iota(jnp.int32, (tq, Np), 1) < seq_len
    else:
        key_ok = None

    acc = jnp.zeros((tq, C), jnp.float32)
    for h in range(H):
        # proj_l (and the attention scale) folded into per-head Q column
        # scales -> one full-C-contraction MXU matmul per head.
        qh = q_t * wl_ref[h:h + 1, :]                              # (TQ, C) bf16
        s = lax.dot_general(qh, k, (((1,), (1,)), ((), ())),
                            preferred_element_type=jnp.float32)    # (TQ, Np) f32
        if key_ok is not None:
            s = jnp.where(key_ok, s, -1e30)
        s = s - jnp.max(s, axis=-1, keepdims=True)
        e = jnp.exp(s)
        p = (e * pl.reciprocal(jnp.sum(e, axis=-1, keepdims=True),
                               approx=True)).astype(jnp.bfloat16)  # (TQ, Np)
        # proj_w folded in after the MXU product (full-Np contraction):
        #   acc += (p_h @ V) ⊙ ww_exp[h]
        u = jnp.dot(p, v, preferred_element_type=jnp.float32)      # (TQ, C) f32
        acc = acc + u * ww_ref[h:h + 1, :]

    acc = acc + bw_ref[...] * v_colsum                             # proj_w bias
    # Output projection: single (TQ, C) @ (C, C) matmul on the already
    # head-concatenated accumulator.
    y = jnp.dot(acc.astype(jnp.bfloat16), wp_ref[...],
                preferred_element_type=jnp.float32) + bp_ref[...]
    o_ref[0] = y.astype(o_ref.dtype)


def talking_head_attn(x, params, num_heads):
    B, N, C = x.shape
    H = num_heads
    assert C % H == 0
    D = C // H
    scale = D ** (-0.5)

    # Pad the sequence to a lane-/MXU-aligned length; mask handles the rest.
    Np = max(128, _round_up(N, 128))
    TQ = 256 if Np % 256 == 0 else 128
    n_qt = Np // TQ
    x_pad = x if Np == N else jnp.pad(x, ((0, 0), (0, Np - N), (0, 0)))

    # PyTorch Linear weights are (out, in); transpose so the kernel does x @ W.
    w_qkv = params["w_qkv"]
    wq_t = jnp.transpose(w_qkv[:C]).astype(jnp.bfloat16)           # (C, C)
    wk_t = jnp.transpose(w_qkv[C:2 * C]).astype(jnp.bfloat16)      # (C, C)
    wv_t = jnp.transpose(w_qkv[2 * C:]).astype(jnp.bfloat16)       # (C, C)
    wp_t = jnp.transpose(params["w_proj"]).astype(jnp.bfloat16)    # (C, C)
    bp = params["b_proj"].reshape(1, C).astype(jnp.float32)

    # Talking-head mixes expanded to per-channel scale vectors:
    #   wl_exp[h, g*D+d] = scale * Wl[h, g]  (proj_l row h, folded into Q)
    #   ww_exp[h, g*D+d] = Ww[g, h]          (proj_w col h, applied to p_h @ V)
    #   bw_exp[0, g*D+d] = bw[g]             (proj_w bias -> bw ⊙ colsum(V))
    # proj_l's bias is constant along each softmax row and cancels exactly.
    wl_exp = jnp.repeat(scale * params["w_proj_l"], D, axis=1).astype(jnp.bfloat16)
    ww_exp = jnp.repeat(params["w_proj_w"].T, D, axis=1).astype(jnp.float32)
    bw_exp = jnp.repeat(params["b_proj_w"], D).reshape(1, C).astype(jnp.float32)

    kernel = functools.partial(_talking_head_kernel,
                               num_heads=H, seq_len=N, tq=TQ)
    const = lambda b, qt: (0, 0)

    out = pl.pallas_call(
        kernel,
        out_shape=jax.ShapeDtypeStruct((B, Np, C), x.dtype),
        grid=(B, n_qt),
        in_specs=[
            pl.BlockSpec((1, Np, C), lambda b, qt: (b, 0, 0)),     # x (padded)
            pl.BlockSpec((C, C), const),                           # Wq^T
            pl.BlockSpec((C, C), const),                           # Wk^T
            pl.BlockSpec((C, C), const),                           # Wv^T
            pl.BlockSpec((H, C), const),                           # wl_exp
            pl.BlockSpec((H, C), const),                           # ww_exp
            pl.BlockSpec((1, C), const),                           # bw_exp
            pl.BlockSpec((C, C), const),                           # Wp^T
            pl.BlockSpec((1, C), const),                           # b_proj
        ],
        out_specs=pl.BlockSpec((1, TQ, C), lambda b, qt: (b, qt, 0)),
        scratch_shapes=[
            pltpu.VMEM((Np, C), jnp.bfloat16),                     # Q
            pltpu.VMEM((Np, C), jnp.bfloat16),                     # K
            pltpu.VMEM((Np, C), jnp.bfloat16),                     # V
        ],
        compiler_params=pltpu.CompilerParams(
            # Megacore over batch; the query-tile axis must stay sequential
            # because K/V scratch is filled at qt == 0 and reused afterwards.
            dimension_semantics=("parallel", "arbitrary"),
            vmem_limit_bytes=48 * 1024 * 1024,
        ),
    )(x_pad, wq_t, wk_t, wv_t, wl_exp, ww_exp, bw_exp, wp_t, bp)

    return out[:, :N, :] if Np != N else out


def talking_head_attn_ref(x, params, num_heads):
    """Pure-JAX f32 reference mirroring the PyTorch forward exactly."""
    B, N, C = x.shape
    H = num_heads
    D = C // H
    scale = D ** (-0.5)
    qkv = x @ params["w_qkv"].T                                    # (B, N, 3C)
    qkv = qkv.reshape(B, N, 3, H, D).transpose(2, 0, 3, 1, 4)
    q, k, v = qkv[0] * scale, qkv[1], qkv[2]                       # (B, H, N, D)
    attn = q @ jnp.swapaxes(k, -2, -1)                             # (B, H, N, N)
    attn = (jnp.einsum("bgij,hg->bhij", attn, params["w_proj_l"])
            + params["b_proj_l"][None, :, None, None])
    attn = jax.nn.softmax(attn, axis=-1)
    attn = (jnp.einsum("bgij,hg->bhij", attn, params["w_proj_w"])
            + params["b_proj_w"][None, :, None, None])
    out = (attn @ v).transpose(0, 2, 1, 3).reshape(B, N, C)
    return out @ params["w_proj"].T + params["b_proj"]


def init_params(key, dim, num_heads):
    ks = jax.random.split(key, 7)
    return {
        "w_qkv":    0.02 * jax.random.normal(ks[0], (3 * dim, dim), jnp.float32),
        "w_proj":   0.02 * jax.random.normal(ks[1], (dim, dim), jnp.float32),
        "b_proj":   0.02 * jax.random.normal(ks[2], (dim,), jnp.float32),
        "w_proj_l": 0.02 * jax.random.normal(ks[3], (num_heads, num_heads), jnp.float32),
        "b_proj_l": 0.02 * jax.random.normal(ks[4], (num_heads,), jnp.float32),
        "w_proj_w": 0.02 * jax.random.normal(ks[5], (num_heads, num_heads), jnp.float32),
        "b_proj_w": 0.02 * jax.random.normal(ks[6], (num_heads,), jnp.float32),
    }


if __name__ == "__main__":
    def check(key, B, N, C, H):
        kx, kp = jax.random.split(key)
        x = jax.random.normal(kx, (B, N, C), jnp.float32)
        params = init_params(kp, C, H)
        out = jax.block_until_ready(talking_head_attn(x, params, num_heads=H))
        ref = talking_head_attn_ref(x, params, num_heads=H)
        assert out.shape == (B, N, C)
        assert bool(jnp.all(jnp.isfinite(out)))
        err = float(jnp.max(jnp.abs(out - ref)))
        # bf16 matmul operands + approx reciprocal -> slightly loose tolerance.
        assert bool(jnp.allclose(out, ref, atol=2e-3, rtol=2e-2)), \
            f"max abs err {err}"

    base = jax.random.PRNGKey(0)
    k0, k1 = jax.random.split(base)
    # Small primary shape (module default num_heads=8); exercises pad + mask.
    check(k0, B=2, N=8, C=32, H=8)
    # Larger check: padding/masking plus the multi-query-tile scratch-reuse
    # path (Np = 384 -> three TQ=128 tiles per batch element).
    check(k1, B=1, N=300, C=64, H=8)
    print("KERNEL_OK")
</pallas_src>

<mosaic_0001>
module attributes {stable_mosaic.version = 11 : i64} {
  func.func @_talking_head_kernel(%arg0: i32, %arg1: i32, %arg2: memref<1x128x32xf32, #tpu.memory_space<vmem>>, %arg3: memref<32x32xbf16, #tpu.memory_space<vmem>>, %arg4: memref<32x32xbf16, #tpu.memory_space<vmem>>, %arg5: memref<32x32xbf16, #tpu.memory_space<vmem>>, %arg6: memref<8x32xbf16, #tpu.memory_space<vmem>>, %arg7: memref<8x32xf32, #tpu.memory_space<vmem>>, %arg8: memref<1x32xf32, #tpu.memory_space<vmem>>, %arg9: memref<32x32xbf16, #tpu.memory_space<vmem>>, %arg10: memref<1x32xf32, #tpu.memory_space<vmem>>, %arg11: memref<1x128x32xf32, #tpu.memory_space<vmem>>, %arg12: memref<128x32xbf16, #tpu.memory_space<vmem>>, %arg13: memref<128x32xbf16, #tpu.memory_space<vmem>>, %arg14: memref<128x32xbf16, #tpu.memory_space<vmem>>) attributes {dimension_semantics = [#tpu.dimension_semantics<parallel>, #tpu.dimension_semantics<arbitrary>], iteration_bounds = array<i64: 2, 1>, scalar_prefetch = 0 : i64, scratch_operands = 3 : i64, tpu.core_type = #tpu.core_type<tc>, window_params = [{transform_indices = @transform_0, window_bounds = array<i64: 1, 128, 32>}, {pipeline_mode = #tpu.pipeline_mode<synchronous>, transform_indices = @transform_1, window_bounds = array<i64: 32, 32>}, {pipeline_mode = #tpu.pipeline_mode<synchronous>, transform_indices = @transform_2, window_bounds = array<i64: 32, 32>}, {pipeline_mode = #tpu.pipeline_mode<synchronous>, transform_indices = @transform_3, window_bounds = array<i64: 32, 32>}, {pipeline_mode = #tpu.pipeline_mode<synchronous>, transform_indices = @transform_4, window_bounds = array<i64: 8, 32>}, {pipeline_mode = #tpu.pipeline_mode<synchronous>, transform_indices = @transform_5, window_bounds = array<i64: 8, 32>}, {pipeline_mode = #tpu.pipeline_mode<synchronous>, transform_indices = @transform_6, window_bounds = array<i64: 1, 32>}, {pipeline_mode = #tpu.pipeline_mode<synchronous>, transform_indices = @transform_7, window_bounds = array<i64: 32, 32>}, {pipeline_mode = #tpu.pipeline_mode<synchronous>, transform_indices = @transform_8, window_bounds = array<i64: 1, 32>}, {transform_indices = @transform_9, window_bounds = array<i64: 1, 128, 32>}]} {
    %c0_i32 = arith.constant 0 : i32
    %0 = arith.cmpi eq, %arg1, %c0_i32 : i32
    %1 = arith.extui %0 : i1 to i32
    %c0_i32_0 = arith.constant 0 : i32
    %2 = arith.cmpi ne, %1, %c0_i32_0 : i32
    scf.if %2 {
      %c0_81 = arith.constant 0 : index
      %c0_82 = arith.constant 0 : index
      %c0_83 = arith.constant 0 : index
      %205 = vector.load %arg2[%c0_81, %c0_82, %c0_83] : memref<1x128x32xf32, #tpu.memory_space<vmem>>, vector<1x128x32xf32>
      %206 = vector.shape_cast %205 : vector<1x128x32xf32> to vector<128x32xf32>
      %207 = arith.truncf %206 : vector<128x32xf32> to vector<128x32xbf16>
      %c0_84 = arith.constant 0 : index
      %c0_85 = arith.constant 0 : index
      %208 = vector.load %arg3[%c0_84, %c0_85] : memref<32x32xbf16, #tpu.memory_space<vmem>>, vector<32x32xbf16>
      %cst_86 = arith.constant dense<0.000000e+00> : vector<128x32xf32>
      %209 = tpu.matmul %207, %208, %cst_86 {dimension_numbers = #tpu.dot_dimension_numbers<[1], [0], [0], [1], [0, 0, 1, 1], [], []>} : vector<128x32xbf16>, vector<32x32xbf16>, vector<128x32xf32> -> vector<128x32xf32>
      %210 = arith.truncf %209 : vector<128x32xf32> to vector<128x32xbf16>
      %c0_87 = arith.constant 0 : index
      %c0_88 = arith.constant 0 : index
      %211 = vector.load %arg12[%c0_87, %c0_88] : memref<128x32xbf16, #tpu.memory_space<vmem>>, vector<128x32xbf16>
      tpu.vector_store %arg12[%c0_87, %c0_88], %210 {strides = array<i32>} : memref<128x32xbf16, #tpu.memory_space<vmem>>, vector<128x32xbf16>,
      %c0_89 = arith.constant 0 : index
      %c0_90 = arith.constant 0 : index
      %212 = vector.load %arg4[%c0_89, %c0_90] : memref<32x32xbf16, #tpu.memory_space<vmem>>, vector<32x32xbf16>
      %cst_91 = arith.constant dense<0.000000e+00> : vector<128x32xf32>
      %213 = tpu.matmul %207, %212, %cst_91 {dimension_numbers = #tpu.dot_dimension_numbers<[1], [0], [0], [1], [0, 0, 1, 1], [], []>} : vector<128x32xbf16>, vector<32x32xbf16>, vector<128x32xf32> -> vector<128x32xf32>
      %214 = arith.truncf %213 : vector<128x32xf32> to vector<128x32xbf16>
      %c0_92 = arith.constant 0 : index
      %c0_93 = arith.constant 0 : index
      %215 = vector.load %arg13[%c0_92, %c0_93] : memref<128x32xbf16, #tpu.memory_space<vmem>>, vector<128x32xbf16>
      tpu.vector_store %arg13[%c0_92, %c0_93], %214 {strides = array<i32>} : memref<128x32xbf16, #tpu.memory_space<vmem>>, vector<128x32xbf16>,
      %c0_94 = arith.constant 0 : index
      %c0_95 = arith.constant 0 : index
      %216 = vector.load %arg5[%c0_94, %c0_95] : memref<32x32xbf16, #tpu.memory_space<vmem>>, vector<32x32xbf16>
      %cst_96 = arith.constant dense<0.000000e+00> : vector<128x32xf32>
      %217 = tpu.matmul %207, %216, %cst_96 {dimension_numbers = #tpu.dot_dimension_numbers<[1], [0], [0], [1], [0, 0, 1, 1], [], []>} : vector<128x32xbf16>, vector<32x32xbf16>, vector<128x32xf32> -> vector<128x32xf32>
      %218 = arith.truncf %217 : vector<128x32xf32> to vector<128x32xbf16>
      %c0_97 = arith.constant 0 : index
      %c0_98 = arith.constant 0 : index
      %219 = vector.load %arg14[%c0_97, %c0_98] : memref<128x32xbf16, #tpu.memory_space<vmem>>, vector<128x32xbf16>
      tpu.vector_store %arg14[%c0_97, %c0_98], %218 {strides = array<i32>} : memref<128x32xbf16, #tpu.memory_space<vmem>>, vector<128x32xbf16>,
    } else {
    }
    %c128_i32 = arith.constant 128 : i32
    %3 = arith.muli %arg1, %c128_i32 : i32
    %4 = tpu.assume_multiple %3, 128 : i32
    %5 = arith.index_cast %4 : i32 to index
    %c0 = arith.constant 0 : index
    %6 = vector.load %arg12[%5, %c0] : memref<128x32xbf16, #tpu.memory_space<vmem>>, vector<128x32xbf16>
    %c0_1 = arith.constant 0 : index
    %c0_2 = arith.constant 0 : index
    %7 = vector.load %arg13[%c0_1, %c0_2] : memref<128x32xbf16, #tpu.memory_space<vmem>>, vector<128x32xbf16>
    %c0_3 = arith.constant 0 : index
    %c0_4 = arith.constant 0 : index
    %8 = vector.load %arg14[%c0_3, %c0_4] : memref<128x32xbf16, #tpu.memory_space<vmem>>, vector<128x32xbf16>
    %9 = arith.extf %8 : vector<128x32xbf16> to vector<128x32xf32>
    %cst = arith.constant dense<0.000000e+00> : vector<32xf32>
    %10 = vector.multi_reduction <add>, %9, %cst [0] : vector<128x32xf32> to vector<32xf32>
    %11 = vector.shape_cast %10 : vector<32xf32> to vector<1x32xf32>
    %12 = tpu.iota {dimensions = array<i32: 1>} : vector<128x128xi32>
    %c8_i32 = arith.constant 8 : i32
    %13 = vector.broadcast %c8_i32 : i32 to vector<128x128xi32>
    %14 = arith.cmpi slt, %12, %13 : vector<128x128xi32>
    %cst_5 = arith.constant 0.000000e+00 : f32
    %15 = vector.broadcast %cst_5 : f32 to vector<128x32xf32>
    %c0_6 = arith.constant 0 : index
    %c0_7 = arith.constant 0 : index
    %16 = vector.load %arg6[%c0_6, %c0_7] : memref<8x32xbf16, #tpu.memory_space<vmem>>, vector<1x32xbf16>
    %17 = vector.broadcast %16 : vector<1x32xbf16> to vector<128x32xbf16>
    %18 = arith.mulf %6, %17 : vector<128x32xbf16>
    %cst_8 = arith.constant dense<0.000000e+00> : vector<128x128xf32>
    %19 = tpu.matmul %18, %7, %cst_8 {dimension_numbers = #tpu.dot_dimension_numbers<[1], [1], [0], [0], [0, 0, 1, 0], [], []>} : vector<128x32xbf16>, vector<128x32xbf16>, vector<128x128xf32> -> vector<128x128xf32>
    %cst_9 = arith.constant -1.000000e+30 : f32
    %20 = vector.broadcast %cst_9 : f32 to vector<128x128xf32>
    %21 = arith.select %14, %19, %20 : vector<128x128xi1>, vector<128x128xf32>
    %cst_10 = arith.constant dense<0xFF800000> : vector<128xf32>
    %22 = vector.multi_reduction <maximumf>, %21, %cst_10 [1] : vector<128x128xf32> to vector<128xf32>
    %23 = vector.shape_cast %22 : vector<128xf32> to vector<128x1xf32>
    %24 = vector.broadcast %23 : vector<128x1xf32> to vector<128x128xf32>
    %25 = arith.subf %21, %24 : vector<128x128xf32>
    %26 = math.exp %25 : vector<128x128xf32>
    %cst_11 = arith.constant dense<0.000000e+00> : vector<128xf32>
    %27 = vector.multi_reduction <add>, %26, %cst_11 [1] : vector<128x128xf32> to vector<128xf32>
    %28 = vector.shape_cast %27 : vector<128xf32> to vector<128x1xf32>
    %29 = tpu.reciprocal %28 {approx = true} : vector<128x1xf32> -> vector<128x1xf32>
    %30 = vector.broadcast %29 : vector<128x1xf32> to vector<128x128xf32>
    %31 = arith.mulf %26, %30 : vector<128x128xf32>
    %32 = arith.truncf %31 : vector<128x128xf32> to vector<128x128xbf16>
    %cst_12 = arith.constant dense<0.000000e+00> : vector<128x32xf32>
    %33 = tpu.matmul %32, %8, %cst_12 {dimension_numbers = #tpu.dot_dimension_numbers<[1], [0], [0], [1], [0, 0, 1, 1], [], []>} : vector<128x128xbf16>, vector<128x32xbf16>, vector<128x32xf32> -> vector<128x32xf32>
    %c0_13 = arith.constant 0 : index
    %c0_14 = arith.constant 0 : index
    %34 = vector.load %arg7[%c0_13, %c0_14] : memref<8x32xf32, #tpu.memory_space<vmem>>, vector<1x32xf32>
    %35 = vector.broadcast %34 : vector<1x32xf32> to vector<128x32xf32>
    %36 = arith.mulf %33, %35 : vector<128x32xf32>
    %37 = arith.addf %15, %36 : vector<128x32xf32>
    %c1 = arith.constant 1 : index
    %c0_15 = arith.constant 0 : index
    %38 = vector.load %arg6[%c1, %c0_15] : memref<8x32xbf16, #tpu.memory_space<vmem>>, vector<1x32xbf16>
    %39 = vector.broadcast %38 : vector<1x32xbf16> to vector<128x32xbf16>
    %40 = arith.mulf %6, %39 : vector<128x32xbf16>
    %cst_16 = arith.constant dense<0.000000e+00> : vector<128x128xf32>
    %41 = tpu.matmul %40, %7, %cst_16 {dimension_numbers = #tpu.dot_dimension_numbers<[1], [1], [0], [0], [0, 0, 1, 0], [], []>} : vector<128x32xbf16>, vector<128x32xbf16>, vector<128x128xf32> -> vector<128x128xf32>
    %cst_17 = arith.constant -1.000000e+30 : f32
    %42 = vector.broadcast %cst_17 : f32 to vector<128x128xf32>
    %43 = arith.select %14, %41, %42 : vector<128x128xi1>, vector<128x128xf32>
    %cst_18 = arith.constant dense<0xFF800000> : vector<128xf32>
    %44 = vector.multi_reduction <maximumf>, %43, %cst_18 [1] : vector<128x128xf32> to vector<128xf32>
    %45 = vector.shape_cast %44 : vector<128xf32> to vector<128x1xf32>
    %46 = vector.broadcast %45 : vector<128x1xf32> to vector<128x128xf32>
    %47 = arith.subf %43, %46 : vector<128x128xf32>
    %48 = math.exp %47 : vector<128x128xf32>
    %cst_19 = arith.constant dense<0.000000e+00> : vector<128xf32>
    %49 = vector.multi_reduction <add>, %48, %cst_19 [1] : vector<128x128xf32> to vector<128xf32>
    %50 = vector.shape_cast %49 : vector<128xf32> to vector<128x1xf32>
    %51 = tpu.reciprocal %50 {approx = true} : vector<128x1xf32> -> vector<128x1xf32>
    %52 = vector.broadcast %51 : vector<128x1xf32> to vector<128x128xf32>
    %53 = arith.mulf %48, %52 : vector<128x128xf32>
    %54 = arith.truncf %53 : vector<128x128xf32> to vector<128x128xbf16>
    %cst_20 = arith.constant dense<0.000000e+00> : vector<128x32xf32>
    %55 = tpu.matmul %54, %8, %cst_20 {dimension_numbers = #tpu.dot_dimension_numbers<[1], [0], [0], [1], [0, 0, 1, 1], [], []>} : vector<128x128xbf16>, vector<128x32xbf16>, vector<128x32xf32> -> vector<128x32xf32>
    %c1_21 = arith.constant 1 : index
    %c0_22 = arith.constant 0 : index
    %56 = vector.load %arg7[%c1_21, %c0_22] : memref<8x32xf32, #tpu.memory_space<vmem>>, vector<1x32xf32>
    %57 = vector.broadcast %56 : vector<1x32xf32> to vector<128x32xf32>
    %58 = arith.mulf %55, %57 : vector<128x32xf32>
    %59 = arith.addf %37, %58 : vector<128x32xf32>
    %c2 = arith.constant 2 : index
    %c0_23 = arith.constant 0 : index
    %60 = vector.load %arg6[%c2, %c0_23] : memref<8x32xbf16, #tpu.memory_space<vmem>>, vector<1x32xbf16>
    %61 = vector.broadcast %60 : vector<1x32xbf16> to vector<128x32xbf16>
    %62 = arith.mulf %6, %61 : vector<128x32xbf16>
    %cst_24 = arith.constant dense<0.000000e+00> : vector<128x128xf32>
    %63 = tpu.matmul %62, %7, %cst_24 {dimension_numbers = #tpu.dot_dimension_numbers<[1], [1], [0], [0], [0, 0, 1, 0], [], []>} : vector<128x32xbf16>, vector<128x32xbf16>, vector<128x128xf32> -> vector<128x128xf32>
    %cst_25 = arith.constant -1.000000e+30 : f32
    %64 = vector.broadcast %cst_25 : f32 to vector<128x128xf32>
    %65 = arith.select %14, %63, %64 : vector<128x128xi1>, vector<128x128xf32>
    %cst_26 = arith.constant dense<0xFF800000> : vector<128xf32>
    %66 = vector.multi_reduction <maximumf>, %65, %cst_26 [1] : vector<128x128xf32> to vector<128xf32>
    %67 = vector.shape_cast %66 : vector<128xf32> to vector<128x1xf32>
    %68 = vector.broadcast %67 : vector<128x1xf32> to vector<128x128xf32>
    %69 = arith.subf %65, %68 : vector<128x128xf32>
    %70 = math.exp %69 : vector<128x128xf32>
    %cst_27 = arith.constant dense<0.000000e+00> : vector<128xf32>
    %71 = vector.multi_reduction <add>, %70, %cst_27 [1] : vector<128x128xf32> to vector<128xf32>
    %72 = vector.shape_cast %71 : vector<128xf32> to vector<128x1xf32>
    %73 = tpu.reciprocal %72 {approx = true} : vector<128x1xf32> -> vector<128x1xf32>
    %74 = vector.broadcast %73 : vector<128x1xf32> to vector<128x128xf32>
    %75 = arith.mulf %70, %74 : vector<128x128xf32>
    %76 = arith.truncf %75 : vector<128x128xf32> to vector<128x128xbf16>
    %cst_28 = arith.constant dense<0.000000e+00> : vector<128x32xf32>
    %77 = tpu.matmul %76, %8, %cst_28 {dimension_numbers = #tpu.dot_dimension_numbers<[1], [0], [0], [1], [0, 0, 1, 1], [], []>} : vector<128x128xbf16>, vector<128x32xbf16>, vector<128x32xf32> -> vector<128x32xf32>
    %c2_29 = arith.constant 2 : index
    %c0_30 = arith.constant 0 : index
    %78 = vector.load %arg7[%c2_29, %c0_30] : memref<8x32xf32, #tpu.memory_space<vmem>>, vector<1x32xf32>
    %79 = vector.broadcast %78 : vector<1x32xf32> to vector<128x32xf32>
    %80 = arith.mulf %77, %79 : vector<128x32xf32>
    %81 = arith.addf %59, %80 : vector<128x32xf32>
    %c3 = arith.constant 3 : index
    %c0_31 = arith.constant 0 : index
    %82 = vector.load %arg6[%c3, %c0_31] : memref<8x32xbf16, #tpu.memory_space<vmem>>, vector<1x32xbf16>
    %83 = vector.broadcast %82 : vector<1x32xbf16> to vector<128x32xbf16>
    %84 = arith.mulf %6, %83 : vector<128x32xbf16>
    %cst_32 = arith.constant dense<0.000000e+00> : vector<128x128xf32>
    %85 = tpu.matmul %84, %7, %cst_32 {dimension_numbers = #tpu.dot_dimension_numbers<[1], [1], [0], [0], [0, 0, 1, 0], [], []>} : vector<128x32xbf16>, vector<128x32xbf16>, vector<128x128xf32> -> vector<128x128xf32>
    %cst_33 = arith.constant -1.000000e+30 : f32
    %86 = vector.broadcast %cst_33 : f32 to vector<128x128xf32>
    %87 = arith.select %14, %85, %86 : vector<128x128xi1>, vector<128x128xf32>
    %cst_34 = arith.constant dense<0xFF800000> : vector<128xf32>
    %88 = vector.multi_reduction <maximumf>, %87, %cst_34 [1] : vector<128x128xf32> to vector<128xf32>
    %89 = vector.shape_cast %88 : vector<128xf32> to vector<128x1xf32>
    %90 = vector.broadcast %89 : vector<128x1xf32> to vector<128x128xf32>
    %91 = arith.subf %87, %90 : vector<128x128xf32>
    %92 = math.exp %91 : vector<128x128xf32>
    %cst_35 = arith.constant dense<0.000000e+00> : vector<128xf32>
    %93 = vector.multi_reduction <add>, %92, %cst_35 [1] : vector<128x128xf32> to vector<128xf32>
    %94 = vector.shape_cast %93 : vector<128xf32> to vector<128x1xf32>
    %95 = tpu.reciprocal %94 {approx = true} : vector<128x1xf32> -> vector<128x1xf32>
    %96 = vector.broadcast %95 : vector<128x1xf32> to vector<128x128xf32>
    %97 = arith.mulf %92, %96 : vector<128x128xf32>
    %98 = arith.truncf %97 : vector<128x128xf32> to vector<128x128xbf16>
    %cst_36 = arith.constant dense<0.000000e+00> : vector<128x32xf32>
    %99 = tpu.matmul %98, %8, %cst_36 {dimension_numbers = #tpu.dot_dimension_numbers<[1], [0], [0], [1], [0, 0, 1, 1], [], []>} : vector<128x128xbf16>, vector<128x32xbf16>, vector<128x32xf32> -> vector<128x32xf32>
    %c3_37 = arith.constant 3 : index
    %c0_38 = arith.constant 0 : index
    %100 = vector.load %arg7[%c3_37, %c0_38] : memref<8x32xf32, #tpu.memory_space<vmem>>, vector<1x32xf32>
    %101 = vector.broadcast %100 : vector<1x32xf32> to vector<128x32xf32>
    %102 = arith.mulf %99, %101 : vector<128x32xf32>
    %103 = arith.addf %81, %102 : vector<128x32xf32>
    %c4 = arith.constant 4 : index
    %c0_39 = arith.constant 0 : index
    %104 = vector.load %arg6[%c4, %c0_39] : memref<8x32xbf16, #tpu.memory_space<vmem>>, vector<1x32xbf16>
    %105 = vector.broadcast %104 : vector<1x32xbf16> to vector<128x32xbf16>
    %106 = arith.mulf %6, %105 : vector<128x32xbf16>
    %cst_40 = arith.constant dense<0.000000e+00> : vector<128x128xf32>
    %107 = tpu.matmul %106, %7, %cst_40 {dimension_numbers = #tpu.dot_dimension_numbers<[1], [1], [0], [0], [0, 0, 1, 0], [], []>} : vector<128x32xbf16>, vector<128x32xbf16>, vector<128x128xf32> -> vector<128x128xf32>
    %cst_41 = arith.constant -1.000000e+30 : f32
    %108 = vector.broadcast %cst_41 : f32 to vector<128x128xf32>
    %109 = arith.select %14, %107, %108 : vector<128x128xi1>, vector<128x128xf32>
    %cst_42 = arith.constant dense<0xFF800000> : vector<128xf32>
    %110 = vector.multi_reduction <maximumf>, %109, %cst_42 [1] : vector<128x128xf32> to vector<128xf32>
    %111 = vector.shape_cast %110 : vector<128xf32> to vector<128x1xf32>
    %112 = vector.broadcast %111 : vector<128x1xf32> to vector<128x128xf32>
    %113 = arith.subf %109, %112 : vector<128x128xf32>
    %114 = math.exp %113 : vector<128x128xf32>
    %cst_43 = arith.constant dense<0.000000e+00> : vector<128xf32>
    %115 = vector.multi_reduction <add>, %114, %cst_43 [1] : vector<128x128xf32> to vector<128xf32>
    %116 = vector.shape_cast %115 : vector<128xf32> to vector<128x1xf32>
    %117 = tpu.reciprocal %116 {approx = true} : vector<128x1xf32> -> vector<128x1xf32>
    %118 = vector.broadcast %117 : vector<128x1xf32> to vector<128x128xf32>
    %119 = arith.mulf %114, %118 : vector<128x128xf32>
    %120 = arith.truncf %119 : vector<128x128xf32> to vector<128x128xbf16>
    %cst_44 = arith.constant dense<0.000000e+00> : vector<128x32xf32>
    %121 = tpu.matmul %120, %8, %cst_44 {dimension_numbers = #tpu.dot_dimension_numbers<[1], [0], [0], [1], [0, 0, 1, 1], [], []>} : vector<128x128xbf16>, vector<128x32xbf16>, vector<128x32xf32> -> vector<128x32xf32>
    %c4_45 = arith.constant 4 : index
    %c0_46 = arith.constant 0 : index
    %122 = vector.load %arg7[%c4_45, %c0_46] : memref<8x32xf32, #tpu.memory_space<vmem>>, vector<1x32xf32>
    %123 = vector.broadcast %122 : vector<1x32xf32> to vector<128x32xf32>
    %124 = arith.mulf %121, %123 : vector<128x32xf32>
    %125 = arith.addf %103, %124 : vector<128x32xf32>
    %c5 = arith.constant 5 : index
    %c0_47 = arith.constant 0 : index
    %126 = vector.load %arg6[%c5, %c0_47] : memref<8x32xbf16, #tpu.memory_space<vmem>>, vector<1x32xbf16>
    %127 = vector.broadcast %126 : vector<1x32xbf16> to vector<128x32xbf16>
    %128 = arith.mulf %6, %127 : vector<128x32xbf16>
    %cst_48 = arith.constant dense<0.000000e+00> : vector<128x128xf32>
    %129 = tpu.matmul %128, %7, %cst_48 {dimension_numbers = #tpu.dot_dimension_numbers<[1], [1], [0], [0], [0, 0, 1, 0], [], []>} : vector<128x32xbf16>, vector<128x32xbf16>, vector<128x128xf32> -> vector<128x128xf32>
    %cst_49 = arith.constant -1.000000e+30 : f32
    %130 = vector.broadcast %cst_49 : f32 to vector<128x128xf32>
    %131 = arith.select %14, %129, %130 : vector<128x128xi1>, vector<128x128xf32>
    %cst_50 = arith.constant dense<0xFF800000> : vector<128xf32>
    %132 = vector.multi_reduction <maximumf>, %131, %cst_50 [1] : vector<128x128xf32> to vector<128xf32>
    %133 = vector.shape_cast %132 : vector<128xf32> to vector<128x1xf32>
    %134 = vector.broadcast %133 : vector<128x1xf32> to vector<128x128xf32>
    %135 = arith.subf %131, %134 : vector<128x128xf32>
    %136 = math.exp %135 : vector<128x128xf32>
    %cst_51 = arith.constant dense<0.000000e+00> : vector<128xf32>
    %137 = vector.multi_reduction <add>, %136, %cst_51 [1] : vector<128x128xf32> to vector<128xf32>
    %138 = vector.shape_cast %137 : vector<128xf32> to vector<128x1xf32>
    %139 = tpu.reciprocal %138 {approx = true} : vector<128x1xf32> -> vector<128x1xf32>
    %140 = vector.broadcast %139 : vector<128x1xf32> to vector<128x128xf32>
    %141 = arith.mulf %136, %140 : vector<128x128xf32>
    %142 = arith.truncf %141 : vector<128x128xf32> to vector<128x128xbf16>
    %cst_52 = arith.constant dense<0.000000e+00> : vector<128x32xf32>
    %143 = tpu.matmul %142, %8, %cst_52 {dimension_numbers = #tpu.dot_dimension_numbers<[1], [0], [0], [1], [0, 0, 1, 1], [], []>} : vector<128x128xbf16>, vector<128x32xbf16>, vector<128x32xf32> -> vector<128x32xf32>
    %c5_53 = arith.constant 5 : index
    %c0_54 = arith.constant 0 : index
    %144 = vector.load %arg7[%c5_53, %c0_54] : memref<8x32xf32, #tpu.memory_space<vmem>>, vector<1x32xf32>
    %145 = vector.broadcast %144 : vector<1x32xf32> to vector<128x32xf32>
    %146 = arith.mulf %143, %145 : vector<128x32xf32>
    %147 = arith.addf %125, %146 : vector<128x32xf32>
    %c6 = arith.constant 6 : index
    %c0_55 = arith.constant 0 : index
    %148 = vector.load %arg6[%c6, %c0_55] : memref<8x32xbf16, #tpu.memory_space<vmem>>, vector<1x32xbf16>
    %149 = vector.broadcast %148 : vector<1x32xbf16> to vector<128x32xbf16>
    %150 = arith.mulf %6, %149 : vector<128x32xbf16>
    %cst_56 = arith.constant dense<0.000000e+00> : vector<128x128xf32>
    %151 = tpu.matmul %150, %7, %cst_56 {dimension_numbers = #tpu.dot_dimension_numbers<[1], [1], [0], [0], [0, 0, 1, 0], [], []>} : vector<128x32xbf16>, vector<128x32xbf16>, vector<128x128xf32> -> vector<128x128xf32>
    %cst_57 = arith.constant -1.000000e+30 : f32
    %152 = vector.broadcast %cst_57 : f32 to vector<128x128xf32>
    %153 = arith.select %14, %151, %152 : vector<128x128xi1>, vector<128x128xf32>
    %cst_58 = arith.constant dense<0xFF800000> : vector<128xf32>
    %154 = vector.multi_reduction <maximumf>, %153, %cst_58 [1] : vector<128x128xf32> to vector<128xf32>
    %155 = vector.shape_cast %154 : vector<128xf32> to vector<128x1xf32>
    %156 = vector.broadcast %155 : vector<128x1xf32> to vector<128x128xf32>
    %157 = arith.subf %153, %156 : vector<128x128xf32>
    %158 = math.exp %157 : vector<128x128xf32>
    %cst_59 = arith.constant dense<0.000000e+00> : vector<128xf32>
    %159 = vector.multi_reduction <add>, %158, %cst_59 [1] : vector<128x128xf32> to vector<128xf32>
    %160 = vector.shape_cast %159 : vector<128xf32> to vector<128x1xf32>
    %161 = tpu.reciprocal %160 {approx = true} : vector<128x1xf32> -> vector<128x1xf32>
    %162 = vector.broadcast %161 : vector<128x1xf32> to vector<128x128xf32>
    %163 = arith.mulf %158, %162 : vector<128x128xf32>
    %164 = arith.truncf %163 : vector<128x128xf32> to vector<128x128xbf16>
    %cst_60 = arith.constant dense<0.000000e+00> : vector<128x32xf32>
    %165 = tpu.matmul %164, %8, %cst_60 {dimension_numbers = #tpu.dot_dimension_numbers<[1], [0], [0], [1], [0, 0, 1, 1], [], []>} : vector<128x128xbf16>, vector<128x32xbf16>, vector<128x32xf32> -> vector<128x32xf32>
    %c6_61 = arith.constant 6 : index
    %c0_62 = arith.constant 0 : index
    %166 = vector.load %arg7[%c6_61, %c0_62] : memref<8x32xf32, #tpu.memory_space<vmem>>, vector<1x32xf32>
    %167 = vector.broadcast %166 : vector<1x32xf32> to vector<128x32xf32>
    %168 = arith.mulf %165, %167 : vector<128x32xf32>
    %169 = arith.addf %147, %168 : vector<128x32xf32>
    %c7 = arith.constant 7 : index
    %c0_63 = arith.constant 0 : index
    %170 = vector.load %arg6[%c7, %c0_63] : memref<8x32xbf16, #tpu.memory_space<vmem>>, vector<1x32xbf16>
    %171 = vector.broadcast %170 : vector<1x32xbf16> to vector<128x32xbf16>
    %172 = arith.mulf %6, %171 : vector<128x32xbf16>
    %cst_64 = arith.constant dense<0.000000e+00> : vector<128x128xf32>
    %173 = tpu.matmul %172, %7, %cst_64 {dimension_numbers = #tpu.dot_dimension_numbers<[1], [1], [0], [0], [0, 0, 1, 0], [], []>} : vector<128x32xbf16>, vector<128x32xbf16>, vector<128x128xf32> -> vector<128x128xf32>
    %cst_65 = arith.constant -1.000000e+30 : f32
    %174 = vector.broadcast %cst_65 : f32 to vector<128x128xf32>
    %175 = arith.select %14, %173, %174 : vector<128x128xi1>, vector<128x128xf32>
    %cst_66 = arith.constant dense<0xFF800000> : vector<128xf32>
    %176 = vector.multi_reduction <maximumf>, %175, %cst_66 [1] : vector<128x128xf32> to vector<128xf32>
    %177 = vector.shape_cast %176 : vector<128xf32> to vector<128x1xf32>
    %178 = vector.broadcast %177 : vector<128x1xf32> to vector<128x128xf32>
    %179 = arith.subf %175, %178 : vector<128x128xf32>
    %180 = math.exp %179 : vector<128x128xf32>
    %cst_67 = arith.constant dense<0.000000e+00> : vector<128xf32>
    %181 = vector.multi_reduction <add>, %180, %cst_67 [1] : vector<128x128xf32> to vector<128xf32>
    %182 = vector.shape_cast %181 : vector<128xf32> to vector<128x1xf32>
    %183 = tpu.reciprocal %182 {approx = true} : vector<128x1xf32> -> vector<128x1xf32>
    %184 = vector.broadcast %183 : vector<128x1xf32> to vector<128x128xf32>
    %185 = arith.mulf %180, %184 : vector<128x128xf32>
    %186 = arith.truncf %185 : vector<128x128xf32> to vector<128x128xbf16>
    %cst_68 = arith.constant dense<0.000000e+00> : vector<128x32xf32>
    %187 = tpu.matmul %186, %8, %cst_68 {dimension_numbers = #tpu.dot_dimension_numbers<[1], [0], [0], [1], [0, 0, 1, 1], [], []>} : vector<128x128xbf16>, vector<128x32xbf16>, vector<128x32xf32> -> vector<128x32xf32>
    %c7_69 = arith.constant 7 : index
    %c0_70 = arith.constant 0 : index
    %188 = vector.load %arg7[%c7_69, %c0_70] : memref<8x32xf32, #tpu.memory_space<vmem>>, vector<1x32xf32>
    %189 = vector.broadcast %188 : vector<1x32xf32> to vector<128x32xf32>
    %190 = arith.mulf %187, %189 : vector<128x32xf32>
    %191 = arith.addf %169, %190 : vector<128x32xf32>
    %c0_71 = arith.constant 0 : index
    %c0_72 = arith.constant 0 : index
    %192 = vector.load %arg8[%c0_71, %c0_72] : memref<1x32xf32, #tpu.memory_space<vmem>>, vector<1x32xf32>
    %193 = arith.mulf %192, %11 : vector<1x32xf32>
    %194 = vector.broadcast %193 : vector<1x32xf32> to vector<128x32xf32>
    %195 = arith.addf %191, %194 : vector<128x32xf32>
    %196 = arith.truncf %195 : vector<128x32xf32> to vector<128x32xbf16>
    %c0_73 = arith.constant 0 : index
    %c0_74 = arith.constant 0 : index
    %197 = vector.load %arg9[%c0_73, %c0_74] : memref<32x32xbf16, #tpu.memory_space<vmem>>, vector<32x32xbf16>
    %cst_75 = arith.constant dense<0.000000e+00> : vector<128x32xf32>
    %198 = tpu.matmul %196, %197, %cst_75 {dimension_numbers = #tpu.dot_dimension_numbers<[1], [0], [0], [1], [0, 0, 1, 1], [], []>} : vector<128x32xbf16>, vector<32x32xbf16>, vector<128x32xf32> -> vector<128x32xf32>
    %c0_76 = arith.constant 0 : index
    %c0_77 = arith.constant 0 : index
    %199 = vector.load %arg10[%c0_76, %c0_77] : memref<1x32xf32, #tpu.memory_space<vmem>>, vector<1x32xf32>
    %200 = vector.broadcast %199 : vector<1x32xf32> to vector<128x32xf32>
    %201 = arith.addf %198, %200 : vector<128x32xf32>
    %c0_78 = arith.constant 0 : index
    %c0_79 = arith.constant 0 : index
    %c0_80 = arith.constant 0 : index
    %202 = vector.load %arg11[%c0_78, %c0_79, %c0_80] : memref<1x128x32xf32, #tpu.memory_space<vmem>>, vector<1x128x32xf32>
    %203 = vector.shape_cast %202 : vector<1x128x32xf32> to vector<128x32xf32>
    %204 = vector.shape_cast %201 : vector<128x32xf32> to vector<1x128x32xf32>
    tpu.vector_store %arg11[%c0_78, %c0_79, %c0_80], %204 {strides = array<i32>} : memref<1x128x32xf32, #tpu.memory_space<vmem>>, vector<1x128x32xf32>,
    return
  }
  func.func @transform_0(%arg0: i32, %arg1: i32) -> (i32, i32, i32) {
    %c0_i32 = arith.constant 0 : i32
    %c0_i32_0 = arith.constant 0 : i32
    %c0_i32_1 = arith.constant 0 : i32
    return %arg0, %c0_i32, %c0_i32_0 : i32, i32, i32
  }
  func.func @transform_1(%arg0: i32, %arg1: i32) -> (i32, i32) {
    %c0_i32 = arith.constant 0 : i32
    %c0_i32_0 = arith.constant 0 : i32
    %c0_i32_1 = arith.constant 0 : i32
    return %c0_i32, %c0_i32_0 : i32, i32
  }
  func.func @transform_2(%arg0: i32, %arg1: i32) -> (i32, i32) {
    %c0_i32 = arith.constant 0 : i32
    %c0_i32_0 = arith.constant 0 : i32
    %c0_i32_1 = arith.constant 0 : i32
    return %c0_i32, %c0_i32_0 : i32, i32
  }
  func.func @transform_3(%arg0: i32, %arg1: i32) -> (i32, i32) {
    %c0_i32 = arith.constant 0 : i32
    %c0_i32_0 = arith.constant 0 : i32
    %c0_i32_1 = arith.constant 0 : i32
    return %c0_i32, %c0_i32_0 : i32, i32
  }
  func.func @transform_4(%arg0: i32, %arg1: i32) -> (i32, i32) {
    %c0_i32 = arith.constant 0 : i32
    %c0_i32_0 = arith.constant 0 : i32
    %c0_i32_1 = arith.constant 0 : i32
    return %c0_i32, %c0_i32_0 : i32, i32
  }
  func.func @transform_5(%arg0: i32, %arg1: i32) -> (i32, i32) {
    %c0_i32 = arith.constant 0 : i32
    %c0_i32_0 = arith.constant 0 : i32
    %c0_i32_1 = arith.constant 0 : i32
    return %c0_i32, %c0_i32_0 : i32, i32
  }
  func.func @transform_6(%arg0: i32, %arg1: i32) -> (i32, i32) {
    %c0_i32 = arith.constant 0 : i32
    %c0_i32_0 = arith.constant 0 : i32
    %c0_i32_1 = arith.constant 0 : i32
    return %c0_i32, %c0_i32_0 : i32, i32
  }
  func.func @transform_7(%arg0: i32, %arg1: i32) -> (i32, i32) {
    %c0_i32 = arith.constant 0 : i32
    %c0_i32_0 = arith.constant 0 : i32
    %c0_i32_1 = arith.constant 0 : i32
    return %c0_i32, %c0_i32_0 : i32, i32
  }
  func.func @transform_8(%arg0: i32, %arg1: i32) -> (i32, i32) {
    %c0_i32 = arith.constant 0 : i32
    %c0_i32_0 = arith.constant 0 : i32
    %c0_i32_1 = arith.constant 0 : i32
    return %c0_i32, %c0_i32_0 : i32, i32
  }
  func.func @transform_9(%arg0: i32, %arg1: i32) -> (i32, i32, i32) {
    %c0_i32 = arith.constant 0 : i32
    %c0_i32_0 = arith.constant 0 : i32
    return %arg0, %arg1, %c0_i32 : i32, i32, i32
  }
}

</mosaic_0001>

<llo_original>
// kernel: tpu_custom_call.1
$region0: #{tpu_custom_call.1}
  #allocation0 [shape = 'u32[]', space=smem, size = 0x4, offset = 0x4, fixed_abs, tag = 'smem constant byte address 0x4 - core index']
  #allocation1 [shape = 'u32[144,128]{1,0:T(1,128)}', space=vmem, size = 0x12000, scoped, tag = 'internal scratch']
  #allocation2 [shape = 'bf16[128,32]{1,0:T(16,128)(2,1)}', space=vmem, size = 0x8000, scoped, tag = 'scratch operand']
  #allocation3 [shape = 'bf16[128,32]{1,0:T(16,128)(2,1)}', space=vmem, size = 0x8000, scoped, tag = 'scratch operand']
  #allocation4 [shape = 'bf16[128,32]{1,0:T(16,128)(2,1)}', space=vmem, size = 0x8000, scoped, tag = 'scratch operand']
  %s0 = inlined_call_operand.vmem [shape: f32[2,128,32], index: 0, kind: input, shape index: {}]
  %s1 = inlined_call_operand.vmem [shape: bf16[32,32], index: 1, kind: input, shape index: {}]
  %s2 = inlined_call_operand.vmem [shape: bf16[32,32], index: 2, kind: input, shape index: {}]
  %s3 = inlined_call_operand.vmem [shape: bf16[32,32], index: 3, kind: input, shape index: {}]
  %s4 = inlined_call_operand.vmem [shape: bf16[8,32], index: 4, kind: input, shape index: {}]
  %s5 = inlined_call_operand.vmem [shape: f32[8,32], index: 5, kind: input, shape index: {}]
  %s6 = inlined_call_operand.vmem [shape: f32[1,32], index: 6, kind: input, shape index: {}]
  %s7 = inlined_call_operand.vmem [shape: bf16[32,32], index: 7, kind: input, shape index: {}]
  %s8 = inlined_call_operand.vmem [shape: f32[1,32], index: 8, kind: input, shape index: {}]
  %s9 = inlined_call_operand.vmem [shape: f32[2,128,32], index: 9, kind: output, shape index: {}]
  %s10 = sld [smem:[#allocation0]]
  $region73: #{tpu_custom_call.1} parent=0
    _
  %s12 = ssub.s32 1, %s10
  %s13 = scalar_select 0, %s12, %s10
  loop: start=0, step=1, limit=4
  $region2: #{tpu_custom_call.1} parent=0 // loop_pre_header
    _
  $region3: #{tpu_custom_call.1} parent=0 // loop_header
    %s15 = sphi 0, %s19
    %p16 = scmp.ge.s32.totalorder %s15, 4
    %s22 = sphi 0, %s34
    %s23 = sphi 0, %s30
    %s24 = sphi 0, %s22
    %s25 = sphi 0, %s23
    %s26 = sphi 0, %s24
    %s27 = sphi 0, %s25
    %s37 = sphi 0, %s39
    %s40 = sphi 0, %s37
    %s41 = sphi 0, %s40
    %s57 = sphi 0, %s41
    %s61 = sphi 0, %s61
    %s63 = sphi 0, %s61
    %s64 = sphi 0, %s63
    %s78 = sphi 0, %s64
    %s82 = sphi 0, %s82
    %s84 = sphi 0, %s82
    %s85 = sphi 0, %s84
    %s99 = sphi 0, %s85
    %s103 = sphi 0, %s103
    %s105 = sphi 0, %s103
    %s106 = sphi 0, %s105
    %s120 = sphi 0, %s106
    %s124 = sphi 0, %s124
    %s126 = sphi 0, %s124
    %s127 = sphi 0, %s126
    %s141 = sphi 0, %s127
    %s145 = sphi 0, %s145
    %s147 = sphi 0, %s145
    %s148 = sphi 0, %s147
    %s162 = sphi 0, %s148
    %s166 = sphi 0, %s166
    %s168 = sphi 0, %s166
    %s169 = sphi 0, %s168
    %s183 = sphi 0, %s169
    %s187 = sphi 0, %s187
    %s189 = sphi 0, %s187
    %s190 = sphi 0, %s189
    %s204 = sphi 0, %s190
    %s208 = sphi 0, %s208
    %s210 = sphi 0, %s208
    %s211 = sphi 0, %s210
    %s225 = sphi 0, %s211
    %s233 = sphi 0, %s235
    %s236 = sphi 0, %s233
    %s237 = sphi 0, %s236
    %s253 = sphi 0, %s237
  $region4: #{tpu_custom_call.1} parent=0 // loop_header_branch
    %18 = sbr.rel (%p16) target = $region8
  $region5: #{tpu_custom_call.1} parent=0 // loop_body
    %s20 = ssub.s32 %s15, 1
    %s21 = ssub.s32 %s15, 2
    %s28 = sadd.s32 1, %s23
    %p29 = scmp.ge.s32.totalorder %s28, 1
    %s30 = scalar_select %p29, 0, %s28
    %s31 = sadd.s32 1, %s22
    %s32 = scalar_select %p29, %s31, %s22
    %p33 = scmp.ge.s32.totalorder %s32, 2
    %s34 = scalar_select %p33, 0, %s32
    %s35 = ssub.s32 %s22, %s34
    %p36 = scmp.eq.s32.totalorder %s35, 0
    %s38 = sadd.s32 %s37, 1
    %s39 = scalar_select %p36, %s37, %s38
    %p42 = pneg %p36
    %p43 = scmp.eq.s32.totalorder %s15, 1
    %p44 = por %p42, %p43
    %p45 = scmp.ne.s32.totalorder %s37, %s40
    %p46 = scmp.eq.s32.totalorder %s15, 0
    %p47 = por %p45, %p46
    %p48 = scmp.ne.s32.totalorder %s37, %s40
    %p49 = scmp.eq.s32.totalorder %s20, 1
    %p50 = por %p48, %p49
    %p51 = scmp.ne.s32.totalorder %s40, %s41
    %p52 = scmp.eq.s32.totalorder %s20, 0
    %p53 = por %p51, %p52
    %p54 = scmp.ne.s32.totalorder %s40, %s41
    %p55 = scmp.eq.s32.totalorder %s21, 1
    %p56 = por %p54, %p55
    %p58 = scmp.ne.s32.totalorder %s41, %s57
    %p59 = scmp.eq.s32.totalorder %s21, 0
    %p60 = por %p58, %p59
    %s62 = sadd.s32 %s61, 1
    %p65 = scmp.eq.s32.totalorder %s15, 1
    %p66 = scmp.ne.s32.totalorder %s61, %s63
    %p67 = scmp.eq.s32.totalorder %s15, 0
    %p68 = por %p66, %p67
    %p69 = scmp.ne.s32.totalorder %s61, %s63
    %p70 = scmp.eq.s32.totalorder %s20, 1
    %p71 = por %p69, %p70
    %p72 = scmp.ne.s32.totalorder %s63, %s64
    %p73 = scmp.eq.s32.totalorder %s20, 0
    %p74 = por %p72, %p73
    %p75 = scmp.ne.s32.totalorder %s63, %s64
    %p76 = scmp.eq.s32.totalorder %s21, 1
    %p77 = por %p75, %p76
    %p79 = scmp.ne.s32.totalorder %s64, %s78
    %p80 = scmp.eq.s32.totalorder %s21, 0
    %p81 = por %p79, %p80
    %s83 = sadd.s32 %s82, 1
    %p86 = scmp.eq.s32.totalorder %s15, 1
    %p87 = scmp.ne.s32.totalorder %s82, %s84
    %p88 = scmp.eq.s32.totalorder %s15, 0
    %p89 = por %p87, %p88
    %p90 = scmp.ne.s32.totalorder %s82, %s84
    %p91 = scmp.eq.s32.totalorder %s20, 1
    %p92 = por %p90, %p91
    %p93 = scmp.ne.s32.totalorder %s84, %s85
    %p94 = scmp.eq.s32.totalorder %s20, 0
    %p95 = por %p93, %p94
    %p96 = scmp.ne.s32.totalorder %s84, %s85
    %p97 = scmp.eq.s32.totalorder %s21, 1
    %p98 = por %p96, %p97
    %p100 = scmp.ne.s32.totalorder %s85, %s99
    %p101 = scmp.eq.s32.totalorder %s21, 0
    %p102 = por %p100, %p101
    %s104 = sadd.s32 %s103, 1
    %p107 = scmp.eq.s32.totalorder %s15, 1
    %p108 = scmp.ne.s32.totalorder %s103, %s105
    %p109 = scmp.eq.s32.totalorder %s15, 0
    %p110 = por %p108, %p109
    %p111 = scmp.ne.s32.totalorder %s103, %s105
    %p112 = scmp.eq.s32.totalorder %s20, 1
    %p113 = por %p111, %p112
    %p114 = scmp.ne.s32.totalorder %s105, %s106
    %p115 = scmp.eq.s32.totalorder %s20, 0
    %p116 = por %p114, %p115
    %p117 = scmp.ne.s32.totalorder %s105, %s106
    %p118 = scmp.eq.s32.totalorder %s21, 1
    %p119 = por %p117, %p118
    %p121 = scmp.ne.s32.totalorder %s106, %s120
    %p122 = scmp.eq.s32.totalorder %s21, 0
    %p123 = por %p121, %p122
    %s125 = sadd.s32 %s124, 1
    %p128 = scmp.eq.s32.totalorder %s15, 1
    %p129 = scmp.ne.s32.totalorder %s124, %s126
    %p130 = scmp.eq.s32.totalorder %s15, 0
    %p131 = por %p129, %p130
    %p132 = scmp.ne.s32.totalorder %s124, %s126
    %p133 = scmp.eq.s32.totalorder %s20, 1
    %p134 = por %p132, %p133
    %p135 = scmp.ne.s32.totalorder %s126, %s127
    %p136 = scmp.eq.s32.totalorder %s20, 0
    %p137 = por %p135, %p136
    %p138 = scmp.ne.s32.totalorder %s126, %s127
    %p139 = scmp.eq.s32.totalorder %s21, 1
    %p140 = por %p138, %p139
    %p142 = scmp.ne.s32.totalorder %s127, %s141
    %p143 = scmp.eq.s32.totalorder %s21, 0
    %p144 = por %p142, %p143
    %s146 = sadd.s32 %s145, 1
    %p149 = scmp.eq.s32.totalorder %s15, 1
    %p150 = scmp.ne.s32.totalorder %s145, %s147
    %p151 = scmp.eq.s32.totalorder %s15, 0
    %p152 = por %p150, %p151
    %p153 = scmp.ne.s32.totalorder %s145, %s147
    %p154 = scmp.eq.s32.totalorder %s20, 1
    %p155 = por %p153, %p154
    %p156 = scmp.ne.s32.totalorder %s147, %s148
    %p157 = scmp.eq.s32.totalorder %s20, 0
    %p158 = por %p156, %p157
    %p159 = scmp.ne.s32.totalorder %s147, %s148
    %p160 = scmp.eq.s32.totalorder %s21, 1
    %p161 = por %p159, %p160
    %p163 = scmp.ne.s32.totalorder %s148, %s162
    %p164 = scmp.eq.s32.totalorder %s21, 0
    %p165 = por %p163, %p164
    %s167 = sadd.s32 %s166, 1
    %p170 = scmp.eq.s32.totalorder %s15, 1
    %p171 = scmp.ne.s32.totalorder %s166, %s168
    %p172 = scmp.eq.s32.totalorder %s15, 0
    %p173 = por %p171, %p172
    %p174 = scmp.ne.s32.totalorder %s166, %s168
    %p175 = scmp.eq.s32.totalorder %s20, 1
    %p176 = por %p174, %p175
    %p177 = scmp.ne.s32.totalorder %s168, %s169
    %p178 = scmp.eq.s32.totalorder %s20, 0
    %p179 = por %p177, %p178
    %p180 = scmp.ne.s32.totalorder %s168, %s169
    %p181 = scmp.eq.s32.totalorder %s21, 1
    %p182 = por %p180, %p181
    %p184 = scmp.ne.s32.totalorder %s169, %s183
    %p185 = scmp.eq.s32.totalorder %s21, 0
    %p186 = por %p184, %p185
    %s188 = sadd.s32 %s187, 1
    %p191 = scmp.eq.s32.totalorder %s15, 1
    %p192 = scmp.ne.s32.totalorder %s187, %s189
    %p193 = scmp.eq.s32.totalorder %s15, 0
    %p194 = por %p192, %p193
    %p195 = scmp.ne.s32.totalorder %s187, %s189
    %p196 = scmp.eq.s32.totalorder %s20, 1
    %p197 = por %p195, %p196
    %p198 = scmp.ne.s32.totalorder %s189, %s190
    %p199 = scmp.eq.s32.totalorder %s20, 0
    %p200 = por %p198, %p199
    %p201 = scmp.ne.s32.totalorder %s189, %s190
    %p202 = scmp.eq.s32.totalorder %s21, 1
    %p203 = por %p201, %p202
    %p205 = scmp.ne.s32.totalorder %s190, %s204
    %p206 = scmp.eq.s32.totalorder %s21, 0
    %p207 = por %p205, %p206
    %s209 = sadd.s32 %s208, 1
    %p212 = scmp.eq.s32.totalorder %s15, 1
    %p213 = scmp.ne.s32.totalorder %s208, %s210
    %p214 = scmp.eq.s32.totalorder %s15, 0
    %p215 = por %p213, %p214
    %p216 = scmp.ne.s32.totalorder %s208, %s210
    %p217 = scmp.eq.s32.totalorder %s20, 1
    %p218 = por %p216, %p217
    %p219 = scmp.ne.s32.totalorder %s210, %s211
    %p220 = scmp.eq.s32.totalorder %s20, 0
    %p221 = por %p219, %p220
    %p222 = scmp.ne.s32.totalorder %s210, %s211
    %p223 = scmp.eq.s32.totalorder %s21, 1
    %p224 = por %p222, %p223
    %p226 = scmp.ne.s32.totalorder %s211, %s225
    %p227 = scmp.eq.s32.totalorder %s21, 0
    %p228 = por %p226, %p227
    %s229 = ssub.s32 %s22, %s34
    %s230 = ssub.s32 %s23, %s30
    %s231 = sor.u32 %s229, %s230
    %p232 = scmp.eq.s32.totalorder %s231, 0
    %s234 = sadd.s32 %s233, 1
    %s235 = scalar_select %p232, %s233, %s234
    %p238 = pneg %p232
    %p239 = scmp.eq.s32.totalorder %s15, 1
    %p240 = por %p238, %p239
    %p241 = scmp.ne.s32.totalorder %s233, %s236
    %p242 = scmp.eq.s32.totalorder %s15, 0
    %p243 = por %p241, %p242
    %p244 = scmp.ne.s32.totalorder %s233, %s236
    %p245 = scmp.eq.s32.totalorder %s20, 1
    %p246 = por %p244, %p245
    %p247 = scmp.ne.s32.totalorder %s236, %s237
    %p248 = scmp.eq.s32.totalorder %s20, 0
    %p249 = por %p247, %p248
    %p250 = scmp.ne.s32.totalorder %s236, %s237
    %p251 = scmp.eq.s32.totalorder %s21, 1
    %p252 = por %p250, %p251
    %p254 = scmp.ne.s32.totalorder %s237, %s253
    %p255 = scmp.eq.s32.totalorder %s21, 0
    %p256 = por %p254, %p255
    %p257 = scmp.le.s32.totalorder 1, %s15
    %p258 = scmp.lt.s32.totalorder %s15, 3
    %p259 = pnand %p257, %p258
    %p260 = pneg %p259
    // Predicated region
    $region9: #{tpu_custom_call.1} parent=5 // pred_check
      _
    $region10: #{tpu_custom_call.1} parent=5 // pred_check_branch
      %262 = sbr.rel (%p259) target = $region12
    $region11: #{tpu_custom_call.1} parent=5 // pred_region
      %s263 = ssub.s32 %s15, 1
      // Predicated region
      $region13: #{tpu_custom_call.1} parent=11 // pred_check
        %p264 = pneg %p74
      $region14: #{tpu_custom_call.1} parent=11 // pred_check_branch
        %266 = sbr.rel (%p264) target = $region16
      $region15: #{tpu_custom_call.1} parent=11 // pred_region
        _
      $region16: #{tpu_custom_call.1} parent=11 // pred_fallthru
        _
      // Predicated region
      $region17: #{tpu_custom_call.1} parent=11 // pred_check
        %p267 = pneg %p95
      $region18: #{tpu_custom_call.1} parent=11 // pred_check_branch
        %269 = sbr.rel (%p267) target = $region20
      $region19: #{tpu_custom_call.1} parent=11 // pred_region
        _
      $region20: #{tpu_custom_call.1} parent=11 // pred_fallthru
        _
      // Predicated region
      $region21: #{tpu_custom_call.1} parent=11 // pred_check
        %p270 = pneg %p116
      $region22: #{tpu_custom_call.1} parent=11 // pred_check_branch
        %272 = sbr.rel (%p270) target = $region24
      $region23: #{tpu_custom_call.1} parent=11 // pred_region
        _
      $region24: #{tpu_custom_call.1} parent=11 // pred_fallthru
        _
      // Predicated region
      $region25: #{tpu_custom_call.1} parent=11 // pred_check
        %p273 = pneg %p137
      $region26: #{tpu_custom_call.1} parent=11 // pred_check_branch
        %275 = sbr.rel (%p273) target = $region28
      $region27: #{tpu_custom_call.1} parent=11 // pred_region
        _
      $region28: #{tpu_custom_call.1} parent=11 // pred_fallthru
        _
      // Predicated region
      $region29: #{tpu_custom_call.1} parent=11 // pred_check
        %p276 = pneg %p158
      $region30: #{tpu_custom_call.1} parent=11 // pred_check_branch
        %278 = sbr.rel (%p276) target = $region32
      $region31: #{tpu_custom_call.1} parent=11 // pred_region
        _
      $region32: #{tpu_custom_call.1} parent=11 // pred_fallthru
        _
      // Predicated region
      $region33: #{tpu_custom_call.1} parent=11 // pred_check
        %p279 = pneg %p179
      $region34: #{tpu_custom_call.1} parent=11 // pred_check_branch
        %281 = sbr.rel (%p279) target = $region36
      $region35: #{tpu_custom_call.1} parent=11 // pred_region
        _
      $region36: #{tpu_custom_call.1} parent=11 // pred_fallthru
        _
      // Predicated region
      $region37: #{tpu_custom_call.1} parent=11 // pred_check
        %p282 = pneg %p200
      $region38: #{tpu_custom_call.1} parent=11 // pred_check_branch
        %284 = sbr.rel (%p282) target = $region40
      $region39: #{tpu_custom_call.1} parent=11 // pred_region
        _
      $region40: #{tpu_custom_call.1} parent=11 // pred_fallthru
        _
      // Predicated region
      $region41: #{tpu_custom_call.1} parent=11 // pred_check
        %p285 = pneg %p221
      $region42: #{tpu_custom_call.1} parent=11 // pred_check_branch
        %287 = sbr.rel (%p285) target = $region44
      $region43: #{tpu_custom_call.1} parent=11 // pred_region
        _
      $region44: #{tpu_custom_call.1} parent=11 // pred_fallthru
        _
    $region12: #{tpu_custom_call.1} parent=5 // pred_fallthru
      _
    %p288 = scmp.lt.s32.totalorder %s15, 2
    // Predicated region
    $region45: #{tpu_custom_call.1} parent=5 // pred_check
      %p289 = pneg %p288
    $region46: #{tpu_custom_call.1} parent=5 // pred_check_branch
      %291 = sbr.rel (%p289) target = $region48
    $region47: #{tpu_custom_call.1} parent=5 // pred_region
      // Predicated region
      $region49: #{tpu_custom_call.1} parent=47 // pred_check
        %p292 = pneg %p47
      $region50: #{tpu_custom_call.1} parent=47 // pred_check_branch
        %294 = sbr.rel (%p292) target = $region52
      $region51: #{tpu_custom_call.1} parent=47 // pred_region
        %p295 = scmp.lt.s32.totalorder %s22, 1
        %s296 = scalar_select %p295, %s22, 1
        %s297 = smul.addr %s296, 16
        %s298 = smul.addr %s297, 8
        %s299 = scalar_lea.vmem %s0, %s298
      $region52: #{tpu_custom_call.1} parent=47 // pred_fallthru
        _
    $region48: #{tpu_custom_call.1} parent=5 // pred_fallthru
      _
    %p300 = scmp.le.s32.totalorder 1, %s15
    %p301 = scmp.lt.s32.totalorder %s15, 3
    %p302 = pnand %p300, %p301
    %p303 = pneg %p302
    // Predicated region
    $region53: #{tpu_custom_call.1} parent=5 // pred_check
      _
    $region54: #{tpu_custom_call.1} parent=5 // pred_check_branch
      %305 = sbr.rel (%p302) target = $region56
    $region55: #{tpu_custom_call.1} parent=5 // pred_region
      %s306 = ssub.s32 %s15, 1
      %p307 = scmp.lt.s32.totalorder %s24, 1
      %s308 = scalar_select %p307, %s24, 1
      %s309 = smul.addr %s308, 16
      %s310 = smul.addr %s309, 8
      %s311 = scalar_lea.vmem %s0, %s310
      %p312 = pneg %p53
      %p313 = pneg %p50
      %p314 = pneg %p74
      %p315 = pneg %p71
      %p316 = pneg %p95
      %p317 = pneg %p92
      %p318 = pneg %p116
      %p319 = pneg %p113
      %p320 = pneg %p137
      %p321 = pneg %p134
      %p322 = pneg %p158
      %p323 = pneg %p155
      %p324 = pneg %p179
      %p325 = pneg %p176
      %p326 = pneg %p200
      %p327 = pneg %p197
      %p328 = pneg %p221
      %p329 = pneg %p218
      %p330 = pneg %p249
      %p331 = pneg %p246
      %s332 = smul.u32 16, %s25
      %p333 = scmp.lt.s32.totalorder %s24, 1
      %s334 = scalar_select %p333, %s24, 1
      %p335 = scmp.lt.s32.totalorder %s332, 15
      %s336 = scalar_select %p335, %s332, 15
      %s337 = smul.addr %s334, 16
      %s338 = sadd.s32 %s336, %s337
      %s339 = smul.addr %s338, 8
      %s340 = scalar_lea.vmem %s9, %s339
      %p341 = scmp.lt.s32.totalorder %s24, 1
      %s342 = scalar_select %p341, %s24, 1
      %s343 = smul.addr %s342, 16
      %s344 = smul.addr %s343, 8
      %s345 = scalar_lea.vmem %s0, %s344
      %s346 = smul.u32 16, %s25
      %p347 = scmp.lt.s32.totalorder %s24, 1
      %s348 = scalar_select %p347, %s24, 1
      %p349 = scmp.lt.s32.totalorder %s346, 15
      %s350 = scalar_select %p349, %s346, 15
      %s351 = smul.addr %s348, 16
      %s352 = sadd.s32 %s350, %s351
      %s353 = smul.addr %s352, 8
      %s354 = scalar_lea.vmem %s9, %s353
      %s355 = smul.u32 16, %s25
      %p357 = scmp.eq.s32.totalorder %s25, 0
      // Predicated region
      $region57: #{tpu_custom_call.1} parent=55 // pred_check
        %p358 = pneg %p357
      $region58: #{tpu_custom_call.1} parent=55 // pred_check_branch
        %360 = sbr.rel (%p358) target = $region60
      $region59: #{tpu_custom_call.1} parent=55 // pred_region
        %v361 = vld [vmem:[%s345] sm:$0xff]
        %v362 = vld [vmem:[%s345 + $0x8] sm:$0xff]
        %v363 = vld [vmem:[%s345 + $0x10] sm:$0xff]
        %v364 = vld [vmem:[%s345 + $0x18] sm:$0xff]
        %v365 = vld [vmem:[%s345 + $0x20] sm:$0xff]
        %v366 = vld [vmem:[%s345 + $0x28] sm:$0xff]
        %v367 = vld [vmem:[%s345 + $0x30] sm:$0xff]
        %v368 = vld [vmem:[%s345 + $0x38] sm:$0xff]
        %v369 = vld [vmem:[%s345 + $0x40] sm:$0xff]
        %v370 = vld [vmem:[%s345 + $0x48] sm:$0xff]
        %v371 = vld [vmem:[%s345 + $0x50] sm:$0xff]
        %v372 = vld [vmem:[%s345 + $0x58] sm:$0xff]
        %v373 = vld [vmem:[%s345 + $0x60] sm:$0xff]
        %v374 = vld [vmem:[%s345 + $0x68] sm:$0xff]
        %v375 = vld [vmem:[%s345 + $0x70] sm:$0xff]
        %v376 = vld [vmem:[%s345 + $0x78] sm:$0xff]
        %v377 = vpack.c.bf16 %v362, %v361
        %v378 = vpack.c.bf16 %v364, %v363
        %v379 = vpack.c.bf16 %v366, %v365
        %v380 = vpack.c.bf16 %v368, %v367
        %v381 = vpack.c.bf16 %v370, %v369
        %v382 = vpack.c.bf16 %v372, %v371
        %v383 = vpack.c.bf16 %v374, %v373
        %v384 = vpack.c.bf16 %v376, %v375
        %v385 = vld [vmem:[%s1] sm:$0xf]
        %v386 = vld [vmem:[%s1 + $0x4] sm:$0xf]
        %v387 = vld [vmem:[%s1 + $0x8] sm:$0xf]
        %v388 = vld [vmem:[%s1 + $0xc] sm:$0xf]
        %v393 = vunpack.c.l.b16 %v385
        %v394 = vunpack.c.l.b16 %v386
        %v395 = vunpack.c.l.b16 %v387
        %v396 = vunpack.c.l.b16 %v388
        %v397 = vpack.c.b16 %v394, %v393
        %v398 = vpack.c.b16 %v396, %v395
        %vm401 = vcmask 261120
        %v403 = vsel %vm401, %v377, 0
        %v406 = vsel %vm401, %v378, 0
        %v409 = vsel %vm401, %v379, 0
        %v412 = vsel %vm401, %v380, 0
        %v415 = vsel %vm401, %v381, 0
        %v418 = vsel %vm401, %v382, 0
        %v421 = vsel %vm401, %v383, 0
        %v424 = vsel %vm401, %v384, 0
        %426 = vmatprep.subr.bf16.mxu0 0
        %427 = vmatpush1.bf16.msra.mxu0 %v397
        %428 = vmatprep.subr.bf16.mxu0 0
        %429 = vmatpush1.bf16.msra.mxu0 %v398
        %430 = vmatprep.subr.bf16.mxu0 0
        %431 = vmatpush1.bf16.msra.mxu0 0
        %432 = vmatprep.subr.bf16.mxu0 0
        %433 = vmatpush1.bf16.msra.mxu0 0
        %434 = vmatprep.subr.bf16.mxu0 0
        %435 = vmatpush1.bf16.msra.mxu0 0
        %436 = vmatprep.subr.bf16.mxu0 0
        %437 = vmatpush1.bf16.msra.mxu0 0
        %438 = vmatprep.subr.bf16.mxu0 0
        %439 = vmatpush1.bf16.msra.mxu0 0
        %440 = vmatprep.subr.bf16.mxu0 0
        %441 = vmatpush1.bf16.msra.mxu0 0
        %442 = vmatprep.subr.bf16.mxu0 0
        %443 = vmatpush1.bf16.msra.mxu0 0
        %444 = vmatprep.subr.bf16.mxu0 0
        %445 = vmatpush1.bf16.msra.mxu0 0
        %446 = vmatprep.subr.bf16.mxu0 0
        %447 = vmatpush1.bf16.msra.mxu0 0
        %448 = vmatprep.subr.bf16.mxu0 0
        %449 = vmatpush1.bf16.msra.mxu0 0
        %450 = vmatprep.subr.bf16.mxu0 0
        %451 = vmatpush1.bf16.msra.mxu0 0
        %452 = vmatprep.subr.bf16.mxu0 0
        %453 = vmatpush1.bf16.msra.mxu0 0
        %454 = vmatprep.subr.bf16.mxu0 0
        %455 = vmatpush1.bf16.msra.mxu0 0
        %456 = vmatprep.subr.bf16.mxu0 0
        %457 = vmatpush1.bf16.msra.mxu0 0
        %458 = vmatprep.mubr.bf16.mxu0 0
        %459 = vmatmul.mubr.bf16.gmra.mrb[0].mxu0 %v403
        %v460 = vpop.f32.mrb[0].mxu0
        %v461 = vadd.f32 0.0, %v460
        %v462 = vpop.f32.mrb[0].mxu0
        %v463 = vpop.f32.mrb[0].mxu0
        %v464 = vadd.f32 0.0, %v463
        %v465 = vpop.f32.mrb[0].mxu0
        %466 = vmatprep.mubr.bf16.mxu0 0
        %467 = vmatmul.mubr.bf16.gmra.mrb[0].mxu0 %v406
        %v468 = vpop.f32.mrb[0].mxu0
        %v469 = vadd.f32 0.0, %v468
        %v470 = vpop.f32.mrb[0].mxu0
        %v471 = vpop.f32.mrb[0].mxu0
        %v472 = vadd.f32 0.0, %v471
        %v473 = vpop.f32.mrb[0].mxu0
        %474 = vmatprep.mubr.bf16.mxu0 0
        %475 = vmatmul.mubr.bf16.gmra.mrb[0].mxu0 %v409
        %v476 = vpop.f32.mrb[0].mxu0
        %v477 = vadd.f32 0.0, %v476
        %v478 = vpop.f32.mrb[0].mxu0
        %v479 = vpop.f32.mrb[0].mxu0
        %v480 = vadd.f32 0.0, %v479
        %v481 = vpop.f32.mrb[0].mxu0
        %482 = vmatprep.mubr.bf16.mxu0 0
        %483 = vmatmul.mubr.bf16.gmra.mrb[0].mxu0 %v412
        %v484 = vpop.f32.mrb[0].mxu0
        %v485 = vadd.f32 0.0, %v484
        %v486 = vpop.f32.mrb[0].mxu0
        %v487 = vpop.f32.mrb[0].mxu0
        %v488 = vadd.f32 0.0, %v487
        %v489 = vpop.f32.mrb[0].mxu0
        %490 = vmatprep.mubr.bf16.mxu0 0
        %491 = vmatmul.mubr.bf16.gmra.mrb[0].mxu0 %v415
        %v492 = vpop.f32.mrb[0].mxu0
        %v493 = vadd.f32 0.0, %v492
        %v494 = vpop.f32.mrb[0].mxu0
        %v495 = vpop.f32.mrb[0].mxu0
        %v496 = vadd.f32 0.0, %v495
        %v497 = vpop.f32.mrb[0].mxu0
        %498 = vmatprep.mubr.bf16.mxu0 0
        %499 = vmatmul.mubr.bf16.gmra.mrb[0].mxu0 %v418
        %v500 = vpop.f32.mrb[0].mxu0
        %v501 = vadd.f32 0.0, %v500
        %v502 = vpop.f32.mrb[0].mxu0
        %v503 = vpop.f32.mrb[0].mxu0
        %v504 = vadd.f32 0.0, %v503
        %v505 = vpop.f32.mrb[0].mxu0
        %506 = vmatprep.mubr.bf16.mxu0 0
        %507 = vmatmul.mubr.bf16.gmra.mrb[0].mxu0 %v421
        %v508 = vpop.f32.mrb[0].mxu0
        %v509 = vadd.f32 0.0, %v508
        %v510 = vpop.f32.mrb[0].mxu0
        %v511 = vpop.f32.mrb[0].mxu0
        %v512 = vadd.f32 0.0, %v511
        %v513 = vpop.f32.mrb[0].mxu0
        %514 = vmatprep.mubr.bf16.mxu0 0
        %515 = vmatmul.mubr.bf16.gmra.mrb[0].mxu0 %v424
        %v516 = vpop.f32.mrb[0].mxu0
        %v517 = vadd.f32 0.0, %v516
        %v518 = vpop.f32.mrb[0].mxu0
        %v519 = vpop.f32.mrb[0].mxu0
        %v520 = vadd.f32 0.0, %v519
        %v521 = vpop.f32.mrb[0].mxu0
        %522 = vdwg.mxu0
        %v523 = vpack.c.bf16 %v464, %v461
        %v524 = vpack.c.bf16 %v472, %v469
        %v525 = vpack.c.bf16 %v480, %v477
        %v526 = vpack.c.bf16 %v488, %v485
        %v527 = vpack.c.bf16 %v496, %v493
        %v528 = vpack.c.bf16 %v504, %v501
        %v529 = vpack.c.bf16 %v512, %v509
        %v530 = vpack.c.bf16 %v520, %v517
        %531 = vst.msk [vmem:[#allocation2] sm:$0xff] %vm401, %v523
        %532 = vst.msk [vmem:[#allocation2 + $0x8] sm:$0xff] %vm401, %v524
        %533 = vst.msk [vmem:[#allocation2 + $0x10] sm:$0xff] %vm401, %v525
        %534 = vst.msk [vmem:[#allocation2 + $0x18] sm:$0xff] %vm401, %v526
        %535 = vst.msk [vmem:[#allocation2 + $0x20] sm:$0xff] %vm401, %v527
        %536 = vst.msk [vmem:[#allocation2 + $0x28] sm:$0xff] %vm401, %v528
        %537 = vst.msk [vmem:[#allocation2 + $0x30] sm:$0xff] %vm401, %v529
        %538 = vst.msk [vmem:[#allocation2 + $0x38] sm:$0xff] %vm401, %v530
        %v539 = vld [vmem:[%s2] sm:$0xf]
        %v540 = vld [vmem:[%s2 + $0x4] sm:$0xf]
        %v541 = vld [vmem:[%s2 + $0x8] sm:$0xf]
        %v542 = vld [vmem:[%s2 + $0xc] sm:$0xf]
        %v547 = vunpack.c.l.b16 %v539
        %v548 = vunpack.c.l.b16 %v540
        %v549 = vunpack.c.l.b16 %v541
        %v550 = vunpack.c.l.b16 %v542
        %v551 = vpack.c.b16 %v548, %v547
        %v552 = vpack.c.b16 %v550, %v549
        %555 = vmatprep.subr.bf16.mxu0 0
        %556 = vmatpush1.bf16.msra.mxu0 %v551
        %557 = vmatprep.subr.bf16.mxu0 0
        %558 = vmatpush1.bf16.msra.mxu0 %v552
        %559 = vmatprep.subr.bf16.mxu0 0
        %560 = vmatpush1.bf16.msra.mxu0 0
        %561 = vmatprep.subr.bf16.mxu0 0
        %562 = vmatpush1.bf16.msra.mxu0 0
        %563 = vmatprep.subr.bf16.mxu0 0
        %564 = vmatpush1.bf16.msra.mxu0 0
        %565 = vmatprep.subr.bf16.mxu0 0
        %566 = vmatpush1.bf16.msra.mxu0 0
        %567 = vmatprep.subr.bf16.mxu0 0
        %568 = vmatpush1.bf16.msra.mxu0 0
        %569 = vmatprep.subr.bf16.mxu0 0
        %570 = vmatpush1.bf16.msra.mxu0 0
        %571 = vmatprep.subr.bf16.mxu0 0
        %572 = vmatpush1.bf16.msra.mxu0 0
        %573 = vmatprep.subr.bf16.mxu0 0
        %574 = vmatpush1.bf16.msra.mxu0 0
        %575 = vmatprep.subr.bf16.mxu0 0
        %576 = vmatpush1.bf16.msra.mxu0 0
        %577 = vmatprep.subr.bf16.mxu0 0
        %578 = vmatpush1.bf16.msra.mxu0 0
        %579 = vmatprep.subr.bf16.mxu0 0
        %580 = vmatpush1.bf16.msra.mxu0 0
        %581 = vmatprep.subr.bf16.mxu0 0
        %582 = vmatpush1.bf16.msra.mxu0 0
        %583 = vmatprep.subr.bf16.mxu0 0
        %584 = vmatpush1.bf16.msra.mxu0 0
        %585 = vmatprep.subr.bf16.mxu0 0
        %586 = vmatpush1.bf16.msra.mxu0 0
        %587 = vmatprep.mubr.bf16.mxu0 0
        %588 = vmatmul.mubr.bf16.gmra.mrb[0].mxu0 %v403
        %v589 = vpop.f32.mrb[0].mxu0
        %v590 = vadd.f32 0.0, %v589
        %v591 = vpop.f32.mrb[0].mxu0
        %v592 = vpop.f32.mrb[0].mxu0
        %v593 = vadd.f32 0.0, %v592
        %v594 = vpop.f32.mrb[0].mxu0
        %595 = vmatprep.mubr.bf16.mxu0 0
        %596 = vmatmul.mubr.bf16.gmra.mrb[0].mxu0 %v406
        %v597 = vpop.f32.mrb[0].mxu0
        %v598 = vadd.f32 0.0, %v597
        %v599 = vpop.f32.mrb[0].mxu0
        %v600 = vpop.f32.mrb[0].mxu0
        %v601 = vadd.f32 0.0, %v600
        %v602 = vpop.f32.mrb[0].mxu0
        %603 = vmatprep.mubr.bf16.mxu0 0
        %604 = vmatmul.mubr.bf16.gmra.mrb[0].mxu0 %v409
        %v605 = vpop.f32.mrb[0].mxu0
        %v606 = vadd.f32 0.0, %v605
        %v607 = vpop.f32.mrb[0].mxu0
        %v608 = vpop.f32.mrb[0].mxu0
        %v609 = vadd.f32 0.0, %v608
        %v610 = vpop.f32.mrb[0].mxu0
        %611 = vmatprep.mubr.bf16.mxu0 0
        %612 = vmatmul.mubr.bf16.gmra.mrb[0].mxu0 %v412
        %v613 = vpop.f32.mrb[0].mxu0
        %v614 = vadd.f32 0.0, %v613
        %v615 = vpop.f32.mrb[0].mxu0
        %v616 = vpop.f32.mrb[0].mxu0
        %v617 = vadd.f32 0.0, %v616
        %v618 = vpop.f32.mrb[0].mxu0
        %619 = vmatprep.mubr.bf16.mxu0 0
        %620 = vmatmul.mubr.bf16.gmra.mrb[0].mxu0 %v415
        %v621 = vpop.f32.mrb[0].mxu0
        %v622 = vadd.f32 0.0, %v621
        %v623 = vpop.f32.mrb[0].mxu0
        %v624 = vpop.f32.mrb[0].mxu0
        %v625 = vadd.f32 0.0, %v624
        %v626 = vpop.f32.mrb[0].mxu0
        %627 = vmatprep.mubr.bf16.mxu0 0
        %628 = vmatmul.mubr.bf16.gmra.mrb[0].mxu0 %v418
        %v629 = vpop.f32.mrb[0].mxu0
        %v630 = vadd.f32 0.0, %v629
        %v631 = vpop.f32.mrb[0].mxu0
        %v632 = vpop.f32.mrb[0].mxu0
        %v633 = vadd.f32 0.0, %v632
        %v634 = vpop.f32.mrb[0].mxu0
        %635 = vmatprep.mubr.bf16.mxu0 0
        %636 = vmatmul.mubr.bf16.gmra.mrb[0].mxu0 %v421
        %v637 = vpop.f32.mrb[0].mxu0
        %v638 = vadd.f32 0.0, %v637
        %v639 = vpop.f32.mrb[0].mxu0
        %v640 = vpop.f32.mrb[0].mxu0
        %v641 = vadd.f32 0.0, %v640
        %v642 = vpop.f32.mrb[0].mxu0
        %643 = vmatprep.mubr.bf16.mxu0 0
        %644 = vmatmul.mubr.bf16.gmra.mrb[0].mxu0 %v424
        %v645 = vpop.f32.mrb[0].mxu0
        %v646 = vadd.f32 0.0, %v645
        %v647 = vpop.f32.mrb[0].mxu0
        %v648 = vpop.f32.mrb[0].mxu0
        %v649 = vadd.f32 0.0, %v648
        %v650 = vpop.f32.mrb[0].mxu0
        %651 = vdwg.mxu0
        %v652 = vpack.c.bf16 %v593, %v590
        %v653 = vpack.c.bf16 %v601, %v598
        %v654 = vpack.c.bf16 %v609, %v606
        %v655 = vpack.c.bf16 %v617, %v614
        %v656 = vpack.c.bf16 %v625, %v622
        %v657 = vpack.c.bf16 %v633, %v630
        %v658 = vpack.c.bf16 %v641, %v638
        %v659 = vpack.c.bf16 %v649, %v646
        %660 = vst.msk [vmem:[#allocation3] sm:$0xff] %vm401, %v652
        %661 = vst.msk [vmem:[#allocation3 + $0x8] sm:$0xff] %vm401, %v653
        %662 = vst.msk [vmem:[#allocation3 + $0x10] sm:$0xff] %vm401, %v654
        %663 = vst.msk [vmem:[#allocation3 + $0x18] sm:$0xff] %vm401, %v655
        %664 = vst.msk [vmem:[#allocation3 + $0x20] sm:$0xff] %vm401, %v656
        %665 = vst.msk [vmem:[#allocation3 + $0x28] sm:$0xff] %vm401, %v657
        %666 = vst.msk [vmem:[#allocation3 + $0x30] sm:$0xff] %vm401, %v658
        %667 = vst.msk [vmem:[#allocation3 + $0x38] sm:$0xff] %vm401, %v659
        %v668 = vld [vmem:[%s3] sm:$0xf]
        %v669 = vld [vmem:[%s3 + $0x4] sm:$0xf]
        %v670 = vld [vmem:[%s3 + $0x8] sm:$0xf]
        %v671 = vld [vmem:[%s3 + $0xc] sm:$0xf]
        %v676 = vunpack.c.l.b16 %v668
        %v677 = vunpack.c.l.b16 %v669
        %v678 = vunpack.c.l.b16 %v670
        %v679 = vunpack.c.l.b16 %v671
        %v680 = vpack.c.b16 %v677, %v676
        %v681 = vpack.c.b16 %v679, %v678
        %684 = vmatprep.subr.bf16.mxu0 0
        %685 = vmatpush1.bf16.msra.mxu0 %v680
        %686 = vmatprep.subr.bf16.mxu0 0
        %687 = vmatpush1.bf16.msra.mxu0 %v681
        %688 = vmatprep.subr.bf16.mxu0 0
        %689 = vmatpush1.bf16.msra.mxu0 0
        %690 = vmatprep.subr.bf16.mxu0 0
        %691 = vmatpush1.bf16.msra.mxu0 0
        %692 = vmatprep.subr.bf16.mxu0 0
        %693 = vmatpush1.bf16.msra.mxu0 0
        %694 = vmatprep.subr.bf16.mxu0 0
        %695 = vmatpush1.bf16.msra.mxu0 0
        %696 = vmatprep.subr.bf16.mxu0 0
        %697 = vmatpush1.bf16.msra.mxu0 0
        %698 = vmatprep.subr.bf16.mxu0 0
        %699 = vmatpush1.bf16.msra.mxu0 0
        %700 = vmatprep.subr.bf16.mxu0 0
        %701 = vmatpush1.bf16.msra.mxu0 0
        %702 = vmatprep.subr.bf16.mxu0 0
        %703 = vmatpush1.bf16.msra.mxu0 0
        %704 = vmatprep.subr.bf16.mxu0 0
        %705 = vmatpush1.bf16.msra.mxu0 0
        %706 = vmatprep.subr.bf16.mxu0 0
        %707 = vmatpush1.bf16.msra.mxu0 0
        %708 = vmatprep.subr.bf16.mxu0 0
        %709 = vmatpush1.bf16.msra.mxu0 0
        %710 = vmatprep.subr.bf16.mxu0 0
        %711 = vmatpush1.bf16.msra.mxu0 0
        %712 = vmatprep.subr.bf16.mxu0 0
        %713 = vmatpush1.bf16.msra.mxu0 0
        %714 = vmatprep.subr.bf16.mxu0 0
        %715 = vmatpush1.bf16.msra.mxu0 0
        %716 = vmatprep.mubr.bf16.mxu0 0
        %717 = vmatmul.mubr.bf16.gmra.mrb[0].mxu0 %v403
        %v718 = vpop.f32.mrb[0].mxu0
        %v719 = vadd.f32 0.0, %v718
        %v720 = vpop.f32.mrb[0].mxu0
        %v721 = vpop.f32.mrb[0].mxu0
        %v722 = vadd.f32 0.0, %v721
        %v723 = vpop.f32.mrb[0].mxu0
        %724 = vmatprep.mubr.bf16.mxu0 0
        %725 = vmatmul.mubr.bf16.gmra.mrb[0].mxu0 %v406
        %v726 = vpop.f32.mrb[0].mxu0
        %v727 = vadd.f32 0.0, %v726
        %v728 = vpop.f32.mrb[0].mxu0
        %v729 = vpop.f32.mrb[0].mxu0
        %v730 = vadd.f32 0.0, %v729
        %v731 = vpop.f32.mrb[0].mxu0
        %732 = vmatprep.mubr.bf16.mxu0 0
        %733 = vmatmul.mubr.bf16.gmra.mrb[0].mxu0 %v409
        %v734 = vpop.f32.mrb[0].mxu0
        %v735 = vadd.f32 0.0, %v734
        %v736 = vpop.f32.mrb[0].mxu0
        %v737 = vpop.f32.mrb[0].mxu0
        %v738 = vadd.f32 0.0, %v737
        %v739 = vpop.f32.mrb[0].mxu0
        %740 = vmatprep.mubr.bf16.mxu0 0
        %741 = vmatmul.mubr.bf16.gmra.mrb[0].mxu0 %v412
        %v742 = vpop.f32.mrb[0].mxu0
        %v743 = vadd.f32 0.0, %v742
        %v744 = vpop.f32.mrb[0].mxu0
        %v745 = vpop.f32.mrb[0].mxu0
        %v746 = vadd.f32 0.0, %v745
        %v747 = vpop.f32.mrb[0].mxu0
        %748 = vmatprep.mubr.bf16.mxu0 0
        %749 = vmatmul.mubr.bf16.gmra.mrb[0].mxu0 %v415
        %v750 = vpop.f32.mrb[0].mxu0
        %v751 = vadd.f32 0.0, %v750
        %v752 = vpop.f32.mrb[0].mxu0
        %v753 = vpop.f32.mrb[0].mxu0
        %v754 = vadd.f32 0.0, %v753
        %v755 = vpop.f32.mrb[0].mxu0
        %756 = vmatprep.mubr.bf16.mxu0 0
        %757 = vmatmul.mubr.bf16.gmra.mrb[0].mxu0 %v418
        %v758 = vpop.f32.mrb[0].mxu0
        %v759 = vadd.f32 0.0, %v758
        %v760 = vpop.f32.mrb[0].mxu0
        %v761 = vpop.f32.mrb[0].mxu0
        %v762 = vadd.f32 0.0, %v761
        %v763 = vpop.f32.mrb[0].mxu0
        %764 = vmatprep.mubr.bf16.mxu0 0
        %765 = vmatmul.mubr.bf16.gmra.mrb[0].mxu0 %v421
        %v766 = vpop.f32.mrb[0].mxu0
        %v767 = vadd.f32 0.0, %v766
        %v768 = vpop.f32.mrb[0].mxu0
        %v769 = vpop.f32.mrb[0].mxu0
        %v770 = vadd.f32 0.0, %v769
        %v771 = vpop.f32.mrb[0].mxu0
        %772 = vmatprep.mubr.bf16.mxu0 0
        %773 = vmatmul.mubr.bf16.gmra.mrb[0].mxu0 %v424
        %v774 = vpop.f32.mrb[0].mxu0
        %v775 = vadd.f32 0.0, %v774
        %v776 = vpop.f32.mrb[0].mxu0
        %v777 = vpop.f32.mrb[0].mxu0
        %v778 = vadd.f32 0.0, %v777
        %v779 = vpop.f32.mrb[0].mxu0
        %780 = vdwg.mxu0
        %v781 = vpack.c.bf16 %v722, %v719
        %v782 = vpack.c.bf16 %v730, %v727
        %v783 = vpack.c.bf16 %v738, %v735
        %v784 = vpack.c.bf16 %v746, %v743
        %v785 = vpack.c.bf16 %v754, %v751
        %v786 = vpack.c.bf16 %v762, %v759
        %v787 = vpack.c.bf16 %v770, %v767
        %v788 = vpack.c.bf16 %v778, %v775
        %789 = vst.msk [vmem:[#allocation4] sm:$0xff] %vm401, %v781
        %790 = vst.msk [vmem:[#allocation4 + $0x8] sm:$0xff] %vm401, %v782
        %791 = vst.msk [vmem:[#allocation4 + $0x10] sm:$0xff] %vm401, %v783
        %792 = vst.msk [vmem:[#allocation4 + $0x18] sm:$0xff] %vm401, %v784
        %793 = vst.msk [vmem:[#allocation4 + $0x20] sm:$0xff] %vm401, %v785
        %794 = vst.msk [vmem:[#allocation4 + $0x28] sm:$0xff] %vm401, %v786
        %795 = vst.msk [vmem:[#allocation4 + $0x30] sm:$0xff] %vm401, %v787
        %796 = vst.msk [vmem:[#allocation4 + $0x38] sm:$0xff] %vm401, %v788
      $region60: #{tpu_custom_call.1} parent=55 // pred_fallthru
        _
      %s797 = smul.u32 %s25, 128
      %s798 = sshra.s32 %s797, 4
      %s799 = sand.u32 %s797, 15
      %s800 = smul.addr %s798, 8
      %s801 = scalar_lea.vmem [#allocation2], %s800
      %v802 = vld [vmem:[%s801] sm:$0xff]
      %v803 = vld [vmem:[%s801 + $0x8] sm:$0xff]
      %v804 = vld [vmem:[%s801 + $0x10] sm:$0xff]
      %v805 = vld [vmem:[%s801 + $0x18] sm:$0xff]
      %v806 = vld [vmem:[%s801 + $0x20] sm:$0xff]
      %v807 = vld [vmem:[%s801 + $0x28] sm:$0xff]
      %v808 = vld [vmem:[%s801 + $0x30] sm:$0xff]
      %v809 = vld [vmem:[%s801 + $0x38] sm:$0xff]
      %v810 = vld [vmem:[#allocation3] sm:$0xff]
      %v811 = vld [vmem:[#allocation3 + $0x8] sm:$0xff]
      %v812 = vld [vmem:[#allocation3 + $0x10] sm:$0xff]
      %v813 = vld [vmem:[#allocation3 + $0x18] sm:$0xff]
      %v814 = vld [vmem:[#allocation3 + $0x20] sm:$0xff]
      %v815 = vld [vmem:[#allocation3 + $0x28] sm:$0xff]
      %v816 = vld [vmem:[#allocation3 + $0x30] sm:$0xff]
      %v817 = vld [vmem:[#allocation3 + $0x38] sm:$0xff]
      %v818 = vld [vmem:[#allocation4] sm:$0xff]
      %v819 = vld [vmem:[#allocation4 + $0x8] sm:$0xff]
      %v820 = vld [vmem:[#allocation4 + $0x10] sm:$0xff]
      %v821 = vld [vmem:[#allocation4 + $0x18] sm:$0xff]
      %v822 = vld [vmem:[#allocation4 + $0x20] sm:$0xff]
      %v823 = vld [vmem:[#allocation4 + $0x28] sm:$0xff]
      %v824 = vld [vmem:[#allocation4 + $0x30] sm:$0xff]
      %v825 = vld [vmem:[#allocation4 + $0x38] sm:$0xff]
      %v826 = vunpack.c.l.bf16 %v818
      %v827 = vunpack.c.h.bf16 %v818
      %v828 = vunpack.c.l.bf16 %v819
      %v829 = vunpack.c.h.bf16 %v819
      %v830 = vunpack.c.l.bf16 %v820
      %v831 = vunpack.c.h.bf16 %v820
      %v832 = vunpack.c.l.bf16 %v821
      %v833 = vunpack.c.h.bf16 %v821
      %v834 = vunpack.c.l.bf16 %v822
      %v835 = vunpack.c.h.bf16 %v822
      %v836 = vunpack.c.l.bf16 %v823
      %v837 = vunpack.c.h.bf16 %v823
      %v838 = vunpack.c.l.bf16 %v824
      %v839 = vunpack.c.h.bf16 %v824
      %v840 = vunpack.c.l.bf16 %v825
      %v841 = vunpack.c.h.bf16 %v825
      %vm842 = vcmask 261120
      %v843 = vsel %vm842, %v826, 0.0
      %v844 = vsel %vm842, %v827, 0.0
      %v845 = vadd.f32 %v843, %v844
      %v846 = vsel %vm842, %v828, 0.0
      %v847 = vadd.f32 %v845, %v846
      %v848 = vsel %vm842, %v829, 0.0
      %v849 = vadd.f32 %v847, %v848
      %v850 = vsel %vm842, %v830, 0.0
      %v851 = vadd.f32 %v849, %v850
      %v852 = vsel %vm842, %v831, 0.0
      %v853 = vadd.f32 %v851, %v852
      %v854 = vsel %vm842, %v832, 0.0
      %v855 = vadd.f32 %v853, %v854
      %v856 = vsel %vm842, %v833, 0.0
      %v857 = vadd.f32 %v855, %v856
      %v858 = vsel %vm842, %v834, 0.0
      %v859 = vadd.f32 %v857, %v858
      %v860 = vsel %vm842, %v835, 0.0
      %v861 = vadd.f32 %v859, %v860
      %v862 = vsel %vm842, %v836, 0.0
      %v863 = vadd.f32 %v861, %v862
      %v864 = vsel %vm842, %v837, 0.0
      %v865 = vadd.f32 %v863, %v864
      %v866 = vsel %vm842, %v838, 0.0
      %v867 = vadd.f32 %v865, %v866
      %v868 = vsel %vm842, %v839, 0.0
      %v869 = vadd.f32 %v867, %v868
      %v870 = vsel %vm842, %v840, 0.0
      %v871 = vadd.f32 %v869, %v870
      %v872 = vsel %vm842, %v841, 0.0
      %v873 = vadd.f32 %v871, %v872
      %v874 = vrot.slane %v873, 4
      %v875 = vadd.f32 %v873, %v874
      %v876 = vrot.slane %v875, 2
      %v877 = vadd.f32 %v875, %v876
      %v878 = vrot.slane %v877, 1
      %v879 = vadd.f32 %v877, %v878
      %v880 = vlaneseq
      %v881 = vand.u32 %v880, 127
      %vm882 = vcmp.lt.s32.totalorder %v881, 8
      %v883 = vld [vmem:[%s4] sm:$0x1]
      %v885 = vpack.i.b16 %v883, %v883
      %v887 = vlaneseq
      %v888 = vshrl.u32 %v887, 7
      %v889 = vsub.s32 0, %v888
      %v890 = vrot.slane %v885, %v889
      %v891 = vmul.bf16 %v802, %v890
      %v892 = vmul.bf16 %v803, %v890
      %v893 = vmul.bf16 %v804, %v890
      %v894 = vmul.bf16 %v805, %v890
      %v895 = vmul.bf16 %v806, %v890
      %v896 = vmul.bf16 %v807, %v890
      %v897 = vmul.bf16 %v808, %v890
      %v898 = vmul.bf16 %v809, %v890
      %v900 = vsel %vm842, %v891, 0
      %v903 = vsel %vm842, %v892, 0
      %v906 = vsel %vm842, %v893, 0
      %v909 = vsel %vm842, %v894, 0
      %v912 = vsel %vm842, %v895, 0
      %v915 = vsel %vm842, %v896, 0
      %v918 = vsel %vm842, %v897, 0
      %v921 = vsel %vm842, %v898, 0
      %v924 = vsel %vm842, %v810, 0
      %v927 = vsel %vm842, %v811, 0
      %v930 = vsel %vm842, %v812, 0
      %v933 = vsel %vm842, %v813, 0
      %v936 = vsel %vm842, %v814, 0
      %v939 = vsel %vm842, %v815, 0
      %v942 = vsel %vm842, %v816, 0
      %v945 = vsel %vm842, %v817, 0
      %947 = vmatprep.subr.bf16.mxu0 0
      %948 = vmatpush1.bf16.xpose.msra.mxu0 %v924
      %949 = vmatprep.subr.bf16.mxu0 0
      %950 = vmatpush1.bf16.xpose.msra.mxu0 %v927
      %951 = vmatprep.subr.bf16.mxu0 0
      %952 = vmatpush1.bf16.xpose.msra.mxu0 %v930
      %953 = vmatprep.subr.bf16.mxu0 0
      %954 = vmatpush1.bf16.xpose.msra.mxu0 %v933
      %955 = vmatprep.subr.bf16.mxu0 0
      %956 = vmatpush1.bf16.xpose.msra.mxu0 %v936
      %957 = vmatprep.subr.bf16.mxu0 0
      %958 = vmatpush1.bf16.xpose.msra.mxu0 %v939
      %959 = vmatprep.subr.bf16.mxu0 0
      %960 = vmatpush1.bf16.xpose.msra.mxu0 %v942
      %961 = vmatprep.subr.bf16.mxu0 0
      %962 = vmatpush1.bf16.xpose.msra.mxu0 %v945
      %963 = vmatprep.subr.bf16.mxu0 0
      %964 = vmatpush1.bf16.xpose.msra.mxu0 0
      %965 = vmatprep.subr.bf16.mxu0 0
      %966 = vmatpush1.bf16.xpose.msra.mxu0 0
      %967 = vmatprep.subr.bf16.mxu0 0
      %968 = vmatpush1.bf16.xpose.msra.mxu0 0
      %969 = vmatprep.subr.bf16.mxu0 0
      %970 = vmatpush1.bf16.xpose.msra.mxu0 0
      %971 = vmatprep.subr.bf16.mxu0 0
      %972 = vmatpush1.bf16.xpose.msra.mxu0 0
      %973 = vmatprep.subr.bf16.mxu0 0
      %974 = vmatpush1.bf16.xpose.msra.mxu0 0
      %975 = vmatprep.subr.bf16.mxu0 0
      %976 = vmatpush1.bf16.xpose.msra.mxu0 0
      %977 = vmatprep.subr.bf16.mxu0 0
      %978 = vmatpush1.bf16.xpose.msra.mxu0 0
      %979 = vmatprep.mubr.bf16.mxu0 0
      %980 = vmatmul.mubr.bf16.gmra.mrb[0].mxu0 %v900
      %v981 = vpop.f32.mrb[0].mxu0
      %v982 = vadd.f32 0.0, %v981
      %v983 = vpop.f32.mrb[0].mxu0
      %v984 = vpop.f32.mrb[0].mxu0
      %v985 = vadd.f32 0.0, %v984
      %v986 = vpop.f32.mrb[0].mxu0
      %987 = vmatprep.mubr.bf16.mxu0 0
      %988 = vmatmul.mubr.bf16.gmra.mrb[0].mxu0 %v903
      %v989 = vpop.f32.mrb[0].mxu0
      %v990 = vadd.f32 0.0, %v989
      %v991 = vpop.f32.mrb[0].mxu0
      %v992 = vpop.f32.mrb[0].mxu0
      %v993 = vadd.f32 0.0, %v992
      %v994 = vpop.f32.mrb[0].mxu0
      %995 = vmatprep.mubr.bf16.mxu0 0
      %996 = vmatmul.mubr.bf16.gmra.mrb[0].mxu0 %v906
      %v997 = vpop.f32.mrb[0].mxu0
      %v998 = vadd.f32 0.0, %v997
      %v999 = vpop.f32.mrb[0].mxu0
      %v1000 = vpop.f32.mrb[0].mxu0
      %v1001 = vadd.f32 0.0, %v1000
      %v1002 = vpop.f32.mrb[0].mxu0
      %1003 = vmatprep.mubr.bf16.mxu0 0
      %1004 = vmatmul.mubr.bf16.gmra.mrb[0].mxu0 %v909
      %v1005 = vpop.f32.mrb[0].mxu0
      %v1006 = vadd.f32 0.0, %v1005
      %v1007 = vpop.f32.mrb[0].mxu0
      %v1008 = vpop.f32.mrb[0].mxu0
      %v1009 = vadd.f32 0.0, %v1008
      %v1010 = vpop.f32.mrb[0].mxu0
      %1011 = vmatprep.mubr.bf16.mxu0 0
      %1012 = vmatmul.mubr.bf16.gmra.mrb[0].mxu0 %v912
      %v1013 = vpop.f32.mrb[0].mxu0
      %v1014 = vadd.f32 0.0, %v1013
      %v1015 = vpop.f32.mrb[0].mxu0
      %v1016 = vpop.f32.mrb[0].mxu0
      %v1017 = vadd.f32 0.0, %v1016
      %v1018 = vpop.f32.mrb[0].mxu0
      %1019 = vmatprep.mubr.bf16.mxu0 0
      %1020 = vmatmul.mubr.bf16.gmra.mrb[0].mxu0 %v915
      %v1021 = vpop.f32.mrb[0].mxu0
      %v1022 = vadd.f32 0.0, %v1021
      %v1023 = vpop.f32.mrb[0].mxu0
      %v1024 = vpop.f32.mrb[0].mxu0
      %v1025 = vadd.f32 0.0, %v1024
      %v1026 = vpop.f32.mrb[0].mxu0
      %1027 = vmatprep.mubr.bf16.mxu0 0
      %1028 = vmatmul.mubr.bf16.gmra.mrb[0].mxu0 %v918
      %v1029 = vpop.f32.mrb[0].mxu0
      %v1030 = vadd.f32 0.0, %v1029
      %v1031 = vpop.f32.mrb[0].mxu0
      %v1032 = vpop.f32.mrb[0].mxu0
      %v1033 = vadd.f32 0.0, %v1032
      %v1034 = vpop.f32.mrb[0].mxu0
      %1035 = vmatprep.mubr.bf16.mxu0 0
      %1036 = vmatmul.mubr.bf16.gmra.mrb[0].mxu0 %v921
      %v1037 = vpop.f32.mrb[0].mxu0
      %v1038 = vadd.f32 0.0, %v1037
      %v1039 = vpop.f32.mrb[0].mxu0
      %v1040 = vpop.f32.mrb[0].mxu0
      %v1041 = vadd.f32 0.0, %v1040
      %v1042 = vpop.f32.mrb[0].mxu0
      %1043 = vdwg.mxu0
      %v1044 = vsel %vm882, %v982, -1e+30
      %v1045 = vsel %vm882, %v985, -1e+30
      %v1046 = vsel %vm882, %v990, -1e+30
      %v1047 = vsel %vm882, %v993, -1e+30
      %v1048 = vsel %vm882, %v998, -1e+30
      %v1049 = vsel %vm882, %v1001, -1e+30
      %v1050 = vsel %vm882, %v1006, -1e+30
      %v1051 = vsel %vm882, %v1009, -1e+30
      %v1052 = vsel %vm882, %v1014, -1e+30
      %v1053 = vsel %vm882, %v1017, -1e+30
      %v1054 = vsel %vm882, %v1022, -1e+30
      %v1055 = vsel %vm882, %v1025, -1e+30
      %v1056 = vsel %vm882, %v1030, -1e+30
      %v1057 = vsel %vm882, %v1033, -1e+30
      %v1058 = vsel %vm882, %v1038, -1e+30
      %v1059 = vsel %vm882, %v1041, -1e+30
      %1060 = vmax.xlane.f32.xlu0 %v1044
      %v1061 = vpop.xlane.xlu0 %1060
      %1062 = vmax.xlane.f32.xlu0 %v1045
      %v1063 = vpop.xlane.xlu0 %1062
      %1064 = vmax.xlane.f32.xlu0 %v1046
      %v1065 = vpop.xlane.xlu0 %1064
      %1066 = vmax.xlane.f32.xlu0 %v1047
      %v1067 = vpop.xlane.xlu0 %1066
      %1068 = vmax.xlane.f32.xlu0 %v1048
      %v1069 = vpop.xlane.xlu0 %1068
      %1070 = vmax.xlane.f32.xlu0 %v1049
      %v1071 = vpop.xlane.xlu0 %1070
      %1072 = vmax.xlane.f32.xlu0 %v1050
      %v1073 = vpop.xlane.xlu0 %1072
      %1074 = vmax.xlane.f32.xlu0 %v1051
      %v1075 = vpop.xlane.xlu0 %1074
      %1076 = vmax.xlane.f32.xlu0 %v1052
      %v1077 = vpop.xlane.xlu0 %1076
      %1078 = vmax.xlane.f32.xlu0 %v1053
      %v1079 = vpop.xlane.xlu0 %1078
      %1080 = vmax.xlane.f32.xlu0 %v1054
      %v1081 = vpop.xlane.xlu0 %1080
      %1082 = vmax.xlane.f32.xlu0 %v1055
      %v1083 = vpop.xlane.xlu0 %1082
      %1084 = vmax.xlane.f32.xlu0 %v1056
      %v1085 = vpop.xlane.xlu0 %1084
      %1086 = vmax.xlane.f32.xlu0 %v1057
      %v1087 = vpop.xlane.xlu0 %1086
      %1088 = vmax.xlane.f32.xlu0 %v1058
      %v1089 = vpop.xlane.xlu0 %1088
      %1090 = vmax.xlane.f32.xlu0 %v1059
      %v1091 = vpop.xlane.xlu0 %1090
      %v1092 = vsub.f32 %v1044, %v1061
      %v1093 = vsub.f32 %v1045, %v1063
      %v1094 = vsub.f32 %v1046, %v1065
      %v1095 = vsub.f32 %v1047, %v1067
      %v1096 = vsub.f32 %v1048, %v1069
      %v1097 = vsub.f32 %v1049, %v1071
      %v1098 = vsub.f32 %v1050, %v1073
      %v1099 = vsub.f32 %v1051, %v1075
      %v1100 = vsub.f32 %v1052, %v1077
      %v1101 = vsub.f32 %v1053, %v1079
      %v1102 = vsub.f32 %v1054, %v1081
      %v1103 = vsub.f32 %v1055, %v1083
      %v1104 = vsub.f32 %v1056, %v1085
      %v1105 = vsub.f32 %v1057, %v1087
      %v1106 = vsub.f32 %v1058, %v1089
      %v1107 = vsub.f32 %v1059, %v1091
      %v1108 = vmul.f32 %v1092, 1.442695
      %v1109 = vpow.pop %v1108
      %v1110 = vmul.f32 %v1093, 1.442695
      %v1111 = vpow.pop %v1110
      %v1112 = vmul.f32 %v1094, 1.442695
      %v1113 = vpow.pop %v1112
      %v1114 = vmul.f32 %v1095, 1.442695
      %v1115 = vpow.pop %v1114
      %v1116 = vmul.f32 %v1096, 1.442695
      %v1117 = vpow.pop %v1116
      %v1118 = vmul.f32 %v1097, 1.442695
      %v1119 = vpow.pop %v1118
      %v1120 = vmul.f32 %v1098, 1.442695
      %v1121 = vpow.pop %v1120
      %v1122 = vmul.f32 %v1099, 1.442695
      %v1123 = vpow.pop %v1122
      %v1124 = vmul.f32 %v1100, 1.442695
      %v1125 = vpow.pop %v1124
      %v1126 = vmul.f32 %v1101, 1.442695
      %v1127 = vpow.pop %v1126
      %v1128 = vmul.f32 %v1102, 1.442695
      %v1129 = vpow.pop %v1128
      %v1130 = vmul.f32 %v1103, 1.442695
      %v1131 = vpow.pop %v1130
      %v1132 = vmul.f32 %v1104, 1.442695
      %v1133 = vpow.pop %v1132
      %v1134 = vmul.f32 %v1105, 1.442695
      %v1135 = vpow.pop %v1134
      %v1136 = vmul.f32 %v1106, 1.442695
      %v1137 = vpow.pop %v1136
      %v1138 = vmul.f32 %v1107, 1.442695
      %v1139 = vpow.pop %v1138
      %1140 = vadd.xlane.f32.xlu0 %v1109
      %v1141 = vpop.xlane.xlu0 %1140
      %1142 = vadd.xlane.f32.xlu0 %v1111
      %v1143 = vpop.xlane.xlu0 %1142
      %1144 = vadd.xlane.f32.xlu0 %v1113
      %v1145 = vpop.xlane.xlu0 %1144
      %1146 = vadd.xlane.f32.xlu0 %v1115
      %v1147 = vpop.xlane.xlu0 %1146
      %1148 = vadd.xlane.f32.xlu0 %v1117
      %v1149 = vpop.xlane.xlu0 %1148
      %1150 = vadd.xlane.f32.xlu0 %v1119
      %v1151 = vpop.xlane.xlu0 %1150
      %1152 = vadd.xlane.f32.xlu0 %v1121
      %v1153 = vpop.xlane.xlu0 %1152
      %1154 = vadd.xlane.f32.xlu0 %v1123
      %v1155 = vpop.xlane.xlu0 %1154
      %1156 = vadd.xlane.f32.xlu0 %v1125
      %v1157 = vpop.xlane.xlu0 %1156
      %1158 = vadd.xlane.f32.xlu0 %v1127
      %v1159 = vpop.xlane.xlu0 %1158
      %1160 = vadd.xlane.f32.xlu0 %v1129
      %v1161 = vpop.xlane.xlu0 %1160
      %1162 = vadd.xlane.f32.xlu0 %v1131
      %v1163 = vpop.xlane.xlu0 %1162
      %1164 = vadd.xlane.f32.xlu0 %v1133
      %v1165 = vpop.xlane.xlu0 %1164
      %1166 = vadd.xlane.f32.xlu0 %v1135
      %v1167 = vpop.xlane.xlu0 %1166
      %1168 = vadd.xlane.f32.xlu0 %v1137
      %v1169 = vpop.xlane.xlu0 %1168
      %1170 = vadd.xlane.f32.xlu0 %v1139
      %v1171 = vpop.xlane.xlu0 %1170
      %v1172 = vrcp.pop %v1141
      %v1173 = vrcp.pop %v1143
      %v1174 = vrcp.pop %v1145
      %v1175 = vrcp.pop %v1147
      %v1176 = vrcp.pop %v1149
      %v1177 = vrcp.pop %v1151
      %v1178 = vrcp.pop %v1153
      %v1179 = vrcp.pop %v1155
      %v1180 = vrcp.pop %v1157
      %v1181 = vrcp.pop %v1159
      %v1182 = vrcp.pop %v1161
      %v1183 = vrcp.pop %v1163
      %v1184 = vrcp.pop %v1165
      %v1185 = vrcp.pop %v1167
      %v1186 = vrcp.pop %v1169
      %v1187 = vrcp.pop %v1171
      %v1188 = vmul.f32 %v1109, %v1172
      %v1189 = vmul.f32 %v1111, %v1173
      %v1190 = vmul.f32 %v1113, %v1174
      %v1191 = vmul.f32 %v1115, %v1175
      %v1192 = vmul.f32 %v1117, %v1176
      %v1193 = vmul.f32 %v1119, %v1177
      %v1194 = vmul.f32 %v1121, %v1178
      %v1195 = vmul.f32 %v1123, %v1179
      %v1196 = vmul.f32 %v1125, %v1180
      %v1197 = vmul.f32 %v1127, %v1181
      %v1198 = vmul.f32 %v1129, %v1182
      %v1199 = vmul.f32 %v1131, %v1183
      %v1200 = vmul.f32 %v1133, %v1184
      %v1201 = vmul.f32 %v1135, %v1185
      %v1202 = vmul.f32 %v1137, %v1186
      %v1203 = vmul.f32 %v1139, %v1187
      %v1204 = vpack.c.bf16 %v1189, %v1188
      %v1205 = vpack.c.bf16 %v1191, %v1190
      %v1206 = vpack.c.bf16 %v1193, %v1192
      %v1207 = vpack.c.bf16 %v1195, %v1194
      %v1208 = vpack.c.bf16 %v1197, %v1196
      %v1209 = vpack.c.bf16 %v1199, %v1198
      %v1210 = vpack.c.bf16 %v1201, %v1200
      %v1211 = vpack.c.bf16 %v1203, %v1202
      %1212 = vmatprep.subr.bf16.mxu0 0
      %1213 = vmatpush1.bf16.msra.mxu0 %v818
      %1214 = vmatprep.subr.bf16.mxu0 0
      %1215 = vmatpush1.bf16.msra.mxu0 %v819
      %1216 = vmatprep.subr.bf16.mxu0 0
      %1217 = vmatpush1.bf16.msra.mxu0 %v820
      %1218 = vmatprep.subr.bf16.mxu0 0
      %1219 = vmatpush1.bf16.msra.mxu0 %v821
      %1220 = vmatprep.subr.bf16.mxu0 0
      %1221 = vmatpush1.bf16.msra.mxu0 %v822
      %1222 = vmatprep.subr.bf16.mxu0 0
      %1223 = vmatpush1.bf16.msra.mxu0 %v823
      %1224 = vmatprep.subr.bf16.mxu0 0
      %1225 = vmatpush1.bf16.msra.mxu0 %v824
      %1226 = vmatprep.subr.bf16.mxu0 0
      %1227 = vmatpush1.bf16.msra.mxu0 %v825
      %1228 = vmatprep.subr.bf16.mxu0 0
      %1229 = vmatpush1.bf16.msra.mxu0 0
      %1230 = vmatprep.subr.bf16.mxu0 0
      %1231 = vmatpush1.bf16.msra.mxu0 0
      %1232 = vmatprep.subr.bf16.mxu0 0
      %1233 = vmatpush1.bf16.msra.mxu0 0
      %1234 = vmatprep.subr.bf16.mxu0 0
      %1235 = vmatpush1.bf16.msra.mxu0 0
      %1236 = vmatprep.subr.bf16.mxu0 0
      %1237 = vmatpush1.bf16.msra.mxu0 0
      %1238 = vmatprep.subr.bf16.mxu0 0
      %1239 = vmatpush1.bf16.msra.mxu0 0
      %1240 = vmatprep.subr.bf16.mxu0 0
      %1241 = vmatpush1.bf16.msra.mxu0 0
      %1242 = vmatprep.subr.bf16.mxu0 0
      %1243 = vmatpush1.bf16.msra.mxu0 0
      %1244 = vmatprep.mubr.bf16.mxu0 0
      %1245 = vmatmul.mubr.bf16.gmra.mrb[0].mxu0 %v1204
      %v1246 = vpop.f32.mrb[0].mxu0
      %v1247 = vadd.f32 0.0, %v1246
      %v1248 = vpop.f32.mrb[0].mxu0
      %v1249 = vpop.f32.mrb[0].mxu0
      %v1250 = vadd.f32 0.0, %v1249
      %v1251 = vpop.f32.mrb[0].mxu0
      %1252 = vmatprep.mubr.bf16.mxu0 0
      %1253 = vmatmul.mubr.bf16.gmra.mrb[0].mxu0 %v1205
      %v1254 = vpop.f32.mrb[0].mxu0
      %v1255 = vadd.f32 0.0, %v1254
      %v1256 = vpop.f32.mrb[0].mxu0
      %v1257 = vpop.f32.mrb[0].mxu0
      %v1258 = vadd.f32 0.0, %v1257
      %v1259 = vpop.f32.mrb[0].mxu0
      %1260 = vmatprep.mubr.bf16.mxu0 0
      %1261 = vmatmul.mubr.bf16.gmra.mrb[0].mxu0 %v1206
      %v1262 = vpop.f32.mrb[0].mxu0
      %v1263 = vadd.f32 0.0, %v1262
      %v1264 = vpop.f32.mrb[0].mxu0
      %v1265 = vpop.f32.mrb[0].mxu0
      %v1266 = vadd.f32 0.0, %v1265
      %v1267 = vpop.f32.mrb[0].mxu0
      %1268 = vmatprep.mubr.bf16.mxu0 0
      %1269 = vmatmul.mubr.bf16.gmra.mrb[0].mxu0 %v1207
      %v1270 = vpop.f32.mrb[0].mxu0
      %v1271 = vadd.f32 0.0, %v1270
      %v1272 = vpop.f32.mrb[0].mxu0
      %v1273 = vpop.f32.mrb[0].mxu0
      %v1274 = vadd.f32 0.0, %v1273
      %v1275 = vpop.f32.mrb[0].mxu0
      %1276 = vmatprep.mubr.bf16.mxu0 0
      %1277 = vmatmul.mubr.bf16.gmra.mrb[0].mxu0 %v1208
      %v1278 = vpop.f32.mrb[0].mxu0
      %v1279 = vadd.f32 0.0, %v1278
      %v1280 = vpop.f32.mrb[0].mxu0
      %v1281 = vpop.f32.mrb[0].mxu0
      %v1282 = vadd.f32 0.0, %v1281
      %v1283 = vpop.f32.mrb[0].mxu0
      %1284 = vmatprep.mubr.bf16.mxu0 0
      %1285 = vmatmul.mubr.bf16.gmra.mrb[0].mxu0 %v1209
      %v1286 = vpop.f32.mrb[0].mxu0
      %v1287 = vadd.f32 0.0, %v1286
      %v1288 = vpop.f32.mrb[0].mxu0
      %v1289 = vpop.f32.mrb[0].mxu0
      %v1290 = vadd.f32 0.0, %v1289
      %v1291 = vpop.f32.mrb[0].mxu0
      %1292 = vmatprep.mubr.bf16.mxu0 0
      %1293 = vmatmul.mubr.bf16.gmra.mrb[0].mxu0 %v1210
      %v1294 = vpop.f32.mrb[0].mxu0
      %v1295 = vadd.f32 0.0, %v1294
      %v1296 = vpop.f32.mrb[0].mxu0
      %v1297 = vpop.f32.mrb[0].mxu0
      %v1298 = vadd.f32 0.0, %v1297
      %v1299 = vpop.f32.mrb[0].mxu0
      %1300 = vmatprep.mubr.bf16.mxu0 0
      %1301 = vmatmul.mubr.bf16.gmra.mrb[0].mxu0 %v1211
      %v1302 = vpop.f32.mrb[0].mxu0
      %v1303 = vadd.f32 0.0, %v1302
      %v1304 = vpop.f32.mrb[0].mxu0
      %v1305 = vpop.f32.mrb[0].mxu0
      %v1306 = vadd.f32 0.0, %v1305
      %v1307 = vpop.f32.mrb[0].mxu0
      %1308 = vdwg.mxu0
      %v1309 = vld [vmem:[%s5] sm:$0x1]
      %v1310 = vlaneseq
      %v1311 = vshrl.u32 %v1310, 7
      %v1312 = vsub.s32 0, %v1311
      %v1313 = vrot.slane %v1309, %v1312
      %v1314 = vmul.f32 %v1247, %v1313
      %v1315 = vmul.f32 %v1250, %v1313
      %v1316 = vmul.f32 %v1255, %v1313
      %v1317 = vmul.f32 %v1258, %v1313
      %v1318 = vmul.f32 %v1263, %v1313
      %v1319 = vmul.f32 %v1266, %v1313
      %v1320 = vmul.f32 %v1271, %v1313
      %v1321 = vmul.f32 %v1274, %v1313
      %v1322 = vmul.f32 %v1279, %v1313
      %v1323 = vmul.f32 %v1282, %v1313
      %v1324 = vmul.f32 %v1287, %v1313
      %v1325 = vmul.f32 %v1290, %v1313
      %v1326 = vmul.f32 %v1295, %v1313
      %v1327 = vmul.f32 %v1298, %v1313
      %v1328 = vmul.f32 %v1303, %v1313
      %v1329 = vmul.f32 %v1306, %v1313
      %v1330 = vadd.f32 %v1314, 0.0
      %v1331 = vadd.f32 %v1315, 0.0
      %v1332 = vadd.f32 %v1316, 0.0
      %v1333 = vadd.f32 %v1317, 0.0
      %v1334 = vadd.f32 %v1318, 0.0
      %v1335 = vadd.f32 %v1319, 0.0
      %v1336 = vadd.f32 %v1320, 0.0
      %v1337 = vadd.f32 %v1321, 0.0
      %v1338 = vadd.f32 %v1322, 0.0
      %v1339 = vadd.f32 %v1323, 0.0
      %v1340 = vadd.f32 %v1324, 0.0
      %v1341 = vadd.f32 %v1325, 0.0
      %v1342 = vadd.f32 %v1326, 0.0
      %v1343 = vadd.f32 %v1327, 0.0
      %v1344 = vadd.f32 %v1328, 0.0
      %v1345 = vadd.f32 %v1329, 0.0
      %v1346 = vshrl.u32 %v883, 16
      %v1347 = vpack.i.b16 %v1346, %v1346
      %v1349 = vlaneseq
      %v1350 = vshrl.u32 %v1349, 7
      %v1351 = vsub.s32 0, %v1350
      %v1352 = vrot.slane %v1347, %v1351
      %v1353 = vmul.bf16 %v802, %v1352
      %v1354 = vmul.bf16 %v803, %v1352
      %v1355 = vmul.bf16 %v804, %v1352
      %v1356 = vmul.bf16 %v805, %v1352
      %v1357 = vmul.bf16 %v806, %v1352
      %v1358 = vmul.bf16 %v807, %v1352
      %v1359 = vmul.bf16 %v808, %v1352
      %v1360 = vmul.bf16 %v809, %v1352
      %v1362 = vsel %vm842, %v1353, 0
      %v1365 = vsel %vm842, %v1354, 0
      %v1368 = vsel %vm842, %v1355, 0
      %v1371 = vsel %vm842, %v1356, 0
      %v1374 = vsel %vm842, %v1357, 0
      %v1377 = vsel %vm842, %v1358, 0
      %v1380 = vsel %vm842, %v1359, 0
      %v1383 = vsel %vm842, %v1360, 0
      %1385 = vmatprep.subr.bf16.mxu0 0
      %1386 = vmatpush1.bf16.xpose.msra.mxu0 %v924
      %1387 = vmatprep.subr.bf16.mxu0 0
      %1388 = vmatpush1.bf16.xpose.msra.mxu0 %v927
      %1389 = vmatprep.subr.bf16.mxu0 0
      %1390 = vmatpush1.bf16.xpose.msra.mxu0 %v930
      %1391 = vmatprep.subr.bf16.mxu0 0
      %1392 = vmatpush1.bf16.xpose.msra.mxu0 %v933
      %1393 = vmatprep.subr.bf16.mxu0 0
      %1394 = vmatpush1.bf16.xpose.msra.mxu0 %v936
      %1395 = vmatprep.subr.bf16.mxu0 0
      %1396 = vmatpush1.bf16.xpose.msra.mxu0 %v939
      %1397 = vmatprep.subr.bf16.mxu0 0
      %1398 = vmatpush1.bf16.xpose.msra.mxu0 %v942
      %1399 = vmatprep.subr.bf16.mxu0 0
      %1400 = vmatpush1.bf16.xpose.msra.mxu0 %v945
      %1401 = vmatprep.subr.bf16.mxu0 0
      %1402 = vmatpush1.bf16.xpose.msra.mxu0 0
      %1403 = vmatprep.subr.bf16.mxu0 0
      %1404 = vmatpush1.bf16.xpose.msra.mxu0 0
      %1405 = vmatprep.subr.bf16.mxu0 0
      %1406 = vmatpush1.bf16.xpose.msra.mxu0 0
      %1407 = vmatprep.subr.bf16.mxu0 0
      %1408 = vmatpush1.bf16.xpose.msra.mxu0 0
      %1409 = vmatprep.subr.bf16.mxu0 0
      %1410 = vmatpush1.bf16.xpose.msra.mxu0 0
      %1411 = vmatprep.subr.bf16.mxu0 0
      %1412 = vmatpush1.bf16.xpose.msra.mxu0 0
      %1413 = vmatprep.subr.bf16.mxu0 0
      %1414 = vmatpush1.bf16.xpose.msra.mxu0 0
      %1415 = vmatprep.subr.bf16.mxu0 0
      %1416 = vmatpush1.bf16.xpose.msra.mxu0 0
      %1417 = vmatprep.mubr.bf16.mxu0 0
      %1418 = vmatmul.mubr.bf16.gmra.mrb[0].mxu0 %v1362
      %v1419 = vpop.f32.mrb[0].mxu0
      %v1420 = vadd.f32 0.0, %v1419
      %v1421 = vpop.f32.mrb[0].mxu0
      %v1422 = vpop.f32.mrb[0].mxu0
      %v1423 = vadd.f32 0.0, %v1422
      %v1424 = vpop.f32.mrb[0].mxu0
      %1425 = vmatprep.mubr.bf16.mxu0 0
      %1426 = vmatmul.mubr.bf16.gmra.mrb[0].mxu0 %v1365
      %v1427 = vpop.f32.mrb[0].mxu0
      %v1428 = vadd.f32 0.0, %v1427
      %v1429 = vpop.f32.mrb[0].mxu0
      %v1430 = vpop.f32.mrb[0].mxu0
      %v1431 = vadd.f32 0.0, %v1430
      %v1432 = vpop.f32.mrb[0].mxu0
      %1433 = vmatprep.mubr.bf16.mxu0 0
      %1434 = vmatmul.mubr.bf16.gmra.mrb[0].mxu0 %v1368
      %v1435 = vpop.f32.mrb[0].mxu0
      %v1436 = vadd.f32 0.0, %v1435
      %v1437 = vpop.f32.mrb[0].mxu0
      %v1438 = vpop.f32.mrb[0].mxu0
      %v1439 = vadd.f32 0.0, %v1438
      %v1440 = vpop.f32.mrb[0].mxu0
      %1441 = vmatprep.mubr.bf16.mxu0 0
      %1442 = vmatmul.mubr.bf16.gmra.mrb[0].mxu0 %v1371
      %v1443 = vpop.f32.mrb[0].mxu0
      %v1444 = vadd.f32 0.0, %v1443
      %v1445 = vpop.f32.mrb[0].mxu0
      %v1446 = vpop.f32.mrb[0].mxu0
      %v1447 = vadd.f32 0.0, %v1446
      %v1448 = vpop.f32.mrb[0].mxu0
      %1449 = vmatprep.mubr.bf16.mxu0 0
      %1450 = vmatmul.mubr.bf16.gmra.mrb[0].mxu0 %v1374
      %v1451 = vpop.f32.mrb[0].mxu0
      %v1452 = vadd.f32 0.0, %v1451
      %v1453 = vpop.f32.mrb[0].mxu0
      %v1454 = vpop.f32.mrb[0].mxu0
      %v1455 = vadd.f32 0.0, %v1454
      %v1456 = vpop.f32.mrb[0].mxu0
      %1457 = vmatprep.mubr.bf16.mxu0 0
      %1458 = vmatmul.mubr.bf16.gmra.mrb[0].mxu0 %v1377
      %v1459 = vpop.f32.mrb[0].mxu0
      %v1460 = vadd.f32 0.0, %v1459
      %v1461 = vpop.f32.mrb[0].mxu0
      %v1462 = vpop.f32.mrb[0].mxu0
      %v1463 = vadd.f32 0.0, %v1462
      %v1464 = vpop.f32.mrb[0].mxu0
      %1465 = vmatprep.mubr.bf16.mxu0 0
      %1466 = vmatmul.mubr.bf16.gmra.mrb[0].mxu0 %v1380
      %v1467 = vpop.f32.mrb[0].mxu0
      %v1468 = vadd.f32 0.0, %v1467
      %v1469 = vpop.f32.mrb[0].mxu0
      %v1470 = vpop.f32.mrb[0].mxu0
      %v1471 = vadd.f32 0.0, %v1470
      %v1472 = vpop.f32.mrb[0].mxu0
      %1473 = vmatprep.mubr.bf16.mxu0 0
      %1474 = vmatmul.mubr.bf16.gmra.mrb[0].mxu0 %v1383
      %v1475 = vpop.f32.mrb[0].mxu0
      %v1476 = vadd.f32 0.0, %v1475
      %v1477 = vpop.f32.mrb[0].mxu0
      %v1478 = vpop.f32.mrb[0].mxu0
      %v1479 = vadd.f32 0.0, %v1478
      %v1480 = vpop.f32.mrb[0].mxu0
      %1481 = vdwg.mxu0
      %v1482 = vsel %vm882, %v1420, -1e+30
      %v1483 = vsel %vm882, %v1423, -1e+30
      %v1484 = vsel %vm882, %v1428, -1e+30
      %v1485 = vsel %vm882, %v1431, -1e+30
      %v1486 = vsel %vm882, %v1436, -1e+30
      %v1487 = vsel %vm882, %v1439, -1e+30
      %v1488 = vsel %vm882, %v1444, -1e+30
      %v1489 = vsel %vm882, %v1447, -1e+30
      %v1490 = vsel %vm882, %v1452, -1e+30
      %v1491 = vsel %vm882, %v1455, -1e+30
      %v1492 = vsel %vm882, %v1460, -1e+30
      %v1493 = vsel %vm882, %v1463, -1e+30
      %v1494 = vsel %vm882, %v1468, -1e+30
      %v1495 = vsel %vm882, %v1471, -1e+30
      %v1496 = vsel %vm882, %v1476, -1e+30
      %v1497 = vsel %vm882, %v1479, -1e+30
      %1498 = vmax.xlane.f32.xlu0 %v1482
      %v1499 = vpop.xlane.xlu0 %1498
      %1500 = vmax.xlane.f32.xlu0 %v1483
      %v1501 = vpop.xlane.xlu0 %1500
      %1502 = vmax.xlane.f32.xlu0 %v1484
      %v1503 = vpop.xlane.xlu0 %1502
      %1504 = vmax.xlane.f32.xlu0 %v1485
      %v1505 = vpop.xlane.xlu0 %1504
      %1506 = vmax.xlane.f32.xlu0 %v1486
      %v1507 = vpop.xlane.xlu0 %1506
      %1508 = vmax.xlane.f32.xlu0 %v1487
      %v1509 = vpop.xlane.xlu0 %1508
      %1510 = vmax.xlane.f32.xlu0 %v1488
      %v1511 = vpop.xlane.xlu0 %1510
      %1512 = vmax.xlane.f32.xlu0 %v1489
      %v1513 = vpop.xlane.xlu0 %1512
      %1514 = vmax.xlane.f32.xlu0 %v1490
      %v1515 = vpop.xlane.xlu0 %1514
      %1516 = vmax.xlane.f32.xlu0 %v1491
      %v1517 = vpop.xlane.xlu0 %1516
      %1518 = vmax.xlane.f32.xlu0 %v1492
      %v1519 = vpop.xlane.xlu0 %1518
      %1520 = vmax.xlane.f32.xlu0 %v1493
      %v1521 = vpop.xlane.xlu0 %1520
      %1522 = vmax.xlane.f32.xlu0 %v1494
      %v1523 = vpop.xlane.xlu0 %1522
      %1524 = vmax.xlane.f32.xlu0 %v1495
      %v1525 = vpop.xlane.xlu0 %1524
      %1526 = vmax.xlane.f32.xlu0 %v1496
      %v1527 = vpop.xlane.xlu0 %1526
      %1528 = vmax.xlane.f32.xlu0 %v1497
      %v1529 = vpop.xlane.xlu0 %1528
      %v1530 = vsub.f32 %v1482, %v1499
      %v1531 = vsub.f32 %v1483, %v1501
      %v1532 = vsub.f32 %v1484, %v1503
      %v1533 = vsub.f32 %v1485, %v1505
      %v1534 = vsub.f32 %v1486, %v1507
      %v1535 = vsub.f32 %v1487, %v1509
      %v1536 = vsub.f32 %v1488, %v1511
      %v1537 = vsub.f32 %v1489, %v1513
      %v1538 = vsub.f32 %v1490, %v1515
      %v1539 = vsub.f32 %v1491, %v1517
      %v1540 = vsub.f32 %v1492, %v1519
      %v1541 = vsub.f32 %v1493, %v1521
      %v1542 = vsub.f32 %v1494, %v1523
      %v1543 = vsub.f32 %v1495, %v1525
      %v1544 = vsub.f32 %v1496, %v1527
      %v1545 = vsub.f32 %v1497, %v1529
      %v1546 = vmul.f32 %v1530, 1.442695
      %v1547 = vpow.pop %v1546
      %v1548 = vmul.f32 %v1531, 1.442695
      %v1549 = vpow.pop %v1548
      %v1550 = vmul.f32 %v1532, 1.442695
      %v1551 = vpow.pop %v1550
      %v1552 = vmul.f32 %v1533, 1.442695
      %v1553 = vpow.pop %v1552
      %v1554 = vmul.f32 %v1534, 1.442695
      %v1555 = vpow.pop %v1554
      %v1556 = vmul.f32 %v1535, 1.442695
      %v1557 = vpow.pop %v1556
      %v1558 = vmul.f32 %v1536, 1.442695
      %v1559 = vpow.pop %v1558
      %v1560 = vmul.f32 %v1537, 1.442695
      %v1561 = vpow.pop %v1560
      %v1562 = vmul.f32 %v1538, 1.442695
      %v1563 = vpow.pop %v1562
      %v1564 = vmul.f32 %v1539, 1.442695
      %v1565 = vpow.pop %v1564
      %v1566 = vmul.f32 %v1540, 1.442695
      %v1567 = vpow.pop %v1566
      %v1568 = vmul.f32 %v1541, 1.442695
      %v1569 = vpow.pop %v1568
      %v1570 = vmul.f32 %v1542, 1.442695
      %v1571 = vpow.pop %v1570
      %v1572 = vmul.f32 %v1543, 1.442695
      %v1573 = vpow.pop %v1572
      %v1574 = vmul.f32 %v1544, 1.442695
      %v1575 = vpow.pop %v1574
      %v1576 = vmul.f32 %v1545, 1.442695
      %v1577 = vpow.pop %v1576
      %1578 = vadd.xlane.f32.xlu0 %v1547
      %v1579 = vpop.xlane.xlu0 %1578
      %1580 = vadd.xlane.f32.xlu0 %v1549
      %v1581 = vpop.xlane.xlu0 %1580
      %1582 = vadd.xlane.f32.xlu0 %v1551
      %v1583 = vpop.xlane.xlu0 %1582
      %1584 = vadd.xlane.f32.xlu0 %v1553
      %v1585 = vpop.xlane.xlu0 %1584
      %1586 = vadd.xlane.f32.xlu0 %v1555
      %v1587 = vpop.xlane.xlu0 %1586
      %1588 = vadd.xlane.f32.xlu0 %v1557
      %v1589 = vpop.xlane.xlu0 %1588
      %1590 = vadd.xlane.f32.xlu0 %v1559
      %v1591 = vpop.xlane.xlu0 %1590
      %1592 = vadd.xlane.f32.xlu0 %v1561
      %v1593 = vpop.xlane.xlu0 %1592
      %1594 = vadd.xlane.f32.xlu0 %v1563
      %v1595 = vpop.xlane.xlu0 %1594
      %1596 = vadd.xlane.f32.xlu0 %v1565
      %v1597 = vpop.xlane.xlu0 %1596
      %1598 = vadd.xlane.f32.xlu0 %v1567
      %v1599 = vpop.xlane.xlu0 %1598
      %1600 = vadd.xlane.f32.xlu0 %v1569
      %v1601 = vpop.xlane.xlu0 %1600
      %1602 = vadd.xlane.f32.xlu0 %v1571
      %v1603 = vpop.xlane.xlu0 %1602
      %1604 = vadd.xlane.f32.xlu0 %v1573
      %v1605 = vpop.xlane.xlu0 %1604
      %1606 = vadd.xlane.f32.xlu0 %v1575
      %v1607 = vpop.xlane.xlu0 %1606
      %1608 = vadd.xlane.f32.xlu0 %v1577
      %v1609 = vpop.xlane.xlu0 %1608
      %v1610 = vrcp.pop %v1579
      %v1611 = vrcp.pop %v1581
      %v1612 = vrcp.pop %v1583
      %v1613 = vrcp.pop %v1585
      %v1614 = vrcp.pop %v1587
      %v1615 = vrcp.pop %v1589
      %v1616 = vrcp.pop %v1591
      %v1617 = vrcp.pop %v1593
      %v1618 = vrcp.pop %v1595
      %v1619 = vrcp.pop %v1597
      %v1620 = vrcp.pop %v1599
      %v1621 = vrcp.pop %v1601
      %v1622 = vrcp.pop %v1603
      %v1623 = vrcp.pop %v1605
      %v1624 = vrcp.pop %v1607
      %v1625 = vrcp.pop %v1609
      %v1626 = vmul.f32 %v1547, %v1610
      %v1627 = vmul.f32 %v1549, %v1611
      %v1628 = vmul.f32 %v1551, %v1612
      %v1629 = vmul.f32 %v1553, %v1613
      %v1630 = vmul.f32 %v1555, %v1614
      %v1631 = vmul.f32 %v1557, %v1615
      %v1632 = vmul.f32 %v1559, %v1616
      %v1633 = vmul.f32 %v1561, %v1617
      %v1634 = vmul.f32 %v1563, %v1618
      %v1635 = vmul.f32 %v1565, %v1619
      %v1636 = vmul.f32 %v1567, %v1620
      %v1637 = vmul.f32 %v1569, %v1621
      %v1638 = vmul.f32 %v1571, %v1622
      %v1639 = vmul.f32 %v1573, %v1623
      %v1640 = vmul.f32 %v1575, %v1624
      %v1641 = vmul.f32 %v1577, %v1625
      %v1642 = vpack.c.bf16 %v1627, %v1626
      %v1643 = vpack.c.bf16 %v1629, %v1628
      %v1644 = vpack.c.bf16 %v1631, %v1630
      %v1645 = vpack.c.bf16 %v1633, %v1632
      %v1646 = vpack.c.bf16 %v1635, %v1634
      %v1647 = vpack.c.bf16 %v1637, %v1636
      %v1648 = vpack.c.bf16 %v1639, %v1638
      %v1649 = vpack.c.bf16 %v1641, %v1640
      %1650 = vmatprep.subr.bf16.mxu0 0
      %1651 = vmatpush1.bf16.msra.mxu0 %v818
      %1652 = vmatprep.subr.bf16.mxu0 0
      %1653 = vmatpush1.bf16.msra.mxu0 %v819
      %1654 = vmatprep.subr.bf16.mxu0 0
      %1655 = vmatpush1.bf16.msra.mxu0 %v820
      %1656 = vmatprep.subr.bf16.mxu0 0
      %1657 = vmatpush1.bf16.msra.mxu0 %v821
      %1658 = vmatprep.subr.bf16.mxu0 0
      %1659 = vmatpush1.bf16.msra.mxu0 %v822
      %1660 = vmatprep.subr.bf16.mxu0 0
      %1661 = vmatpush1.bf16.msra.mxu0 %v823
      %1662 = vmatprep.subr.bf16.mxu0 0
      %1663 = vmatpush1.bf16.msra.mxu0 %v824
      %1664 = vmatprep.subr.bf16.mxu0 0
      %1665 = vmatpush1.bf16.msra.mxu0 %v825
      %1666 = vmatprep.subr.bf16.mxu0 0
      %1667 = vmatpush1.bf16.msra.mxu0 0
      %1668 = vmatprep.subr.bf16.mxu0 0
      %1669 = vmatpush1.bf16.msra.mxu0 0
      %1670 = vmatprep.subr.bf16.mxu0 0
      %1671 = vmatpush1.bf16.msra.mxu0 0
      %1672 = vmatprep.subr.bf16.mxu0 0
      %1673 = vmatpush1.bf16.msra.mxu0 0
      %1674 = vmatprep.subr.bf16.mxu0 0
      %1675 = vmatpush1.bf16.msra.mxu0 0
      %1676 = vmatprep.subr.bf16.mxu0 0
      %1677 = vmatpush1.bf16.msra.mxu0 0
      %1678 = vmatprep.subr.bf16.mxu0 0
      %1679 = vmatpush1.bf16.msra.mxu0 0
      %1680 = vmatprep.subr.bf16.mxu0 0
      %1681 = vmatpush1.bf16.msra.mxu0 0
      %1682 = vmatprep.mubr.bf16.mxu0 0
      %1683 = vmatmul.mubr.bf16.gmra.mrb[0].mxu0 %v1642
      %v1684 = vpop.f32.mrb[0].mxu0
      %v1685 = vadd.f32 0.0, %v1684
      %v1686 = vpop.f32.mrb[0].mxu0
      %v1687 = vpop.f32.mrb[0].mxu0
      %v1688 = vadd.f32 0.0, %v1687
      %v1689 = vpop.f32.mrb[0].mxu0
      %1690 = vmatprep.mubr.bf16.mxu0 0
      %1691 = vmatmul.mubr.bf16.gmra.mrb[0].mxu0 %v1643
      %v1692 = vpop.f32.mrb[0].mxu0
      %v1693 = vadd.f32 0.0, %v1692
      %v1694 = vpop.f32.mrb[0].mxu0
      %v1695 = vpop.f32.mrb[0].mxu0
      %v1696 = vadd.f32 0.0, %v1695
      %v1697 = vpop.f32.mrb[0].mxu0
      %1698 = vmatprep.mubr.bf16.mxu0 0
      %1699 = vmatmul.mubr.bf16.gmra.mrb[0].mxu0 %v1644
      %v1700 = vpop.f32.mrb[0].mxu0
      %v1701 = vadd.f32 0.0, %v1700
      %v1702 = vpop.f32.mrb[0].mxu0
      %v1703 = vpop.f32.mrb[0].mxu0
      %v1704 = vadd.f32 0.0, %v1703
      %v1705 = vpop.f32.mrb[0].mxu0
      %1706 = vmatprep.mubr.bf16.mxu0 0
      %1707 = vmatmul.mubr.bf16.gmra.mrb[0].mxu0 %v1645
      %v1708 = vpop.f32.mrb[0].mxu0
      %v1709 = vadd.f32 0.0, %v1708
      %v1710 = vpop.f32.mrb[0].mxu0
      %v1711 = vpop.f32.mrb[0].mxu0
      %v1712 = vadd.f32 0.0, %v1711
      %v1713 = vpop.f32.mrb[0].mxu0
      %1714 = vmatprep.mubr.bf16.mxu0 0
      %1715 = vmatmul.mubr.bf16.gmra.mrb[0].mxu0 %v1646
      %v1716 = vpop.f32.mrb[0].mxu0
      %v1717 = vadd.f32 0.0, %v1716
      %v1718 = vpop.f32.mrb[0].mxu0
      %v1719 = vpop.f32.mrb[0].mxu0
      %v1720 = vadd.f32 0.0, %v1719
      %v1721 = vpop.f32.mrb[0].mxu0
      %1722 = vmatprep.mubr.bf16.mxu0 0
      %1723 = vmatmul.mubr.bf16.gmra.mrb[0].mxu0 %v1647
      %v1724 = vpop.f32.mrb[0].mxu0
      %v1725 = vadd.f32 0.0, %v1724
      %v1726 = vpop.f32.mrb[0].mxu0
      %v1727 = vpop.f32.mrb[0].mxu0
      %v1728 = vadd.f32 0.0, %v1727
      %v1729 = vpop.f32.mrb[0].mxu0
      %1730 = vmatprep.mubr.bf16.mxu0 0
      %1731 = vmatmul.mubr.bf16.gmra.mrb[0].mxu0 %v1648
      %v1732 = vpop.f32.mrb[0].mxu0
      %v1733 = vadd.f32 0.0, %v1732
      %v1734 = vpop.f32.mrb[0].mxu0
      %v1735 = vpop.f32.mrb[0].mxu0
      %v1736 = vadd.f32 0.0, %v1735
      %v1737 = vpop.f32.mrb[0].mxu0
      %1738 = vmatprep.mubr.bf16.mxu0 0
      %1739 = vmatmul.mubr.bf16.gmra.mrb[0].mxu0 %v1649
      %v1740 = vpop.f32.mrb[0].mxu0
      %v1741 = vadd.f32 0.0, %v1740
      %v1742 = vpop.f32.mrb[0].mxu0
      %v1743 = vpop.f32.mrb[0].mxu0
      %v1744 = vadd.f32 0.0, %v1743
      %v1745 = vpop.f32.mrb[0].mxu0
      %1746 = vdwg.mxu0
      %v1747 = vld [vmem:[%s5 + $0x1] sm:$0x1]
      %v1748 = vlaneseq
      %v1749 = vshrl.u32 %v1748, 7
      %v1750 = vsub.s32 0, %v1749
      %v1751 = vrot.slane %v1747, %v1750
      %v1752 = vmul.f32 %v1685, %v1751
      %v1753 = vmul.f32 %v1688, %v1751
      %v1754 = vmul.f32 %v1693, %v1751
      %v1755 = vmul.f32 %v1696, %v1751
      %v1756 = vmul.f32 %v1701, %v1751
      %v1757 = vmul.f32 %v1704, %v1751
      %v1758 = vmul.f32 %v1709, %v1751
      %v1759 = vmul.f32 %v1712, %v1751
      %v1760 = vmul.f32 %v1717, %v1751
      %v1761 = vmul.f32 %v1720, %v1751
      %v1762 = vmul.f32 %v1725, %v1751
      %v1763 = vmul.f32 %v1728, %v1751
      %v1764 = vmul.f32 %v1733, %v1751
      %v1765 = vmul.f32 %v1736, %v1751
      %v1766 = vmul.f32 %v1741, %v1751
      %v1767 = vmul.f32 %v1744, %v1751
      %v1768 = vadd.f32 %v1330, %v1752
      %v1769 = vadd.f32 %v1331, %v1753
      %v1770 = vadd.f32 %v1332, %v1754
      %v1771 = vadd.f32 %v1333, %v1755
      %v1772 = vadd.f32 %v1334, %v1756
      %v1773 = vadd.f32 %v1335, %v1757
      %v1774 = vadd.f32 %v1336, %v1758
      %v1775 = vadd.f32 %v1337, %v1759
      %v1776 = vadd.f32 %v1338, %v1760
      %v1777 = vadd.f32 %v1339, %v1761
      %v1778 = vadd.f32 %v1340, %v1762
      %v1779 = vadd.f32 %v1341, %v1763
      %v1780 = vadd.f32 %v1342, %v1764
      %v1781 = vadd.f32 %v1343, %v1765
      %v1782 = vadd.f32 %v1344, %v1766
      %v1783 = vadd.f32 %v1345, %v1767
      %v1784 = vld [vmem:[%s4] sm:$0x2]
      %v1786 = vpack.i.b16 %v1784, %v1784
      %v1788 = vlaneseq
      %v1789 = vshrl.u32 %v1788, 7
      %v1790 = vsub.s32 1, %v1789
      %v1791 = vrot.slane %v1786, %v1790
      %v1792 = vmul.bf16 %v802, %v1791
      %v1793 = vmul.bf16 %v803, %v1791
      %v1794 = vmul.bf16 %v804, %v1791
      %v1795 = vmul.bf16 %v805, %v1791
      %v1796 = vmul.bf16 %v806, %v1791
      %v1797 = vmul.bf16 %v807, %v1791
      %v1798 = vmul.bf16 %v808, %v1791
      %v1799 = vmul.bf16 %v809, %v1791
      %v1801 = vsel %vm842, %v1792, 0
      %v1804 = vsel %vm842, %v1793, 0
      %v1807 = vsel %vm842, %v1794, 0
      %v1810 = vsel %vm842, %v1795, 0
      %v1813 = vsel %vm842, %v1796, 0
      %v1816 = vsel %vm842, %v1797, 0
      %v1819 = vsel %vm842, %v1798, 0
      %v1822 = vsel %vm842, %v1799, 0
      %1824 = vmatprep.subr.bf16.mxu0 0
      %1825 = vmatpush1.bf16.xpose.msra.mxu0 %v924
      %1826 = vmatprep.subr.bf16.mxu0 0
      %1827 = vmatpush1.bf16.xpose.msra.mxu0 %v927
      %1828 = vmatprep.subr.bf16.mxu0 0
      %1829 = vmatpush1.bf16.xpose.msra.mxu0 %v930
      %1830 = vmatprep.subr.bf16.mxu0 0
      %1831 = vmatpush1.bf16.xpose.msra.mxu0 %v933
      %1832 = vmatprep.subr.bf16.mxu0 0
      %1833 = vmatpush1.bf16.xpose.msra.mxu0 %v936
      %1834 = vmatprep.subr.bf16.mxu0 0
      %1835 = vmatpush1.bf16.xpose.msra.mxu0 %v939
      %1836 = vmatprep.subr.bf16.mxu0 0
      %1837 = vmatpush1.bf16.xpose.msra.mxu0 %v942
      %1838 = vmatprep.subr.bf16.mxu0 0
      %1839 = vmatpush1.bf16.xpose.msra.mxu0 %v945
      %1840 = vmatprep.subr.bf16.mxu0 0
      %1841 = vmatpush1.bf16.xpose.msra.mxu0 0
      %1842 = vmatprep.subr.bf16.mxu0 0
      %1843 = vmatpush1.bf16.xpose.msra.mxu0 0
      %1844 = vmatprep.subr.bf16.mxu0 0
      %1845 = vmatpush1.bf16.xpose.msra.mxu0 0
      %1846 = vmatprep.subr.bf16.mxu0 0
      %1847 = vmatpush1.bf16.xpose.msra.mxu0 0
      %1848 = vmatprep.subr.bf16.mxu0 0
      %1849 = vmatpush1.bf16.xpose.msra.mxu0 0
      %1850 = vmatprep.subr.bf16.mxu0 0
      %1851 = vmatpush1.bf16.xpose.msra.mxu0 0
      %1852 = vmatprep.subr.bf16.mxu0 0
      %1853 = vmatpush1.bf16.xpose.msra.mxu0 0
      %1854 = vmatprep.subr.bf16.mxu0 0
      %1855 = vmatpush1.bf16.xpose.msra.mxu0 0
      %1856 = vmatprep.mubr.bf16.mxu0 0
      %1857 = vmatmul.mubr.bf16.gmra.mrb[0].mxu0 %v1801
      %v1858 = vpop.f32.mrb[0].mxu0
      %v1859 = vadd.f32 0.0, %v1858
      %v1860 = vpop.f32.mrb[0].mxu0
      %v1861 = vpop.f32.mrb[0].mxu0
      %v1862 = vadd.f32 0.0, %v1861
      %v1863 = vpop.f32.mrb[0].mxu0
      %1864 = vmatprep.mubr.bf16.mxu0 0
      %1865 = vmatmul.mubr.bf16.gmra.mrb[0].mxu0 %v1804
      %v1866 = vpop.f32.mrb[0].mxu0
      %v1867 = vadd.f32 0.0, %v1866
      %v1868 = vpop.f32.mrb[0].mxu0
      %v1869 = vpop.f32.mrb[0].mxu0
      %v1870 = vadd.f32 0.0, %v1869
      %v1871 = vpop.f32.mrb[0].mxu0
      %1872 = vmatprep.mubr.bf16.mxu0 0
      %1873 = vmatmul.mubr.bf16.gmra.mrb[0].mxu0 %v1807
      %v1874 = vpop.f32.mrb[0].mxu0
      %v1875 = vadd.f32 0.0, %v1874
      %v1876 = vpop.f32.mrb[0].mxu0
      %v1877 = vpop.f32.mrb[0].mxu0
      %v1878 = vadd.f32 0.0, %v1877
      %v1879 = vpop.f32.mrb[0].mxu0
      %1880 = vmatprep.mubr.bf16.mxu0 0
      %1881 = vmatmul.mubr.bf16.gmra.mrb[0].mxu0 %v1810
      %v1882 = vpop.f32.mrb[0].mxu0
      %v1883 = vadd.f32 0.0, %v1882
      %v1884 = vpop.f32.mrb[0].mxu0
      %v1885 = vpop.f32.mrb[0].mxu0
      %v1886 = vadd.f32 0.0, %v1885
      %v1887 = vpop.f32.mrb[0].mxu0
      %1888 = vmatprep.mubr.bf16.mxu0 0
      %1889 = vmatmul.mubr.bf16.gmra.mrb[0].mxu0 %v1813
      %v1890 = vpop.f32.mrb[0].mxu0
      %v1891 = vadd.f32 0.0, %v1890
      %v1892 = vpop.f32.mrb[0].mxu0
      %v1893 = vpop.f32.mrb[0].mxu0
      %v1894 = vadd.f32 0.0, %v1893
      %v1895 = vpop.f32.mrb[0].mxu0
      %1896 = vmatprep.mubr.bf16.mxu0 0
      %1897 = vmatmul.mubr.bf16.gmra.mrb[0].mxu0 %v1816
      %v1898 = vpop.f32.mrb[0].mxu0
      %v1899 = vadd.f32 0.0, %v1898
      %v1900 = vpop.f32.mrb[0].mxu0
      %v1901 = vpop.f32.mrb[0].mxu0
      %v1902 = vadd.f32 0.0, %v1901
      %v1903 = vpop.f32.mrb[0].mxu0
      %1904 = vmatprep.mubr.bf16.mxu0 0
      %1905 = vmatmul.mubr.bf16.gmra.mrb[0].mxu0 %v1819
      %v1906 = vpop.f32.mrb[0].mxu0
      %v1907 = vadd.f32 0.0, %v1906
      %v1908 = vpop.f32.mrb[0].mxu0
      %v1909 = vpop.f32.mrb[0].mxu0
      %v1910 = vadd.f32 0.0, %v1909
      %v1911 = vpop.f32.mrb[0].mxu0
      %1912 = vmatprep.mubr.bf16.mxu0 0
      %1913 = vmatmul.mubr.bf16.gmra.mrb[0].mxu0 %v1822
      %v1914 = vpop.f32.mrb[0].mxu0
      %v1915 = vadd.f32 0.0, %v1914
      %v1916 = vpop.f32.mrb[0].mxu0
      %v1917 = vpop.f32.mrb[0].mxu0
      %v1918 = vadd.f32 0.0, %v1917
      %v1919 = vpop.f32.mrb[0].mxu0
      %1920 = vdwg.mxu0
      %v1921 = vsel %vm882, %v1859, -1e+30
      %v1922 = vsel %vm882, %v1862, -1e+30
      %v1923 = vsel %vm882, %v1867, -1e+30
      %v1924 = vsel %vm882, %v1870, -1e+30
      %v1925 = vsel %vm882, %v1875, -1e+30
      %v1926 = vsel %vm882, %v1878, -1e+30
      %v1927 = vsel %vm882, %v1883, -1e+30
      %v1928 = vsel %vm882, %v1886, -1e+30
      %v1929 = vsel %vm882, %v1891, -1e+30
      %v1930 = vsel %vm882, %v1894, -1e+30
      %v1931 = vsel %vm882, %v1899, -1e+30
      %v1932 = vsel %vm882, %v1902, -1e+30
      %v1933 = vsel %vm882, %v1907, -1e+30
      %v1934 = vsel %vm882, %v1910, -1e+30
      %v1935 = vsel %vm882, %v1915, -1e+30
      %v1936 = vsel %vm882, %v1918, -1e+30
      %1937 = vmax.xlane.f32.xlu0 %v1921
      %v1938 = vpop.xlane.xlu0 %1937
      %1939 = vmax.xlane.f32.xlu0 %v1922
      %v1940 = vpop.xlane.xlu0 %1939
      %1941 = vmax.xlane.f32.xlu0 %v1923
      %v1942 = vpop.xlane.xlu0 %1941
      %1943 = vmax.xlane.f32.xlu0 %v1924
      %v1944 = vpop.xlane.xlu0 %1943
      %1945 = vmax.xlane.f32.xlu0 %v1925
      %v1946 = vpop.xlane.xlu0 %1945
      %1947 = vmax.xlane.f32.xlu0 %v1926
      %v1948 = vpop.xlane.xlu0 %1947
      %1949 = vmax.xlane.f32.xlu0 %v1927
      %v1950 = vpop.xlane.xlu0 %1949
      %1951 = vmax.xlane.f32.xlu0 %v1928
      %v1952 = vpop.xlane.xlu0 %1951
      %1953 = vmax.xlane.f32.xlu0 %v1929
      %v1954 = vpop.xlane.xlu0 %1953
      %1955 = vmax.xlane.f32.xlu0 %v1930
      %v1956 = vpop.xlane.xlu0 %1955
      %1957 = vmax.xlane.f32.xlu0 %v1931
      %v1958 = vpop.xlane.xlu0 %1957
      %1959 = vmax.xlane.f32.xlu0 %v1932
      %v1960 = vpop.xlane.xlu0 %1959
      %1961 = vmax.xlane.f32.xlu0 %v1933
      %v1962 = vpop.xlane.xlu0 %1961
      %1963 = vmax.xlane.f32.xlu0 %v1934
      %v1964 = vpop.xlane.xlu0 %1963
      %1965 = vmax.xlane.f32.xlu0 %v1935
      %v1966 = vpop.xlane.xlu0 %1965
      %1967 = vmax.xlane.f32.xlu0 %v1936
      %v1968 = vpop.xlane.xlu0 %1967
      %v1969 = vsub.f32 %v1921, %v1938
      %v1970 = vsub.f32 %v1922, %v1940
      %v1971 = vsub.f32 %v1923, %v1942
      %v1972 = vsub.f32 %v1924, %v1944
      %v1973 = vsub.f32 %v1925, %v1946
      %v1974 = vsub.f32 %v1926, %v1948
      %v1975 = vsub.f32 %v1927, %v1950
      %v1976 = vsub.f32 %v1928, %v1952
      %v1977 = vsub.f32 %v1929, %v1954
      %v1978 = vsub.f32 %v1930, %v1956
      %v1979 = vsub.f32 %v1931, %v1958
      %v1980 = vsub.f32 %v1932, %v1960
      %v1981 = vsub.f32 %v1933, %v1962
      %v1982 = vsub.f32 %v1934, %v1964
      %v1983 = vsub.f32 %v1935, %v1966
      %v1984 = vsub.f32 %v1936, %v1968
      %v1985 = vmul.f32 %v1969, 1.442695
      %v1986 = vpow.pop %v1985
      %v1987 = vmul.f32 %v1970, 1.442695
      %v1988 = vpow.pop %v1987
      %v1989 = vmul.f32 %v1971, 1.442695
      %v1990 = vpow.pop %v1989
      %v1991 = vmul.f32 %v1972, 1.442695
      %v1992 = vpow.pop %v1991
      %v1993 = vmul.f32 %v1973, 1.442695
      %v1994 = vpow.pop %v1993
      %v1995 = vmul.f32 %v1974, 1.442695
      %v1996 = vpow.pop %v1995
      %v1997 = vmul.f32 %v1975, 1.442695
      %v1998 = vpow.pop %v1997
      %v1999 = vmul.f32 %v1976, 1.442695
      %v2000 = vpow.pop %v1999
      %v2001 = vmul.f32 %v1977, 1.442695
      %v2002 = vpow.pop %v2001
      %v2003 = vmul.f32 %v1978, 1.442695
      %v2004 = vpow.pop %v2003
      %v2005 = vmul.f32 %v1979, 1.442695
      %v2006 = vpow.pop %v2005
      %v2007 = vmul.f32 %v1980, 1.442695
      %v2008 = vpow.pop %v2007
      %v2009 = vmul.f32 %v1981, 1.442695
      %v2010 = vpow.pop %v2009
      %v2011 = vmul.f32 %v1982, 1.442695
      %v2012 = vpow.pop %v2011
      %v2013 = vmul.f32 %v1983, 1.442695
      %v2014 = vpow.pop %v2013
      %v2015 = vmul.f32 %v1984, 1.442695
      %v2016 = vpow.pop %v2015
      %2017 = vadd.xlane.f32.xlu0 %v1986
      %v2018 = vpop.xlane.xlu0 %2017
      %2019 = vadd.xlane.f32.xlu0 %v1988
      %v2020 = vpop.xlane.xlu0 %2019
      %2021 = vadd.xlane.f32.xlu0 %v1990
      %v2022 = vpop.xlane.xlu0 %2021
      %2023 = vadd.xlane.f32.xlu0 %v1992
      %v2024 = vpop.xlane.xlu0 %2023
      %2025 = vadd.xlane.f32.xlu0 %v1994
      %v2026 = vpop.xlane.xlu0 %2025
      %2027 = vadd.xlane.f32.xlu0 %v1996
      %v2028 = vpop.xlane.xlu0 %2027
      %2029 = vadd.xlane.f32.xlu0 %v1998
      %v2030 = vpop.xlane.xlu0 %2029
      %2031 = vadd.xlane.f32.xlu0 %v2000
      %v2032 = vpop.xlane.xlu0 %2031
      %2033 = vadd.xlane.f32.xlu0 %v2002
      %v2034 = vpop.xlane.xlu0 %2033
      %2035 = vadd.xlane.f32.xlu0 %v2004
      %v2036 = vpop.xlane.xlu0 %2035
      %2037 = vadd.xlane.f32.xlu0 %v2006
      %v2038 = vpop.xlane.xlu0 %2037
      %2039 = vadd.xlane.f32.xlu0 %v2008
      %v2040 = vpop.xlane.xlu0 %2039
      %2041 = vadd.xlane.f32.xlu0 %v2010
      %v2042 = vpop.xlane.xlu0 %2041
      %2043 = vadd.xlane.f32.xlu0 %v2012
      %v2044 = vpop.xlane.xlu0 %2043
      %2045 = vadd.xlane.f32.xlu0 %v2014
      %v2046 = vpop.xlane.xlu0 %2045
      %2047 = vadd.xlane.f32.xlu0 %v2016
      %v2048 = vpop.xlane.xlu0 %2047
      %v2049 = vrcp.pop %v2018
      %v2050 = vrcp.pop %v2020
      %v2051 = vrcp.pop %v2022
      %v2052 = vrcp.pop %v2024
      %v2053 = vrcp.pop %v2026
      %v2054 = vrcp.pop %v2028
      %v2055 = vrcp.pop %v2030
      %v2056 = vrcp.pop %v2032
      %v2057 = vrcp.pop %v2034
      %v2058 = vrcp.pop %v2036
      %v2059 = vrcp.pop %v2038
      %v2060 = vrcp.pop %v2040
      %v2061 = vrcp.pop %v2042
      %v2062 = vrcp.pop %v2044
      %v2063 = vrcp.pop %v2046
      %v2064 = vrcp.pop %v2048
      %v2065 = vmul.f32 %v1986, %v2049
      %v2066 = vmul.f32 %v1988, %v2050
      %v2067 = vmul.f32 %v1990, %v2051
      %v2068 = vmul.f32 %v1992, %v2052
      %v2069 = vmul.f32 %v1994, %v2053
      %v2070 = vmul.f32 %v1996, %v2054
      %v2071 = vmul.f32 %v1998, %v2055
      %v2072 = vmul.f32 %v2000, %v2056
      %v2073 = vmul.f32 %v2002, %v2057
      %v2074 = vmul.f32 %v2004, %v2058
      %v2075 = vmul.f32 %v2006, %v2059
      %v2076 = vmul.f32 %v2008, %v2060
      %v2077 = vmul.f32 %v2010, %v2061
      %v2078 = vmul.f32 %v2012, %v2062
      %v2079 = vmul.f32 %v2014, %v2063
      %v2080 = vmul.f32 %v2016, %v2064
      %v2081 = vpack.c.bf16 %v2066, %v2065
      %v2082 = vpack.c.bf16 %v2068, %v2067
      %v2083 = vpack.c.bf16 %v2070, %v2069
      %v2084 = vpack.c.bf16 %v2072, %v2071
      %v2085 = vpack.c.bf16 %v2074, %v2073
      %v2086 = vpack.c.bf16 %v2076, %v2075
      %v2087 = vpack.c.bf16 %v2078, %v2077
      %v2088 = vpack.c.bf16 %v2080, %v2079
      %2089 = vmatprep.subr.bf16.mxu0 0
      %2090 = vmatpush1.bf16.msra.mxu0 %v818
      %2091 = vmatprep.subr.bf16.mxu0 0
      %2092 = vmatpush1.bf16.msra.mxu0 %v819
      %2093 = vmatprep.subr.bf16.mxu0 0
      %2094 = vmatpush1.bf16.msra.mxu0 %v820
      %2095 = vmatprep.subr.bf16.mxu0 0
      %2096 = vmatpush1.bf16.msra.mxu0 %v821
      %2097 = vmatprep.subr.bf16.mxu0 0
      %2098 = vmatpush1.bf16.msra.mxu0 %v822
      %2099 = vmatprep.subr.bf16.mxu0 0
      %2100 = vmatpush1.bf16.msra.mxu0 %v823
      %2101 = vmatprep.subr.bf16.mxu0 0
      %2102 = vmatpush1.bf16.msra.mxu0 %v824
      %2103 = vmatprep.subr.bf16.mxu0 0
      %2104 = vmatpush1.bf16.msra.mxu0 %v825
      %2105 = vmatprep.subr.bf16.mxu0 0
      %2106 = vmatpush1.bf16.msra.mxu0 0
      %2107 = vmatprep.subr.bf16.mxu0 0
      %2108 = vmatpush1.bf16.msra.mxu0 0
      %2109 = vmatprep.subr.bf16.mxu0 0
      %2110 = vmatpush1.bf16.msra.mxu0 0
      %2111 = vmatprep.subr.bf16.mxu0 0
      %2112 = vmatpush1.bf16.msra.mxu0 0
      %2113 = vmatprep.subr.bf16.mxu0 0
      %2114 = vmatpush1.bf16.msra.mxu0 0
      %2115 = vmatprep.subr.bf16.mxu0 0
      %2116 = vmatpush1.bf16.msra.mxu0 0
      %2117 = vmatprep.subr.bf16.mxu0 0
      %2118 = vmatpush1.bf16.msra.mxu0 0
      %2119 = vmatprep.subr.bf16.mxu0 0
      %2120 = vmatpush1.bf16.msra.mxu0 0
      %2121 = vmatprep.mubr.bf16.mxu0 0
      %2122 = vmatmul.mubr.bf16.gmra.mrb[0].mxu0 %v2081
      %v2123 = vpop.f32.mrb[0].mxu0
      %v2124 = vadd.f32 0.0, %v2123
      %v2125 = vpop.f32.mrb[0].mxu0
      %v2126 = vpop.f32.mrb[0].mxu0
      %v2127 = vadd.f32 0.0, %v2126
      %v2128 = vpop.f32.mrb[0].mxu0
      %2129 = vmatprep.mubr.bf16.mxu0 0
      %2130 = vmatmul.mubr.bf16.gmra.mrb[0].mxu0 %v2082
      %v2131 = vpop.f32.mrb[0].mxu0
      %v2132 = vadd.f32 0.0, %v2131
      %v2133 = vpop.f32.mrb[0].mxu0
      %v2134 = vpop.f32.mrb[0].mxu0
      %v2135 = vadd.f32 0.0, %v2134
      %v2136 = vpop.f32.mrb[0].mxu0
      %2137 = vmatprep.mubr.bf16.mxu0 0
      %2138 = vmatmul.mubr.bf16.gmra.mrb[0].mxu0 %v2083
      %v2139 = vpop.f32.mrb[0].mxu0
      %v2140 = vadd.f32 0.0, %v2139
      %v2141 = vpop.f32.mrb[0].mxu0
      %v2142 = vpop.f32.mrb[0].mxu0
      %v2143 = vadd.f32 0.0, %v2142
      %v2144 = vpop.f32.mrb[0].mxu0
      %2145 = vmatprep.mubr.bf16.mxu0 0
      %2146 = vmatmul.mubr.bf16.gmra.mrb[0].mxu0 %v2084
      %v2147 = vpop.f32.mrb[0].mxu0
      %v2148 = vadd.f32 0.0, %v2147
      %v2149 = vpop.f32.mrb[0].mxu0
      %v2150 = vpop.f32.mrb[0].mxu0
      %v2151 = vadd.f32 0.0, %v2150
      %v2152 = vpop.f32.mrb[0].mxu0
      %2153 = vmatprep.mubr.bf16.mxu0 0
      %2154 = vmatmul.mubr.bf16.gmra.mrb[0].mxu0 %v2085
      %v2155 = vpop.f32.mrb[0].mxu0
      %v2156 = vadd.f32 0.0, %v2155
      %v2157 = vpop.f32.mrb[0].mxu0
      %v2158 = vpop.f32.mrb[0].mxu0
      %v2159 = vadd.f32 0.0, %v2158
      %v2160 = vpop.f32.mrb[0].mxu0
      %2161 = vmatprep.mubr.bf16.mxu0 0
      %2162 = vmatmul.mubr.bf16.gmra.mrb[0].mxu0 %v2086
      %v2163 = vpop.f32.mrb[0].mxu0
      %v2164 = vadd.f32 0.0, %v2163
      %v2165 = vpop.f32.mrb[0].mxu0
      %v2166 = vpop.f32.mrb[0].mxu0
      %v2167 = vadd.f32 0.0, %v2166
      %v2168 = vpop.f32.mrb[0].mxu0
      %2169 = vmatprep.mubr.bf16.mxu0 0
      %2170 = vmatmul.mubr.bf16.gmra.mrb[0].mxu0 %v2087
      %v2171 = vpop.f32.mrb[0].mxu0
      %v2172 = vadd.f32 0.0, %v2171
      %v2173 = vpop.f32.mrb[0].mxu0
      %v2174 = vpop.f32.mrb[0].mxu0
      %v2175 = vadd.f32 0.0, %v2174
      %v2176 = vpop.f32.mrb[0].mxu0
      %2177 = vmatprep.mubr.bf16.mxu0 0
      %2178 = vmatmul.mubr.bf16.gmra.mrb[0].mxu0 %v2088
      %v2179 = vpop.f32.mrb[0].mxu0
      %v2180 = vadd.f32 0.0, %v2179
      %v2181 = vpop.f32.mrb[0].mxu0
      %v2182 = vpop.f32.mrb[0].mxu0
      %v2183 = vadd.f32 0.0, %v2182
      %v2184 = vpop.f32.mrb[0].mxu0
      %2185 = vdwg.mxu0
      %v2186 = vld [vmem:[%s5 + $0x2] sm:$0x1]
      %v2187 = vlaneseq
      %v2188 = vshrl.u32 %v2187, 7
      %v2189 = vsub.s32 0, %v2188
      %v2190 = vrot.slane %v2186, %v2189
      %v2191 = vmul.f32 %v2124, %v2190
      %v2192 = vmul.f32 %v2127, %v2190
      %v2193 = vmul.f32 %v2132, %v2190
      %v2194 = vmul.f32 %v2135, %v2190
      %v2195 = vmul.f32 %v2140, %v2190
      %v2196 = vmul.f32 %v2143, %v2190
      %v2197 = vmul.f32 %v2148, %v2190
      %v2198 = vmul.f32 %v2151, %v2190
      %v2199 = vmul.f32 %v2156, %v2190
      %v2200 = vmul.f32 %v2159, %v2190
      %v2201 = vmul.f32 %v2164, %v2190
      %v2202 = vmul.f32 %v2167, %v2190
      %v2203 = vmul.f32 %v2172, %v2190
      %v2204 = vmul.f32 %v2175, %v2190
      %v2205 = vmul.f32 %v2180, %v2190
      %v2206 = vmul.f32 %v2183, %v2190
      %v2207 = vadd.f32 %v1768, %v2191
      %v2208 = vadd.f32 %v1769, %v2192
      %v2209 = vadd.f32 %v1770, %v2193
      %v2210 = vadd.f32 %v1771, %v2194
      %v2211 = vadd.f32 %v1772, %v2195
      %v2212 = vadd.f32 %v1773, %v2196
      %v2213 = vadd.f32 %v1774, %v2197
      %v2214 = vadd.f32 %v1775, %v2198
      %v2215 = vadd.f32 %v1776, %v2199
      %v2216 = vadd.f32 %v1777, %v2200
      %v2217 = vadd.f32 %v1778, %v2201
      %v2218 = vadd.f32 %v1779, %v2202
      %v2219 = vadd.f32 %v1780, %v2203
      %v2220 = vadd.f32 %v1781, %v2204
      %v2221 = vadd.f32 %v1782, %v2205
      %v2222 = vadd.f32 %v1783, %v2206
      %v2223 = vshrl.u32 %v1784, 16
      %v2224 = vpack.i.b16 %v2223, %v2223
      %v2226 = vlaneseq
      %v2227 = vshrl.u32 %v2226, 7
      %v2228 = vsub.s32 1, %v2227
      %v2229 = vrot.slane %v2224, %v2228
      %v2230 = vmul.bf16 %v802, %v2229
      %v2231 = vmul.bf16 %v803, %v2229
      %v2232 = vmul.bf16 %v804, %v2229
      %v2233 = vmul.bf16 %v805, %v2229
      %v2234 = vmul.bf16 %v806, %v2229
      %v2235 = vmul.bf16 %v807, %v2229
      %v2236 = vmul.bf16 %v808, %v2229
      %v2237 = vmul.bf16 %v809, %v2229
      %v2239 = vsel %vm842, %v2230, 0
      %v2242 = vsel %vm842, %v2231, 0
      %v2245 = vsel %vm842, %v2232, 0
      %v2248 = vsel %vm842, %v2233, 0
      %v2251 = vsel %vm842, %v2234, 0
      %v2254 = vsel %vm842, %v2235, 0
      %v2257 = vsel %vm842, %v2236, 0
      %v2260 = vsel %vm842, %v2237, 0
      %2262 = vmatprep.subr.bf16.mxu0 0
      %2263 = vmatpush1.bf16.xpose.msra.mxu0 %v924
      %2264 = vmatprep.subr.bf16.mxu0 0
      %2265 = vmatpush1.bf16.xpose.msra.mxu0 %v927
      %2266 = vmatprep.subr.bf16.mxu0 0
      %2267 = vmatpush1.bf16.xpose.msra.mxu0 %v930
      %2268 = vmatprep.subr.bf16.mxu0 0
      %2269 = vmatpush1.bf16.xpose.msra.mxu0 %v933
      %2270 = vmatprep.subr.bf16.mxu0 0
      %2271 = vmatpush1.bf16.xpose.msra.mxu0 %v936
      %2272 = vmatprep.subr.bf16.mxu0 0
      %2273 = vmatpush1.bf16.xpose.msra.mxu0 %v939
      %2274 = vmatprep.subr.bf16.mxu0 0
      %2275 = vmatpush1.bf16.xpose.msra.mxu0 %v942
      %2276 = vmatprep.subr.bf16.mxu0 0
      %2277 = vmatpush1.bf16.xpose.msra.mxu0 %v945
      %2278 = vmatprep.subr.bf16.mxu0 0
      %2279 = vmatpush1.bf16.xpose.msra.mxu0 0
      %2280 = vmatprep.subr.bf16.mxu0 0
      %2281 = vmatpush1.bf16.xpose.msra.mxu0 0
      %2282 = vmatprep.subr.bf16.mxu0 0
      %2283 = vmatpush1.bf16.xpose.msra.mxu0 0
      %2284 = vmatprep.subr.bf16.mxu0 0
      %2285 = vmatpush1.bf16.xpose.msra.mxu0 0
      %2286 = vmatprep.subr.bf16.mxu0 0
      %2287 = vmatpush1.bf16.xpose.msra.mxu0 0
      %2288 = vmatprep.subr.bf16.mxu0 0
      %2289 = vmatpush1.bf16.xpose.msra.mxu0 0
      %2290 = vmatprep.subr.bf16.mxu0 0
      %2291 = vmatpush1.bf16.xpose.msra.mxu0 0
      %2292 = vmatprep.subr.bf16.mxu0 0
      %2293 = vmatpush1.bf16.xpose.msra.mxu0 0
      %2294 = vmatprep.mubr.bf16.mxu0 0
      %2295 = vmatmul.mubr.bf16.gmra.mrb[0].mxu0 %v2239
      %v2296 = vpop.f32.mrb[0].mxu0
      %v2297 = vadd.f32 0.0, %v2296
      %v2298 = vpop.f32.mrb[0].mxu0
      %v2299 = vpop.f32.mrb[0].mxu0
      %v2300 = vadd.f32 0.0, %v2299
      %v2301 = vpop.f32.mrb[0].mxu0
      %2302 = vmatprep.mubr.bf16.mxu0 0
      %2303 = vmatmul.mubr.bf16.gmra.mrb[0].mxu0 %v2242
      %v2304 = vpop.f32.mrb[0].mxu0
      %v2305 = vadd.f32 0.0, %v2304
      %v2306 = vpop.f32.mrb[0].mxu0
      %v2307 = vpop.f32.mrb[0].mxu0
      %v2308 = vadd.f32 0.0, %v2307
      %v2309 = vpop.f32.mrb[0].mxu0
      %2310 = vmatprep.mubr.bf16.mxu0 0
      %2311 = vmatmul.mubr.bf16.gmra.mrb[0].mxu0 %v2245
      %v2312 = vpop.f32.mrb[0].mxu0
      %v2313 = vadd.f32 0.0, %v2312
      %v2314 = vpop.f32.mrb[0].mxu0
      %v2315 = vpop.f32.mrb[0].mxu0
      %v2316 = vadd.f32 0.0, %v2315
      %v2317 = vpop.f32.mrb[0].mxu0
      %2318 = vmatprep.mubr.bf16.mxu0 0
      %2319 = vmatmul.mubr.bf16.gmra.mrb[0].mxu0 %v2248
      %v2320 = vpop.f32.mrb[0].mxu0
      %v2321 = vadd.f32 0.0, %v2320
      %v2322 = vpop.f32.mrb[0].mxu0
      %v2323 = vpop.f32.mrb[0].mxu0
      %v2324 = vadd.f32 0.0, %v2323
      %v2325 = vpop.f32.mrb[0].mxu0
      %2326 = vmatprep.mubr.bf16.mxu0 0
      %2327 = vmatmul.mubr.bf16.gmra.mrb[0].mxu0 %v2251
      %v2328 = vpop.f32.mrb[0].mxu0
      %v2329 = vadd.f32 0.0, %v2328
      %v2330 = vpop.f32.mrb[0].mxu0
      %v2331 = vpop.f32.mrb[0].mxu0
      %v2332 = vadd.f32 0.0, %v2331
      %v2333 = vpop.f32.mrb[0].mxu0
      %2334 = vmatprep.mubr.bf16.mxu0 0
      %2335 = vmatmul.mubr.bf16.gmra.mrb[0].mxu0 %v2254
      %v2336 = vpop.f32.mrb[0].mxu0
      %v2337 = vadd.f32 0.0, %v2336
      %v2338 = vpop.f32.mrb[0].mxu0
      %v2339 = vpop.f32.mrb[0].mxu0
      %v2340 = vadd.f32 0.0, %v2339
      %v2341 = vpop.f32.mrb[0].mxu0
      %2342 = vmatprep.mubr.bf16.mxu0 0
      %2343 = vmatmul.mubr.bf16.gmra.mrb[0].mxu0 %v2257
      %v2344 = vpop.f32.mrb[0].mxu0
      %v2345 = vadd.f32 0.0, %v2344
      %v2346 = vpop.f32.mrb[0].mxu0
      %v2347 = vpop.f32.mrb[0].mxu0
      %v2348 = vadd.f32 0.0, %v2347
      %v2349 = vpop.f32.mrb[0].mxu0
      %2350 = vmatprep.mubr.bf16.mxu0 0
      %2351 = vmatmul.mubr.bf16.gmra.mrb[0].mxu0 %v2260
      %v2352 = vpop.f32.mrb[0].mxu0
      %v2353 = vadd.f32 0.0, %v2352
      %v2354 = vpop.f32.mrb[0].mxu0
      %v2355 = vpop.f32.mrb[0].mxu0
      %v2356 = vadd.f32 0.0, %v2355
      %v2357 = vpop.f32.mrb[0].mxu0
      %2358 = vdwg.mxu0
      %v2359 = vsel %vm882, %v2297, -1e+30
      %v2360 = vsel %vm882, %v2300, -1e+30
      %v2361 = vsel %vm882, %v2305, -1e+30
      %v2362 = vsel %vm882, %v2308, -1e+30
      %v2363 = vsel %vm882, %v2313, -1e+30
      %v2364 = vsel %vm882, %v2316, -1e+30
      %v2365 = vsel %vm882, %v2321, -1e+30
      %v2366 = vsel %vm882, %v2324, -1e+30
      %v2367 = vsel %vm882, %v2329, -1e+30
      %v2368 = vsel %vm882, %v2332, -1e+30
      %v2369 = vsel %vm882, %v2337, -1e+30
      %v2370 = vsel %vm882, %v2340, -1e+30
      %v2371 = vsel %vm882, %v2345, -1e+30
      %v2372 = vsel %vm882, %v2348, -1e+30
      %v2373 = vsel %vm882, %v2353, -1e+30
      %v2374 = vsel %vm882, %v2356, -1e+30
      %2375 = vmax.xlane.f32.xlu0 %v2359
      %v2376 = vpop.xlane.xlu0 %2375
      %2377 = vmax.xlane.f32.xlu0 %v2360
      %v2378 = vpop.xlane.xlu0 %2377
      %2379 = vmax.xlane.f32.xlu0 %v2361
      %v2380 = vpop.xlane.xlu0 %2379
      %2381 = vmax.xlane.f32.xlu0 %v2362
      %v2382 = vpop.xlane.xlu0 %2381
      %2383 = vmax.xlane.f32.xlu0 %v2363
      %v2384 = vpop.xlane.xlu0 %2383
      %2385 = vmax.xlane.f32.xlu0 %v2364
      %v2386 = vpop.xlane.xlu0 %2385
      %2387 = vmax.xlane.f32.xlu0 %v2365
      %v2388 = vpop.xlane.xlu0 %2387
      %2389 = vmax.xlane.f32.xlu0 %v2366
      %v2390 = vpop.xlane.xlu0 %2389
      %2391 = vmax.xlane.f32.xlu0 %v2367
      %v2392 = vpop.xlane.xlu0 %2391
      %2393 = vmax.xlane.f32.xlu0 %v2368
      %v2394 = vpop.xlane.xlu0 %2393
      %2395 = vmax.xlane.f32.xlu0 %v2369
      %v2396 = vpop.xlane.xlu0 %2395
      %2397 = vmax.xlane.f32.xlu0 %v2370
      %v2398 = vpop.xlane.xlu0 %2397
      %2399 = vmax.xlane.f32.xlu0 %v2371
      %v2400 = vpop.xlane.xlu0 %2399
      %2401 = vmax.xlane.f32.xlu0 %v2372
      %v2402 = vpop.xlane.xlu0 %2401
      %2403 = vmax.xlane.f32.xlu0 %v2373
      %v2404 = vpop.xlane.xlu0 %2403
      %2405 = vmax.xlane.f32.xlu0 %v2374
      %v2406 = vpop.xlane.xlu0 %2405
      %v2407 = vsub.f32 %v2359, %v2376
      %v2408 = vsub.f32 %v2360, %v2378
      %v2409 = vsub.f32 %v2361, %v2380
      %v2410 = vsub.f32 %v2362, %v2382
      %v2411 = vsub.f32 %v2363, %v2384
      %v2412 = vsub.f32 %v2364, %v2386
      %v2413 = vsub.f32 %v2365, %v2388
      %v2414 = vsub.f32 %v2366, %v2390
      %v2415 = vsub.f32 %v2367, %v2392
      %v2416 = vsub.f32 %v2368, %v2394
      %v2417 = vsub.f32 %v2369, %v2396
      %v2418 = vsub.f32 %v2370, %v2398
      %v2419 = vsub.f32 %v2371, %v2400
      %v2420 = vsub.f32 %v2372, %v2402
      %v2421 = vsub.f32 %v2373, %v2404
      %v2422 = vsub.f32 %v2374, %v2406
      %v2423 = vmul.f32 %v2407, 1.442695
      %v2424 = vpow.pop %v2423
      %v2425 = vmul.f32 %v2408, 1.442695
      %v2426 = vpow.pop %v2425
      %v2427 = vmul.f32 %v2409, 1.442695
      %v2428 = vpow.pop %v2427
      %v2429 = vmul.f32 %v2410, 1.442695
      %v2430 = vpow.pop %v2429
      %v2431 = vmul.f32 %v2411, 1.442695
      %v2432 = vpow.pop %v2431
      %v2433 = vmul.f32 %v2412, 1.442695
      %v2434 = vpow.pop %v2433
      %v2435 = vmul.f32 %v2413, 1.442695
      %v2436 = vpow.pop %v2435
      %v2437 = vmul.f32 %v2414, 1.442695
      %v2438 = vpow.pop %v2437
      %v2439 = vmul.f32 %v2415, 1.442695
      %v2440 = vpow.pop %v2439
      %v2441 = vmul.f32 %v2416, 1.442695
      %v2442 = vpow.pop %v2441
      %v2443 = vmul.f32 %v2417, 1.442695
      %v2444 = vpow.pop %v2443
      %v2445 = vmul.f32 %v2418, 1.442695
      %v2446 = vpow.pop %v2445
      %v2447 = vmul.f32 %v2419, 1.442695
      %v2448 = vpow.pop %v2447
      %v2449 = vmul.f32 %v2420, 1.442695
      %v2450 = vpow.pop %v2449
      %v2451 = vmul.f32 %v2421, 1.442695
      %v2452 = vpow.pop %v2451
      %v2453 = vmul.f32 %v2422, 1.442695
      %v2454 = vpow.pop %v2453
      %2455 = vadd.xlane.f32.xlu0 %v2424
      %v2456 = vpop.xlane.xlu0 %2455
      %2457 = vadd.xlane.f32.xlu0 %v2426
      %v2458 = vpop.xlane.xlu0 %2457
      %2459 = vadd.xlane.f32.xlu0 %v2428
      %v2460 = vpop.xlane.xlu0 %2459
      %2461 = vadd.xlane.f32.xlu0 %v2430
      %v2462 = vpop.xlane.xlu0 %2461
      %2463 = vadd.xlane.f32.xlu0 %v2432
      %v2464 = vpop.xlane.xlu0 %2463
      %2465 = vadd.xlane.f32.xlu0 %v2434
      %v2466 = vpop.xlane.xlu0 %2465
      %2467 = vadd.xlane.f32.xlu0 %v2436
      %v2468 = vpop.xlane.xlu0 %2467
      %2469 = vadd.xlane.f32.xlu0 %v2438
      %v2470 = vpop.xlane.xlu0 %2469
      %2471 = vadd.xlane.f32.xlu0 %v2440
      %v2472 = vpop.xlane.xlu0 %2471
      %2473 = vadd.xlane.f32.xlu0 %v2442
      %v2474 = vpop.xlane.xlu0 %2473
      %2475 = vadd.xlane.f32.xlu0 %v2444
      %v2476 = vpop.xlane.xlu0 %2475
      %2477 = vadd.xlane.f32.xlu0 %v2446
      %v2478 = vpop.xlane.xlu0 %2477
      %2479 = vadd.xlane.f32.xlu0 %v2448
      %v2480 = vpop.xlane.xlu0 %2479
      %2481 = vadd.xlane.f32.xlu0 %v2450
      %v2482 = vpop.xlane.xlu0 %2481
      %2483 = vadd.xlane.f32.xlu0 %v2452
      %v2484 = vpop.xlane.xlu0 %2483
      %2485 = vadd.xlane.f32.xlu0 %v2454
      %v2486 = vpop.xlane.xlu0 %2485
      %v2487 = vrcp.pop %v2456
      %v2488 = vrcp.pop %v2458
      %v2489 = vrcp.pop %v2460
      %v2490 = vrcp.pop %v2462
      %v2491 = vrcp.pop %v2464
      %v2492 = vrcp.pop %v2466
      %v2493 = vrcp.pop %v2468
      %v2494 = vrcp.pop %v2470
      %v2495 = vrcp.pop %v2472
      %v2496 = vrcp.pop %v2474
      %v2497 = vrcp.pop %v2476
      %v2498 = vrcp.pop %v2478
      %v2499 = vrcp.pop %v2480
      %v2500 = vrcp.pop %v2482
      %v2501 = vrcp.pop %v2484
      %v2502 = vrcp.pop %v2486
      %v2503 = vmul.f32 %v2424, %v2487
      %v2504 = vmul.f32 %v2426, %v2488
      %v2505 = vmul.f32 %v2428, %v2489
      %v2506 = vmul.f32 %v2430, %v2490
      %v2507 = vmul.f32 %v2432, %v2491
      %v2508 = vmul.f32 %v2434, %v2492
      %v2509 = vmul.f32 %v2436, %v2493
      %v2510 = vmul.f32 %v2438, %v2494
      %v2511 = vmul.f32 %v2440, %v2495
      %v2512 = vmul.f32 %v2442, %v2496
      %v2513 = vmul.f32 %v2444, %v2497
      %v2514 = vmul.f32 %v2446, %v2498
      %v2515 = vmul.f32 %v2448, %v2499
      %v2516 = vmul.f32 %v2450, %v2500
      %v2517 = vmul.f32 %v2452, %v2501
      %v2518 = vmul.f32 %v2454, %v2502
      %v2519 = vpack.c.bf16 %v2504, %v2503
      %v2520 = vpack.c.bf16 %v2506, %v2505
      %v2521 = vpack.c.bf16 %v2508, %v2507
      %v2522 = vpack.c.bf16 %v2510, %v2509
      %v2523 = vpack.c.bf16 %v2512, %v2511
      %v2524 = vpack.c.bf16 %v2514, %v2513
      %v2525 = vpack.c.bf16 %v2516, %v2515
      %v2526 = vpack.c.bf16 %v2518, %v2517
      %2527 = vmatprep.subr.bf16.mxu0 0
      %2528 = vmatpush1.bf16.msra.mxu0 %v818
      %2529 = vmatprep.subr.bf16.mxu0 0
      %2530 = vmatpush1.bf16.msra.mxu0 %v819
      %2531 = vmatprep.subr.bf16.mxu0 0
      %2532 = vmatpush1.bf16.msra.mxu0 %v820
      %2533 = vmatprep.subr.bf16.mxu0 0
      %2534 = vmatpush1.bf16.msra.mxu0 %v821
      %2535 = vmatprep.subr.bf16.mxu0 0
      %2536 = vmatpush1.bf16.msra.mxu0 %v822
      %2537 = vmatprep.subr.bf16.mxu0 0
      %2538 = vmatpush1.bf16.msra.mxu0 %v823
      %2539 = vmatprep.subr.bf16.mxu0 0
      %2540 = vmatpush1.bf16.msra.mxu0 %v824
      %2541 = vmatprep.subr.bf16.mxu0 0
      %2542 = vmatpush1.bf16.msra.mxu0 %v825
      %2543 = vmatprep.subr.bf16.mxu0 0
      %2544 = vmatpush1.bf16.msra.mxu0 0
      %2545 = vmatprep.subr.bf16.mxu0 0
      %2546 = vmatpush1.bf16.msra.mxu0 0
      %2547 = vmatprep.subr.bf16.mxu0 0
      %2548 = vmatpush1.bf16.msra.mxu0 0
      %2549 = vmatprep.subr.bf16.mxu0 0
      %2550 = vmatpush1.bf16.msra.mxu0 0
      %2551 = vmatprep.subr.bf16.mxu0 0
      %2552 = vmatpush1.bf16.msra.mxu0 0
      %2553 = vmatprep.subr.bf16.mxu0 0
      %2554 = vmatpush1.bf16.msra.mxu0 0
      %2555 = vmatprep.subr.bf16.mxu0 0
      %2556 = vmatpush1.bf16.msra.mxu0 0
      %2557 = vmatprep.subr.bf16.mxu0 0
      %2558 = vmatpush1.bf16.msra.mxu0 0
      %2559 = vmatprep.mubr.bf16.mxu0 0
      %2560 = vmatmul.mubr.bf16.gmra.mrb[0].mxu0 %v2519
      %v2561 = vpop.f32.mrb[0].mxu0
      %v2562 = vadd.f32 0.0, %v2561
      %v2563 = vpop.f32.mrb[0].mxu0
      %v2564 = vpop.f32.mrb[0].mxu0
      %v2565 = vadd.f32 0.0, %v2564
      %v2566 = vpop.f32.mrb[0].mxu0
      %2567 = vmatprep.mubr.bf16.mxu0 0
      %2568 = vmatmul.mubr.bf16.gmra.mrb[0].mxu0 %v2520
      %v2569 = vpop.f32.mrb[0].mxu0
      %v2570 = vadd.f32 0.0, %v2569
      %v2571 = vpop.f32.mrb[0].mxu0
      %v2572 = vpop.f32.mrb[0].mxu0
      %v2573 = vadd.f32 0.0, %v2572
      %v2574 = vpop.f32.mrb[0].mxu0
      %2575 = vmatprep.mubr.bf16.mxu0 0
      %2576 = vmatmul.mubr.bf16.gmra.mrb[0].mxu0 %v2521
      %v2577 = vpop.f32.mrb[0].mxu0
      %v2578 = vadd.f32 0.0, %v2577
      %v2579 = vpop.f32.mrb[0].mxu0
      %v2580 = vpop.f32.mrb[0].mxu0
      %v2581 = vadd.f32 0.0, %v2580
      %v2582 = vpop.f32.mrb[0].mxu0
      %2583 = vmatprep.mubr.bf16.mxu0 0
      %2584 = vmatmul.mubr.bf16.gmra.mrb[0].mxu0 %v2522
      %v2585 = vpop.f32.mrb[0].mxu0
      %v2586 = vadd.f32 0.0, %v2585
      %v2587 = vpop.f32.mrb[0].mxu0
      %v2588 = vpop.f32.mrb[0].mxu0
      %v2589 = vadd.f32 0.0, %v2588
      %v2590 = vpop.f32.mrb[0].mxu0
      %2591 = vmatprep.mubr.bf16.mxu0 0
      %2592 = vmatmul.mubr.bf16.gmra.mrb[0].mxu0 %v2523
      %v2593 = vpop.f32.mrb[0].mxu0
      %v2594 = vadd.f32 0.0, %v2593
      %v2595 = vpop.f32.mrb[0].mxu0
      %v2596 = vpop.f32.mrb[0].mxu0
      %v2597 = vadd.f32 0.0, %v2596
      %v2598 = vpop.f32.mrb[0].mxu0
      %2599 = vmatprep.mubr.bf16.mxu0 0
      %2600 = vmatmul.mubr.bf16.gmra.mrb[0].mxu0 %v2524
      %v2601 = vpop.f32.mrb[0].mxu0
      %v2602 = vadd.f32 0.0, %v2601
      %v2603 = vpop.f32.mrb[0].mxu0
      %v2604 = vpop.f32.mrb[0].mxu0
      %v2605 = vadd.f32 0.0, %v2604
      %v2606 = vpop.f32.mrb[0].mxu0
      %2607 = vmatprep.mubr.bf16.mxu0 0
      %2608 = vmatmul.mubr.bf16.gmra.mrb[0].mxu0 %v2525
      %v2609 = vpop.f32.mrb[0].mxu0
      %v2610 = vadd.f32 0.0, %v2609
      %v2611 = vpop.f32.mrb[0].mxu0
      %v2612 = vpop.f32.mrb[0].mxu0
      %v2613 = vadd.f32 0.0, %v2612
      %v2614 = vpop.f32.mrb[0].mxu0
      %2615 = vmatprep.mubr.bf16.mxu0 0
      %2616 = vmatmul.mubr.bf16.gmra.mrb[0].mxu0 %v2526
      %v2617 = vpop.f32.mrb[0].mxu0
      %v2618 = vadd.f32 0.0, %v2617
      %v2619 = vpop.f32.mrb[0].mxu0
      %v2620 = vpop.f32.mrb[0].mxu0
      %v2621 = vadd.f32 0.0, %v2620
      %v2622 = vpop.f32.mrb[0].mxu0
      %2623 = vdwg.mxu0
      %v2624 = vld [vmem:[%s5 + $0x3] sm:$0x1]
      %v2625 = vlaneseq
      %v2626 = vshrl.u32 %v2625, 7
      %v2627 = vsub.s32 0, %v2626
      %v2628 = vrot.slane %v2624, %v2627
      %v2629 = vmul.f32 %v2562, %v2628
      %v2630 = vmul.f32 %v2565, %v2628
      %v2631 = vmul.f32 %v2570, %v2628
      %v2632 = vmul.f32 %v2573, %v2628
      %v2633 = vmul.f32 %v2578, %v2628
      %v2634 = vmul.f32 %v2581, %v2628
      %v2635 = vmul.f32 %v2586, %v2628
      %v2636 = vmul.f32 %v2589, %v2628
      %v2637 = vmul.f32 %v2594, %v2628
      %v2638 = vmul.f32 %v2597, %v2628
      %v2639 = vmul.f32 %v2602, %v2628
      %v2640 = vmul.f32 %v2605, %v2628
      %v2641 = vmul.f32 %v2610, %v2628
      %v2642 = vmul.f32 %v2613, %v2628
      %v2643 = vmul.f32 %v2618, %v2628
      %v2644 = vmul.f32 %v2621, %v2628
      %v2645 = vadd.f32 %v2207, %v2629
      %v2646 = vadd.f32 %v2208, %v2630
      %v2647 = vadd.f32 %v2209, %v2631
      %v2648 = vadd.f32 %v2210, %v2632
      %v2649 = vadd.f32 %v2211, %v2633
      %v2650 = vadd.f32 %v2212, %v2634
      %v2651 = vadd.f32 %v2213, %v2635
      %v2652 = vadd.f32 %v2214, %v2636
      %v2653 = vadd.f32 %v2215, %v2637
      %v2654 = vadd.f32 %v2216, %v2638
      %v2655 = vadd.f32 %v2217, %v2639
      %v2656 = vadd.f32 %v2218, %v2640
      %v2657 = vadd.f32 %v2219, %v2641
      %v2658 = vadd.f32 %v2220, %v2642
      %v2659 = vadd.f32 %v2221, %v2643
      %v2660 = vadd.f32 %v2222, %v2644
      %v2661 = vld [vmem:[%s4] sm:$0x4]
      %v2663 = vpack.i.b16 %v2661, %v2661
      %v2665 = vlaneseq
      %v2666 = vshrl.u32 %v2665, 7
      %v2667 = vsub.s32 2, %v2666
      %v2668 = vrot.slane %v2663, %v2667
      %v2669 = vmul.bf16 %v802, %v2668
      %v2670 = vmul.bf16 %v803, %v2668
      %v2671 = vmul.bf16 %v804, %v2668
      %v2672 = vmul.bf16 %v805, %v2668
      %v2673 = vmul.bf16 %v806, %v2668
      %v2674 = vmul.bf16 %v807, %v2668
      %v2675 = vmul.bf16 %v808, %v2668
      %v2676 = vmul.bf16 %v809, %v2668
      %v2678 = vsel %vm842, %v2669, 0
      %v2681 = vsel %vm842, %v2670, 0
      %v2684 = vsel %vm842, %v2671, 0
      %v2687 = vsel %vm842, %v2672, 0
      %v2690 = vsel %vm842, %v2673, 0
      %v2693 = vsel %vm842, %v2674, 0
      %v2696 = vsel %vm842, %v2675, 0
      %v2699 = vsel %vm842, %v2676, 0
      %2701 = vmatprep.subr.bf16.mxu0 0
      %2702 = vmatpush1.bf16.xpose.msra.mxu0 %v924
      %2703 = vmatprep.subr.bf16.mxu0 0
      %2704 = vmatpush1.bf16.xpose.msra.mxu0 %v927
      %2705 = vmatprep.subr.bf16.mxu0 0
      %2706 = vmatpush1.bf16.xpose.msra.mxu0 %v930
      %2707 = vmatprep.subr.bf16.mxu0 0
      %2708 = vmatpush1.bf16.xpose.msra.mxu0 %v933
      %2709 = vmatprep.subr.bf16.mxu0 0
      %2710 = vmatpush1.bf16.xpose.msra.mxu0 %v936
      %2711 = vmatprep.subr.bf16.mxu0 0
      %2712 = vmatpush1.bf16.xpose.msra.mxu0 %v939
      %2713 = vmatprep.subr.bf16.mxu0 0
      %2714 = vmatpush1.bf16.xpose.msra.mxu0 %v942
      %2715 = vmatprep.subr.bf16.mxu0 0
      %2716 = vmatpush1.bf16.xpose.msra.mxu0 %v945
      %2717 = vmatprep.subr.bf16.mxu0 0
      %2718 = vmatpush1.bf16.xpose.msra.mxu0 0
      %2719 = vmatprep.subr.bf16.mxu0 0
      %2720 = vmatpush1.bf16.xpose.msra.mxu0 0
      %2721 = vmatprep.subr.bf16.mxu0 0
      %2722 = vmatpush1.bf16.xpose.msra.mxu0 0
      %2723 = vmatprep.subr.bf16.mxu0 0
      %2724 = vmatpush1.bf16.xpose.msra.mxu0 0
      %2725 = vmatprep.subr.bf16.mxu0 0
      %2726 = vmatpush1.bf16.xpose.msra.mxu0 0
      %2727 = vmatprep.subr.bf16.mxu0 0
      %2728 = vmatpush1.bf16.xpose.msra.mxu0 0
      %2729 = vmatprep.subr.bf16.mxu0 0
      %2730 = vmatpush1.bf16.xpose.msra.mxu0 0
      %2731 = vmatprep.subr.bf16.mxu0 0
      %2732 = vmatpush1.bf16.xpose.msra.mxu0 0
      %2733 = vmatprep.mubr.bf16.mxu0 0
      %2734 = vmatmul.mubr.bf16.gmra.mrb[0].mxu0 %v2678
      %v2735 = vpop.f32.mrb[0].mxu0
      %v2736 = vadd.f32 0.0, %v2735
      %v2737 = vpop.f32.mrb[0].mxu0
      %v2738 = vpop.f32.mrb[0].mxu0
      %v2739 = vadd.f32 0.0, %v2738
      %v2740 = vpop.f32.mrb[0].mxu0
      %2741 = vmatprep.mubr.bf16.mxu0 0
      %2742 = vmatmul.mubr.bf16.gmra.mrb[0].mxu0 %v2681
      %v2743 = vpop.f32.mrb[0].mxu0
      %v2744 = vadd.f32 0.0, %v2743
      %v2745 = vpop.f32.mrb[0].mxu0
      %v2746 = vpop.f32.mrb[0].mxu0
      %v2747 = vadd.f32 0.0, %v2746
      %v2748 = vpop.f32.mrb[0].mxu0
      %2749 = vmatprep.mubr.bf16.mxu0 0
      %2750 = vmatmul.mubr.bf16.gmra.mrb[0].mxu0 %v2684
      %v2751 = vpop.f32.mrb[0].mxu0
      %v2752 = vadd.f32 0.0, %v2751
      %v2753 = vpop.f32.mrb[0].mxu0
      %v2754 = vpop.f32.mrb[0].mxu0
      %v2755 = vadd.f32 0.0, %v2754
      %v2756 = vpop.f32.mrb[0].mxu0
      %2757 = vmatprep.mubr.bf16.mxu0 0
      %2758 = vmatmul.mubr.bf16.gmra.mrb[0].mxu0 %v2687
      %v2759 = vpop.f32.mrb[0].mxu0
      %v2760 = vadd.f32 0.0, %v2759
      %v2761 = vpop.f32.mrb[0].mxu0
      %v2762 = vpop.f32.mrb[0].mxu0
      %v2763 = vadd.f32 0.0, %v2762
      %v2764 = vpop.f32.mrb[0].mxu0
      %2765 = vmatprep.mubr.bf16.mxu0 0
      %2766 = vmatmul.mubr.bf16.gmra.mrb[0].mxu0 %v2690
      %v2767 = vpop.f32.mrb[0].mxu0
      %v2768 = vadd.f32 0.0, %v2767
      %v2769 = vpop.f32.mrb[0].mxu0
      %v2770 = vpop.f32.mrb[0].mxu0
      %v2771 = vadd.f32 0.0, %v2770
      %v2772 = vpop.f32.mrb[0].mxu0
      %2773 = vmatprep.mubr.bf16.mxu0 0
      %2774 = vmatmul.mubr.bf16.gmra.mrb[0].mxu0 %v2693
      %v2775 = vpop.f32.mrb[0].mxu0
      %v2776 = vadd.f32 0.0, %v2775
      %v2777 = vpop.f32.mrb[0].mxu0
      %v2778 = vpop.f32.mrb[0].mxu0
      %v2779 = vadd.f32 0.0, %v2778
      %v2780 = vpop.f32.mrb[0].mxu0
      %2781 = vmatprep.mubr.bf16.mxu0 0
      %2782 = vmatmul.mubr.bf16.gmra.mrb[0].mxu0 %v2696
      %v2783 = vpop.f32.mrb[0].mxu0
      %v2784 = vadd.f32 0.0, %v2783
      %v2785 = vpop.f32.mrb[0].mxu0
      %v2786 = vpop.f32.mrb[0].mxu0
      %v2787 = vadd.f32 0.0, %v2786
      %v2788 = vpop.f32.mrb[0].mxu0
      %2789 = vmatprep.mubr.bf16.mxu0 0
      %2790 = vmatmul.mubr.bf16.gmra.mrb[0].mxu0 %v2699
      %v2791 = vpop.f32.mrb[0].mxu0
      %v2792 = vadd.f32 0.0, %v2791
      %v2793 = vpop.f32.mrb[0].mxu0
      %v2794 = vpop.f32.mrb[0].mxu0
      %v2795 = vadd.f32 0.0, %v2794
      %v2796 = vpop.f32.mrb[0].mxu0
      %2797 = vdwg.mxu0
      %v2798 = vsel %vm882, %v2736, -1e+30
      %v2799 = vsel %vm882, %v2739, -1e+30
      %v2800 = vsel %vm882, %v2744, -1e+30
      %v2801 = vsel %vm882, %v2747, -1e+30
      %v2802 = vsel %vm882, %v2752, -1e+30
      %v2803 = vsel %vm882, %v2755, -1e+30
      %v2804 = vsel %vm882, %v2760, -1e+30
      %v2805 = vsel %vm882, %v2763, -1e+30
      %v2806 = vsel %vm882, %v2768, -1e+30
      %v2807 = vsel %vm882, %v2771, -1e+30
      %v2808 = vsel %vm882, %v2776, -1e+30
      %v2809 = vsel %vm882, %v2779, -1e+30
      %v2810 = vsel %vm882, %v2784, -1e+30
      %v2811 = vsel %vm882, %v2787, -1e+30
      %v2812 = vsel %vm882, %v2792, -1e+30
      %v2813 = vsel %vm882, %v2795, -1e+30
      %2814 = vmax.xlane.f32.xlu0 %v2798
      %v2815 = vpop.xlane.xlu0 %2814
      %2816 = vmax.xlane.f32.xlu0 %v2799
      %v2817 = vpop.xlane.xlu0 %2816
      %2818 = vmax.xlane.f32.xlu0 %v2800
      %v2819 = vpop.xlane.xlu0 %2818
      %2820 = vmax.xlane.f32.xlu0 %v2801
      %v2821 = vpop.xlane.xlu0 %2820
      %2822 = vmax.xlane.f32.xlu0 %v2802
      %v2823 = vpop.xlane.xlu0 %2822
      %2824 = vmax.xlane.f32.xlu0 %v2803
      %v2825 = vpop.xlane.xlu0 %2824
      %2826 = vmax.xlane.f32.xlu0 %v2804
      %v2827 = vpop.xlane.xlu0 %2826
      %2828 = vmax.xlane.f32.xlu0 %v2805
      %v2829 = vpop.xlane.xlu0 %2828
      %2830 = vmax.xlane.f32.xlu0 %v2806
      %v2831 = vpop.xlane.xlu0 %2830
      %2832 = vmax.xlane.f32.xlu0 %v2807
      %v2833 = vpop.xlane.xlu0 %2832
      %2834 = vmax.xlane.f32.xlu0 %v2808
      %v2835 = vpop.xlane.xlu0 %2834
      %2836 = vmax.xlane.f32.xlu0 %v2809
      %v2837 = vpop.xlane.xlu0 %2836
      %2838 = vmax.xlane.f32.xlu0 %v2810
      %v2839 = vpop.xlane.xlu0 %2838
      %2840 = vmax.xlane.f32.xlu0 %v2811
      %v2841 = vpop.xlane.xlu0 %2840
      %2842 = vmax.xlane.f32.xlu0 %v2812
      %v2843 = vpop.xlane.xlu0 %2842
      %2844 = vmax.xlane.f32.xlu0 %v2813
      %v2845 = vpop.xlane.xlu0 %2844
      %v2846 = vsub.f32 %v2798, %v2815
      %v2847 = vsub.f32 %v2799, %v2817
      %v2848 = vsub.f32 %v2800, %v2819
      %v2849 = vsub.f32 %v2801, %v2821
      %v2850 = vsub.f32 %v2802, %v2823
      %v2851 = vsub.f32 %v2803, %v2825
      %v2852 = vsub.f32 %v2804, %v2827
      %v2853 = vsub.f32 %v2805, %v2829
      %v2854 = vsub.f32 %v2806, %v2831
      %v2855 = vsub.f32 %v2807, %v2833
      %v2856 = vsub.f32 %v2808, %v2835
      %v2857 = vsub.f32 %v2809, %v2837
      %v2858 = vsub.f32 %v2810, %v2839
      %v2859 = vsub.f32 %v2811, %v2841
      %v2860 = vsub.f32 %v2812, %v2843
      %v2861 = vsub.f32 %v2813, %v2845
      %v2862 = vmul.f32 %v2846, 1.442695
      %v2863 = vpow.pop %v2862
      %v2864 = vmul.f32 %v2847, 1.442695
      %v2865 = vpow.pop %v2864
      %v2866 = vmul.f32 %v2848, 1.442695
      %v2867 = vpow.pop %v2866
      %v2868 = vmul.f32 %v2849, 1.442695
      %v2869 = vpow.pop %v2868
      %v2870 = vmul.f32 %v2850, 1.442695
      %v2871 = vpow.pop %v2870
      %v2872 = vmul.f32 %v2851, 1.442695
      %v2873 = vpow.pop %v2872
      %v2874 = vmul.f32 %v2852, 1.442695
      %v2875 = vpow.pop %v2874
      %v2876 = vmul.f32 %v2853, 1.442695
      %v2877 = vpow.pop %v2876
      %v2878 = vmul.f32 %v2854, 1.442695
      %v2879 = vpow.pop %v2878
      %v2880 = vmul.f32 %v2855, 1.442695
      %v2881 = vpow.pop %v2880
      %v2882 = vmul.f32 %v2856, 1.442695
      %v2883 = vpow.pop %v2882
      %v2884 = vmul.f32 %v2857, 1.442695
      %v2885 = vpow.pop %v2884
      %v2886 = vmul.f32 %v2858, 1.442695
      %v2887 = vpow.pop %v2886
      %v2888 = vmul.f32 %v2859, 1.442695
      %v2889 = vpow.pop %v2888
      %v2890 = vmul.f32 %v2860, 1.442695
      %v2891 = vpow.pop %v2890
      %v2892 = vmul.f32 %v2861, 1.442695
      %v2893 = vpow.pop %v2892
      %2894 = vadd.xlane.f32.xlu0 %v2863
      %v2895 = vpop.xlane.xlu0 %2894
      %2896 = vadd.xlane.f32.xlu0 %v2865
      %v2897 = vpop.xlane.xlu0 %2896
      %2898 = vadd.xlane.f32.xlu0 %v2867
      %v2899 = vpop.xlane.xlu0 %2898
      %2900 = vadd.xlane.f32.xlu0 %v2869
      %v2901 = vpop.xlane.xlu0 %2900
      %2902 = vadd.xlane.f32.xlu0 %v2871
      %v2903 = vpop.xlane.xlu0 %2902
      %2904 = vadd.xlane.f32.xlu0 %v2873
      %v2905 = vpop.xlane.xlu0 %2904
      %2906 = vadd.xlane.f32.xlu0 %v2875
      %v2907 = vpop.xlane.xlu0 %2906
      %2908 = vadd.xlane.f32.xlu0 %v2877
      %v2909 = vpop.xlane.xlu0 %2908
      %2910 = vadd.xlane.f32.xlu0 %v2879
      %v2911 = vpop.xlane.xlu0 %2910
      %2912 = vadd.xlane.f32.xlu0 %v2881
      %v2913 = vpop.xlane.xlu0 %2912
      %2914 = vadd.xlane.f32.xlu0 %v2883
      %v2915 = vpop.xlane.xlu0 %2914
      %2916 = vadd.xlane.f32.xlu0 %v2885
      %v2917 = vpop.xlane.xlu0 %2916
      %2918 = vadd.xlane.f32.xlu0 %v2887
      %v2919 = vpop.xlane.xlu0 %2918
      %2920 = vadd.xlane.f32.xlu0 %v2889
      %v2921 = vpop.xlane.xlu0 %2920
      %2922 = vadd.xlane.f32.xlu0 %v2891
      %v2923 = vpop.xlane.xlu0 %2922
      %2924 = vadd.xlane.f32.xlu0 %v2893
      %v2925 = vpop.xlane.xlu0 %2924
      %v2926 = vrcp.pop %v2895
      %v2927 = vrcp.pop %v2897
      %v2928 = vrcp.pop %v2899
      %v2929 = vrcp.pop %v2901
      %v2930 = vrcp.pop %v2903
      %v2931 = vrcp.pop %v2905
      %v2932 = vrcp.pop %v2907
      %v2933 = vrcp.pop %v2909
      %v2934 = vrcp.pop %v2911
      %v2935 = vrcp.pop %v2913
      %v2936 = vrcp.pop %v2915
      %v2937 = vrcp.pop %v2917
      %v2938 = vrcp.pop %v2919
      %v2939 = vrcp.pop %v2921
      %v2940 = vrcp.pop %v2923
      %v2941 = vrcp.pop %v2925
      %v2942 = vmul.f32 %v2863, %v2926
      %v2943 = vmul.f32 %v2865, %v2927
      %v2944 = vmul.f32 %v2867, %v2928
      %v2945 = vmul.f32 %v2869, %v2929
      %v2946 = vmul.f32 %v2871, %v2930
      %v2947 = vmul.f32 %v2873, %v2931
      %v2948 = vmul.f32 %v2875, %v2932
      %v2949 = vmul.f32 %v2877, %v2933
      %v2950 = vmul.f32 %v2879, %v2934
      %v2951 = vmul.f32 %v2881, %v2935
      %v2952 = vmul.f32 %v2883, %v2936
      %v2953 = vmul.f32 %v2885, %v2937
      %v2954 = vmul.f32 %v2887, %v2938
      %v2955 = vmul.f32 %v2889, %v2939
      %v2956 = vmul.f32 %v2891, %v2940
      %v2957 = vmul.f32 %v2893, %v2941
      %v2958 = vpack.c.bf16 %v2943, %v2942
      %v2959 = vpack.c.bf16 %v2945, %v2944
      %v2960 = vpack.c.bf16 %v2947, %v2946
      %v2961 = vpack.c.bf16 %v2949, %v2948
      %v2962 = vpack.c.bf16 %v2951, %v2950
      %v2963 = vpack.c.bf16 %v2953, %v2952
      %v2964 = vpack.c.bf16 %v2955, %v2954
      %v2965 = vpack.c.bf16 %v2957, %v2956
      %2966 = vmatprep.subr.bf16.mxu0 0
      %2967 = vmatpush1.bf16.msra.mxu0 %v818
      %2968 = vmatprep.subr.bf16.mxu0 0
      %2969 = vmatpush1.bf16.msra.mxu0 %v819
      %2970 = vmatprep.subr.bf16.mxu0 0
      %2971 = vmatpush1.bf16.msra.mxu0 %v820
      %2972 = vmatprep.subr.bf16.mxu0 0
      %2973 = vmatpush1.bf16.msra.mxu0 %v821
      %2974 = vmatprep.subr.bf16.mxu0 0
      %2975 = vmatpush1.bf16.msra.mxu0 %v822
      %2976 = vmatprep.subr.bf16.mxu0 0
      %2977 = vmatpush1.bf16.msra.mxu0 %v823
      %2978 = vmatprep.subr.bf16.mxu0 0
      %2979 = vmatpush1.bf16.msra.mxu0 %v824
      %2980 = vmatprep.subr.bf16.mxu0 0
      %2981 = vmatpush1.bf16.msra.mxu0 %v825
      %2982 = vmatprep.subr.bf16.mxu0 0
      %2983 = vmatpush1.bf16.msra.mxu0 0
      %2984 = vmatprep.subr.bf16.mxu0 0
      %2985 = vmatpush1.bf16.msra.mxu0 0
      %2986 = vmatprep.subr.bf16.mxu0 0
      %2987 = vmatpush1.bf16.msra.mxu0 0
      %2988 = vmatprep.subr.bf16.mxu0 0
      %2989 = vmatpush1.bf16.msra.mxu0 0
      %2990 = vmatprep.subr.bf16.mxu0 0
      %2991 = vmatpush1.bf16.msra.mxu0 0
      %2992 = vmatprep.subr.bf16.mxu0 0
      %2993 = vmatpush1.bf16.msra.mxu0 0
      %2994 = vmatprep.subr.bf16.mxu0 0
      %2995 = vmatpush1.bf16.msra.mxu0 0
      %2996 = vmatprep.subr.bf16.mxu0 0
      %2997 = vmatpush1.bf16.msra.mxu0 0
      %2998 = vmatprep.mubr.bf16.mxu0 0
      %2999 = vmatmul.mubr.bf16.gmra.mrb[0].mxu0 %v2958
      %v3000 = vpop.f32.mrb[0].mxu0
      %v3001 = vadd.f32 0.0, %v3000
      %v3002 = vpop.f32.mrb[0].mxu0
      %v3003 = vpop.f32.mrb[0].mxu0
      %v3004 = vadd.f32 0.0, %v3003
      %v3005 = vpop.f32.mrb[0].mxu0
      %3006 = vmatprep.mubr.bf16.mxu0 0
      %3007 = vmatmul.mubr.bf16.gmra.mrb[0].mxu0 %v2959
      %v3008 = vpop.f32.mrb[0].mxu0
      %v3009 = vadd.f32 0.0, %v3008
      %v3010 = vpop.f32.mrb[0].mxu0
      %v3011 = vpop.f32.mrb[0].mxu0
      %v3012 = vadd.f32 0.0, %v3011
      %v3013 = vpop.f32.mrb[0].mxu0
      %3014 = vmatprep.mubr.bf16.mxu0 0
      %3015 = vmatmul.mubr.bf16.gmra.mrb[0].mxu0 %v2960
      %v3016 = vpop.f32.mrb[0].mxu0
      %v3017 = vadd.f32 0.0, %v3016
      %v3018 = vpop.f32.mrb[0].mxu0
      %v3019 = vpop.f32.mrb[0].mxu0
      %v3020 = vadd.f32 0.0, %v3019
      %v3021 = vpop.f32.mrb[0].mxu0
      %3022 = vmatprep.mubr.bf16.mxu0 0
      %3023 = vmatmul.mubr.bf16.gmra.mrb[0].mxu0 %v2961
      %v3024 = vpop.f32.mrb[0].mxu0
      %v3025 = vadd.f32 0.0, %v3024
      %v3026 = vpop.f32.mrb[0].mxu0
      %v3027 = vpop.f32.mrb[0].mxu0
      %v3028 = vadd.f32 0.0, %v3027
      %v3029 = vpop.f32.mrb[0].mxu0
      %3030 = vmatprep.mubr.bf16.mxu0 0
      %3031 = vmatmul.mubr.bf16.gmra.mrb[0].mxu0 %v2962
      %v3032 = vpop.f32.mrb[0].mxu0
      %v3033 = vadd.f32 0.0, %v3032
      %v3034 = vpop.f32.mrb[0].mxu0
      %v3035 = vpop.f32.mrb[0].mxu0
      %v3036 = vadd.f32 0.0, %v3035
      %v3037 = vpop.f32.mrb[0].mxu0
      %3038 = vmatprep.mubr.bf16.mxu0 0
      %3039 = vmatmul.mubr.bf16.gmra.mrb[0].mxu0 %v2963
      %v3040 = vpop.f32.mrb[0].mxu0
      %v3041 = vadd.f32 0.0, %v3040
      %v3042 = vpop.f32.mrb[0].mxu0
      %v3043 = vpop.f32.mrb[0].mxu0
      %v3044 = vadd.f32 0.0, %v3043
      %v3045 = vpop.f32.mrb[0].mxu0
      %3046 = vmatprep.mubr.bf16.mxu0 0
      %3047 = vmatmul.mubr.bf16.gmra.mrb[0].mxu0 %v2964
      %v3048 = vpop.f32.mrb[0].mxu0
      %v3049 = vadd.f32 0.0, %v3048
      %v3050 = vpop.f32.mrb[0].mxu0
      %v3051 = vpop.f32.mrb[0].mxu0
      %v3052 = vadd.f32 0.0, %v3051
      %v3053 = vpop.f32.mrb[0].mxu0
      %3054 = vmatprep.mubr.bf16.mxu0 0
      %3055 = vmatmul.mubr.bf16.gmra.mrb[0].mxu0 %v2965
      %v3056 = vpop.f32.mrb[0].mxu0
      %v3057 = vadd.f32 0.0, %v3056
      %v3058 = vpop.f32.mrb[0].mxu0
      %v3059 = vpop.f32.mrb[0].mxu0
      %v3060 = vadd.f32 0.0, %v3059
      %v3061 = vpop.f32.mrb[0].mxu0
      %3062 = vdwg.mxu0
      %v3063 = vld [vmem:[%s5 + $0x4] sm:$0x1]
      %v3064 = vlaneseq
      %v3065 = vshrl.u32 %v3064, 7
      %v3066 = vsub.s32 0, %v3065
      %v3067 = vrot.slane %v3063, %v3066
      %v3068 = vmul.f32 %v3001, %v3067
      %v3069 = vmul.f32 %v3004, %v3067
      %v3070 = vmul.f32 %v3009, %v3067
      %v3071 = vmul.f32 %v3012, %v3067
      %v3072 = vmul.f32 %v3017, %v3067
      %v3073 = vmul.f32 %v3020, %v3067
      %v3074 = vmul.f32 %v3025, %v3067
      %v3075 = vmul.f32 %v3028, %v3067
      %v3076 = vmul.f32 %v3033, %v3067
      %v3077 = vmul.f32 %v3036, %v3067
      %v3078 = vmul.f32 %v3041, %v3067
      %v3079 = vmul.f32 %v3044, %v3067
      %v3080 = vmul.f32 %v3049, %v3067
      %v3081 = vmul.f32 %v3052, %v3067
      %v3082 = vmul.f32 %v3057, %v3067
      %v3083 = vmul.f32 %v3060, %v3067
      %v3084 = vadd.f32 %v2645, %v3068
      %v3085 = vadd.f32 %v2646, %v3069
      %v3086 = vadd.f32 %v2647, %v3070
      %v3087 = vadd.f32 %v2648, %v3071
      %v3088 = vadd.f32 %v2649, %v3072
      %v3089 = vadd.f32 %v2650, %v3073
      %v3090 = vadd.f32 %v2651, %v3074
      %v3091 = vadd.f32 %v2652, %v3075
      %v3092 = vadd.f32 %v2653, %v3076
      %v3093 = vadd.f32 %v2654, %v3077
      %v3094 = vadd.f32 %v2655, %v3078
      %v3095 = vadd.f32 %v2656, %v3079
      %v3096 = vadd.f32 %v2657, %v3080
      %v3097 = vadd.f32 %v2658, %v3081
      %v3098 = vadd.f32 %v2659, %v3082
      %v3099 = vadd.f32 %v2660, %v3083
      %v3100 = vshrl.u32 %v2661, 16
      %v3101 = vpack.i.b16 %v3100, %v3100
      %v3103 = vlaneseq
      %v3104 = vshrl.u32 %v3103, 7
      %v3105 = vsub.s32 2, %v3104
      %v3106 = vrot.slane %v3101, %v3105
      %v3107 = vmul.bf16 %v802, %v3106
      %v3108 = vmul.bf16 %v803, %v3106
      %v3109 = vmul.bf16 %v804, %v3106
      %v3110 = vmul.bf16 %v805, %v3106
      %v3111 = vmul.bf16 %v806, %v3106
      %v3112 = vmul.bf16 %v807, %v3106
      %v3113 = vmul.bf16 %v808, %v3106
      %v3114 = vmul.bf16 %v809, %v3106
      %v3116 = vsel %vm842, %v3107, 0
      %v3119 = vsel %vm842, %v3108, 0
      %v3122 = vsel %vm842, %v3109, 0
      %v3125 = vsel %vm842, %v3110, 0
      %v3128 = vsel %vm842, %v3111, 0
      %v3131 = vsel %vm842, %v3112, 0
      %v3134 = vsel %vm842, %v3113, 0
      %v3137 = vsel %vm842, %v3114, 0
      %3139 = vmatprep.subr.bf16.mxu0 0
      %3140 = vmatpush1.bf16.xpose.msra.mxu0 %v924
      %3141 = vmatprep.subr.bf16.mxu0 0
      %3142 = vmatpush1.bf16.xpose.msra.mxu0 %v927
      %3143 = vmatprep.subr.bf16.mxu0 0
      %3144 = vmatpush1.bf16.xpose.msra.mxu0 %v930
      %3145 = vmatprep.subr.bf16.mxu0 0
      %3146 = vmatpush1.bf16.xpose.msra.mxu0 %v933
      %3147 = vmatprep.subr.bf16.mxu0 0
      %3148 = vmatpush1.bf16.xpose.msra.mxu0 %v936
      %3149 = vmatprep.subr.bf16.mxu0 0
      %3150 = vmatpush1.bf16.xpose.msra.mxu0 %v939
      %3151 = vmatprep.subr.bf16.mxu0 0
      %3152 = vmatpush1.bf16.xpose.msra.mxu0 %v942
      %3153 = vmatprep.subr.bf16.mxu0 0
      %3154 = vmatpush1.bf16.xpose.msra.mxu0 %v945
      %3155 = vmatprep.subr.bf16.mxu0 0
      %3156 = vmatpush1.bf16.xpose.msra.mxu0 0
      %3157 = vmatprep.subr.bf16.mxu0 0
      %3158 = vmatpush1.bf16.xpose.msra.mxu0 0
      %3159 = vmatprep.subr.bf16.mxu0 0
      %3160 = vmatpush1.bf16.xpose.msra.mxu0 0
      %3161 = vmatprep.subr.bf16.mxu0 0
      %3162 = vmatpush1.bf16.xpose.msra.mxu0 0
      %3163 = vmatprep.subr.bf16.mxu0 0
      %3164 = vmatpush1.bf16.xpose.msra.mxu0 0
      %3165 = vmatprep.subr.bf16.mxu0 0
      %3166 = vmatpush1.bf16.xpose.msra.mxu0 0
      %3167 = vmatprep.subr.bf16.mxu0 0
      %3168 = vmatpush1.bf16.xpose.msra.mxu0 0
      %3169 = vmatprep.subr.bf16.mxu0 0
      %3170 = vmatpush1.bf16.xpose.msra.mxu0 0
      %3171 = vmatprep.mubr.bf16.mxu0 0
      %3172 = vmatmul.mubr.bf16.gmra.mrb[0].mxu0 %v3116
      %v3173 = vpop.f32.mrb[0].mxu0
      %v3174 = vadd.f32 0.0, %v3173
      %v3175 = vpop.f32.mrb[0].mxu0
      %v3176 = vpop.f32.mrb[0].mxu0
      %v3177 = vadd.f32 0.0, %v3176
      %v3178 = vpop.f32.mrb[0].mxu0
      %3179 = vmatprep.mubr.bf16.mxu0 0
      %3180 = vmatmul.mubr.bf16.gmra.mrb[0].mxu0 %v3119
      %v3181 = vpop.f32.mrb[0].mxu0
      %v3182 = vadd.f32 0.0, %v3181
      %v3183 = vpop.f32.mrb[0].mxu0
      %v3184 = vpop.f32.mrb[0].mxu0
      %v3185 = vadd.f32 0.0, %v3184
      %v3186 = vpop.f32.mrb[0].mxu0
      %3187 = vmatprep.mubr.bf16.mxu0 0
      %3188 = vmatmul.mubr.bf16.gmra.mrb[0].mxu0 %v3122
      %v3189 = vpop.f32.mrb[0].mxu0
      %v3190 = vadd.f32 0.0, %v3189
      %v3191 = vpop.f32.mrb[0].mxu0
      %v3192 = vpop.f32.mrb[0].mxu0
      %v3193 = vadd.f32 0.0, %v3192
      %v3194 = vpop.f32.mrb[0].mxu0
      %3195 = vmatprep.mubr.bf16.mxu0 0
      %3196 = vmatmul.mubr.bf16.gmra.mrb[0].mxu0 %v3125
      %v3197 = vpop.f32.mrb[0].mxu0
      %v3198 = vadd.f32 0.0, %v3197
      %v3199 = vpop.f32.mrb[0].mxu0
      %v3200 = vpop.f32.mrb[0].mxu0
      %v3201 = vadd.f32 0.0, %v3200
      %v3202 = vpop.f32.mrb[0].mxu0
      %3203 = vmatprep.mubr.bf16.mxu0 0
      %3204 = vmatmul.mubr.bf16.gmra.mrb[0].mxu0 %v3128
      %v3205 = vpop.f32.mrb[0].mxu0
      %v3206 = vadd.f32 0.0, %v3205
      %v3207 = vpop.f32.mrb[0].mxu0
      %v3208 = vpop.f32.mrb[0].mxu0
      %v3209 = vadd.f32 0.0, %v3208
      %v3210 = vpop.f32.mrb[0].mxu0
      %3211 = vmatprep.mubr.bf16.mxu0 0
      %3212 = vmatmul.mubr.bf16.gmra.mrb[0].mxu0 %v3131
      %v3213 = vpop.f32.mrb[0].mxu0
      %v3214 = vadd.f32 0.0, %v3213
      %v3215 = vpop.f32.mrb[0].mxu0
      %v3216 = vpop.f32.mrb[0].mxu0
      %v3217 = vadd.f32 0.0, %v3216
      %v3218 = vpop.f32.mrb[0].mxu0
      %3219 = vmatprep.mubr.bf16.mxu0 0
      %3220 = vmatmul.mubr.bf16.gmra.mrb[0].mxu0 %v3134
      %v3221 = vpop.f32.mrb[0].mxu0
      %v3222 = vadd.f32 0.0, %v3221
      %v3223 = vpop.f32.mrb[0].mxu0
      %v3224 = vpop.f32.mrb[0].mxu0
      %v3225 = vadd.f32 0.0, %v3224
      %v3226 = vpop.f32.mrb[0].mxu0
      %3227 = vmatprep.mubr.bf16.mxu0 0
      %3228 = vmatmul.mubr.bf16.gmra.mrb[0].mxu0 %v3137
      %v3229 = vpop.f32.mrb[0].mxu0
      %v3230 = vadd.f32 0.0, %v3229
      %v3231 = vpop.f32.mrb[0].mxu0
      %v3232 = vpop.f32.mrb[0].mxu0
      %v3233 = vadd.f32 0.0, %v3232
      %v3234 = vpop.f32.mrb[0].mxu0
      %3235 = vdwg.mxu0
      %v3236 = vsel %vm882, %v3174, -1e+30
      %v3237 = vsel %vm882, %v3177, -1e+30
      %v3238 = vsel %vm882, %v3182, -1e+30
      %v3239 = vsel %vm882, %v3185, -1e+30
      %v3240 = vsel %vm882, %v3190, -1e+30
      %v3241 = vsel %vm882, %v3193, -1e+30
      %v3242 = vsel %vm882, %v3198, -1e+30
      %v3243 = vsel %vm882, %v3201, -1e+30
      %v3244 = vsel %vm882, %v3206, -1e+30
      %v3245 = vsel %vm882, %v3209, -1e+30
      %v3246 = vsel %vm882, %v3214, -1e+30
      %v3247 = vsel %vm882, %v3217, -1e+30
      %v3248 = vsel %vm882, %v3222, -1e+30
      %v3249 = vsel %vm882, %v3225, -1e+30
      %v3250 = vsel %vm882, %v3230, -1e+30
      %v3251 = vsel %vm882, %v3233, -1e+30
      %3252 = vmax.xlane.f32.xlu0 %v3236
      %v3253 = vpop.xlane.xlu0 %3252
      %3254 = vmax.xlane.f32.xlu0 %v3237
      %v3255 = vpop.xlane.xlu0 %3254
      %3256 = vmax.xlane.f32.xlu0 %v3238
      %v3257 = vpop.xlane.xlu0 %3256
      %3258 = vmax.xlane.f32.xlu0 %v3239
      %v3259 = vpop.xlane.xlu0 %3258
      %3260 = vmax.xlane.f32.xlu0 %v3240
      %v3261 = vpop.xlane.xlu0 %3260
      %3262 = vmax.xlane.f32.xlu0 %v3241
      %v3263 = vpop.xlane.xlu0 %3262
      %3264 = vmax.xlane.f32.xlu0 %v3242
      %v3265 = vpop.xlane.xlu0 %3264
      %3266 = vmax.xlane.f32.xlu0 %v3243
      %v3267 = vpop.xlane.xlu0 %3266
      %3268 = vmax.xlane.f32.xlu0 %v3244
      %v3269 = vpop.xlane.xlu0 %3268
      %3270 = vmax.xlane.f32.xlu0 %v3245
      %v3271 = vpop.xlane.xlu0 %3270
      %3272 = vmax.xlane.f32.xlu0 %v3246
      %v3273 = vpop.xlane.xlu0 %3272
      %3274 = vmax.xlane.f32.xlu0 %v3247
      %v3275 = vpop.xlane.xlu0 %3274
      %3276 = vmax.xlane.f32.xlu0 %v3248
      %v3277 = vpop.xlane.xlu0 %3276
      %3278 = vmax.xlane.f32.xlu0 %v3249
      %v3279 = vpop.xlane.xlu0 %3278
      %3280 = vmax.xlane.f32.xlu0 %v3250
      %v3281 = vpop.xlane.xlu0 %3280
      %3282 = vmax.xlane.f32.xlu0 %v3251
      %v3283 = vpop.xlane.xlu0 %3282
      %v3284 = vsub.f32 %v3236, %v3253
      %v3285 = vsub.f32 %v3237, %v3255
      %v3286 = vsub.f32 %v3238, %v3257
      %v3287 = vsub.f32 %v3239, %v3259
      %v3288 = vsub.f32 %v3240, %v3261
      %v3289 = vsub.f32 %v3241, %v3263
      %v3290 = vsub.f32 %v3242, %v3265
      %v3291 = vsub.f32 %v3243, %v3267
      %v3292 = vsub.f32 %v3244, %v3269
      %v3293 = vsub.f32 %v3245, %v3271
      %v3294 = vsub.f32 %v3246, %v3273
      %v3295 = vsub.f32 %v3247, %v3275
      %v3296 = vsub.f32 %v3248, %v3277
      %v3297 = vsub.f32 %v3249, %v3279
      %v3298 = vsub.f32 %v3250, %v3281
      %v3299 = vsub.f32 %v3251, %v3283
      %v3300 = vmul.f32 %v3284, 1.442695
      %v3301 = vpow.pop %v3300
      %v3302 = vmul.f32 %v3285, 1.442695
      %v3303 = vpow.pop %v3302
      %v3304 = vmul.f32 %v3286, 1.442695
      %v3305 = vpow.pop %v3304
      %v3306 = vmul.f32 %v3287, 1.442695
      %v3307 = vpow.pop %v3306
      %v3308 = vmul.f32 %v3288, 1.442695
      %v3309 = vpow.pop %v3308
      %v3310 = vmul.f32 %v3289, 1.442695
      %v3311 = vpow.pop %v3310
      %v3312 = vmul.f32 %v3290, 1.442695
      %v3313 = vpow.pop %v3312
      %v3314 = vmul.f32 %v3291, 1.442695
      %v3315 = vpow.pop %v3314
      %v3316 = vmul.f32 %v3292, 1.442695
      %v3317 = vpow.pop %v3316
      %v3318 = vmul.f32 %v3293, 1.442695
      %v3319 = vpow.pop %v3318
      %v3320 = vmul.f32 %v3294, 1.442695
      %v3321 = vpow.pop %v3320
      %v3322 = vmul.f32 %v3295, 1.442695
      %v3323 = vpow.pop %v3322
      %v3324 = vmul.f32 %v3296, 1.442695
      %v3325 = vpow.pop %v3324
      %v3326 = vmul.f32 %v3297, 1.442695
      %v3327 = vpow.pop %v3326
      %v3328 = vmul.f32 %v3298, 1.442695
      %v3329 = vpow.pop %v3328
      %v3330 = vmul.f32 %v3299, 1.442695
      %v3331 = vpow.pop %v3330
      %3332 = vadd.xlane.f32.xlu0 %v3301
      %v3333 = vpop.xlane.xlu0 %3332
      %3334 = vadd.xlane.f32.xlu0 %v3303
      %v3335 = vpop.xlane.xlu0 %3334
      %3336 = vadd.xlane.f32.xlu0 %v3305
      %v3337 = vpop.xlane.xlu0 %3336
      %3338 = vadd.xlane.f32.xlu0 %v3307
      %v3339 = vpop.xlane.xlu0 %3338
      %3340 = vadd.xlane.f32.xlu0 %v3309
      %v3341 = vpop.xlane.xlu0 %3340
      %3342 = vadd.xlane.f32.xlu0 %v3311
      %v3343 = vpop.xlane.xlu0 %3342
      %3344 = vadd.xlane.f32.xlu0 %v3313
      %v3345 = vpop.xlane.xlu0 %3344
      %3346 = vadd.xlane.f32.xlu0 %v3315
      %v3347 = vpop.xlane.xlu0 %3346
      %3348 = vadd.xlane.f32.xlu0 %v3317
      %v3349 = vpop.xlane.xlu0 %3348
      %3350 = vadd.xlane.f32.xlu0 %v3319
      %v3351 = vpop.xlane.xlu0 %3350
      %3352 = vadd.xlane.f32.xlu0 %v3321
      %v3353 = vpop.xlane.xlu0 %3352
      %3354 = vadd.xlane.f32.xlu0 %v3323
      %v3355 = vpop.xlane.xlu0 %3354
      %3356 = vadd.xlane.f32.xlu0 %v3325
      %v3357 = vpop.xlane.xlu0 %3356
      %3358 = vadd.xlane.f32.xlu0 %v3327
      %v3359 = vpop.xlane.xlu0 %3358
      %3360 = vadd.xlane.f32.xlu0 %v3329
      %v3361 = vpop.xlane.xlu0 %3360
      %3362 = vadd.xlane.f32.xlu0 %v3331
      %v3363 = vpop.xlane.xlu0 %3362
      %v3364 = vrcp.pop %v3333
      %v3365 = vrcp.pop %v3335
      %v3366 = vrcp.pop %v3337
      %v3367 = vrcp.pop %v3339
      %v3368 = vrcp.pop %v3341
      %v3369 = vrcp.pop %v3343
      %v3370 = vrcp.pop %v3345
      %v3371 = vrcp.pop %v3347
      %v3372 = vrcp.pop %v3349
      %v3373 = vrcp.pop %v3351
      %v3374 = vrcp.pop %v3353
      %v3375 = vrcp.pop %v3355
      %v3376 = vrcp.pop %v3357
      %v3377 = vrcp.pop %v3359
      %v3378 = vrcp.pop %v3361
      %v3379 = vrcp.pop %v3363
      %v3380 = vmul.f32 %v3301, %v3364
      %v3381 = vmul.f32 %v3303, %v3365
      %v3382 = vmul.f32 %v3305, %v3366
      %v3383 = vmul.f32 %v3307, %v3367
      %v3384 = vmul.f32 %v3309, %v3368
      %v3385 = vmul.f32 %v3311, %v3369
      %v3386 = vmul.f32 %v3313, %v3370
      %v3387 = vmul.f32 %v3315, %v3371
      %v3388 = vmul.f32 %v3317, %v3372
      %v3389 = vmul.f32 %v3319, %v3373
      %v3390 = vmul.f32 %v3321, %v3374
      %v3391 = vmul.f32 %v3323, %v3375
      %v3392 = vmul.f32 %v3325, %v3376
      %v3393 = vmul.f32 %v3327, %v3377
      %v3394 = vmul.f32 %v3329, %v3378
      %v3395 = vmul.f32 %v3331, %v3379
      %v3396 = vpack.c.bf16 %v3381, %v3380
      %v3397 = vpack.c.bf16 %v3383, %v3382
      %v3398 = vpack.c.bf16 %v3385, %v3384
      %v3399 = vpack.c.bf16 %v3387, %v3386
      %v3400 = vpack.c.bf16 %v3389, %v3388
      %v3401 = vpack.c.bf16 %v3391, %v3390
      %v3402 = vpack.c.bf16 %v3393, %v3392
      %v3403 = vpack.c.bf16 %v3395, %v3394
      %3404 = vmatprep.subr.bf16.mxu0 0
      %3405 = vmatpush1.bf16.msra.mxu0 %v818
      %3406 = vmatprep.subr.bf16.mxu0 0
      %3407 = vmatpush1.bf16.msra.mxu0 %v819
      %3408 = vmatprep.subr.bf16.mxu0 0
      %3409 = vmatpush1.bf16.msra.mxu0 %v820
      %3410 = vmatprep.subr.bf16.mxu0 0
      %3411 = vmatpush1.bf16.msra.mxu0 %v821
      %3412 = vmatprep.subr.bf16.mxu0 0
      %3413 = vmatpush1.bf16.msra.mxu0 %v822
      %3414 = vmatprep.subr.bf16.mxu0 0
      %3415 = vmatpush1.bf16.msra.mxu0 %v823
      %3416 = vmatprep.subr.bf16.mxu0 0
      %3417 = vmatpush1.bf16.msra.mxu0 %v824
      %3418 = vmatprep.subr.bf16.mxu0 0
      %3419 = vmatpush1.bf16.msra.mxu0 %v825
      %3420 = vmatprep.subr.bf16.mxu0 0
      %3421 = vmatpush1.bf16.msra.mxu0 0
      %3422 = vmatprep.subr.bf16.mxu0 0
      %3423 = vmatpush1.bf16.msra.mxu0 0
      %3424 = vmatprep.subr.bf16.mxu0 0
      %3425 = vmatpush1.bf16.msra.mxu0 0
      %3426 = vmatprep.subr.bf16.mxu0 0
      %3427 = vmatpush1.bf16.msra.mxu0 0
      %3428 = vmatprep.subr.bf16.mxu0 0
      %3429 = vmatpush1.bf16.msra.mxu0 0
      %3430 = vmatprep.subr.bf16.mxu0 0
      %3431 = vmatpush1.bf16.msra.mxu0 0
      %3432 = vmatprep.subr.bf16.mxu0 0
      %3433 = vmatpush1.bf16.msra.mxu0 0
      %3434 = vmatprep.subr.bf16.mxu0 0
      %3435 = vmatpush1.bf16.msra.mxu0 0
      %3436 = vmatprep.mubr.bf16.mxu0 0
      %3437 = vmatmul.mubr.bf16.gmra.mrb[0].mxu0 %v3396
      %v3438 = vpop.f32.mrb[0].mxu0
      %v3439 = vadd.f32 0.0, %v3438
      %v3440 = vpop.f32.mrb[0].mxu0
      %v3441 = vpop.f32.mrb[0].mxu0
      %v3442 = vadd.f32 0.0, %v3441
      %v3443 = vpop.f32.mrb[0].mxu0
      %3444 = vmatprep.mubr.bf16.mxu0 0
      %3445 = vmatmul.mubr.bf16.gmra.mrb[0].mxu0 %v3397
      %v3446 = vpop.f32.mrb[0].mxu0
      %v3447 = vadd.f32 0.0, %v3446
      %v3448 = vpop.f32.mrb[0].mxu0
      %v3449 = vpop.f32.mrb[0].mxu0
      %v3450 = vadd.f32 0.0, %v3449
      %v3451 = vpop.f32.mrb[0].mxu0
      %3452 = vmatprep.mubr.bf16.mxu0 0
      %3453 = vmatmul.mubr.bf16.gmra.mrb[0].mxu0 %v3398
      %v3454 = vpop.f32.mrb[0].mxu0
      %v3455 = vadd.f32 0.0, %v3454
      %v3456 = vpop.f32.mrb[0].mxu0
      %v3457 = vpop.f32.mrb[0].mxu0
      %v3458 = vadd.f32 0.0, %v3457
      %v3459 = vpop.f32.mrb[0].mxu0
      %3460 = vmatprep.mubr.bf16.mxu0 0
      %3461 = vmatmul.mubr.bf16.gmra.mrb[0].mxu0 %v3399
      %v3462 = vpop.f32.mrb[0].mxu0
      %v3463 = vadd.f32 0.0, %v3462
      %v3464 = vpop.f32.mrb[0].mxu0
      %v3465 = vpop.f32.mrb[0].mxu0
      %v3466 = vadd.f32 0.0, %v3465
      %v3467 = vpop.f32.mrb[0].mxu0
      %3468 = vmatprep.mubr.bf16.mxu0 0
      %3469 = vmatmul.mubr.bf16.gmra.mrb[0].mxu0 %v3400
      %v3470 = vpop.f32.mrb[0].mxu0
      %v3471 = vadd.f32 0.0, %v3470
      %v3472 = vpop.f32.mrb[0].mxu0
      %v3473 = vpop.f32.mrb[0].mxu0
      %v3474 = vadd.f32 0.0, %v3473
      %v3475 = vpop.f32.mrb[0].mxu0
      %3476 = vmatprep.mubr.bf16.mxu0 0
      %3477 = vmatmul.mubr.bf16.gmra.mrb[0].mxu0 %v3401
      %v3478 = vpop.f32.mrb[0].mxu0
      %v3479 = vadd.f32 0.0, %v3478
      %v3480 = vpop.f32.mrb[0].mxu0
      %v3481 = vpop.f32.mrb[0].mxu0
      %v3482 = vadd.f32 0.0, %v3481
      %v3483 = vpop.f32.mrb[0].mxu0
      %3484 = vmatprep.mubr.bf16.mxu0 0
      %3485 = vmatmul.mubr.bf16.gmra.mrb[0].mxu0 %v3402
      %v3486 = vpop.f32.mrb[0].mxu0
      %v3487 = vadd.f32 0.0, %v3486
      %v3488 = vpop.f32.mrb[0].mxu0
      %v3489 = vpop.f32.mrb[0].mxu0
      %v3490 = vadd.f32 0.0, %v3489
      %v3491 = vpop.f32.mrb[0].mxu0
      %3492 = vmatprep.mubr.bf16.mxu0 0
      %3493 = vmatmul.mubr.bf16.gmra.mrb[0].mxu0 %v3403
      %v3494 = vpop.f32.mrb[0].mxu0
      %v3495 = vadd.f32 0.0, %v3494
      %v3496 = vpop.f32.mrb[0].mxu0
      %v3497 = vpop.f32.mrb[0].mxu0
      %v3498 = vadd.f32 0.0, %v3497
      %v3499 = vpop.f32.mrb[0].mxu0
      %3500 = vdwg.mxu0
      %v3501 = vld [vmem:[%s5 + $0x5] sm:$0x1]
      %v3502 = vlaneseq
      %v3503 = vshrl.u32 %v3502, 7
      %v3504 = vsub.s32 0, %v3503
      %v3505 = vrot.slane %v3501, %v3504
      %v3506 = vmul.f32 %v3439, %v3505
      %v3507 = vmul.f32 %v3442, %v3505
      %v3508 = vmul.f32 %v3447, %v3505
      %v3509 = vmul.f32 %v3450, %v3505
      %v3510 = vmul.f32 %v3455, %v3505
      %v3511 = vmul.f32 %v3458, %v3505
      %v3512 = vmul.f32 %v3463, %v3505
      %v3513 = vmul.f32 %v3466, %v3505
      %v3514 = vmul.f32 %v3471, %v3505
      %v3515 = vmul.f32 %v3474, %v3505
      %v3516 = vmul.f32 %v3479, %v3505
      %v3517 = vmul.f32 %v3482, %v3505
      %v3518 = vmul.f32 %v3487, %v3505
      %v3519 = vmul.f32 %v3490, %v3505
      %v3520 = vmul.f32 %v3495, %v3505
      %v3521 = vmul.f32 %v3498, %v3505
      %v3522 = vadd.f32 %v3084, %v3506
      %v3523 = vadd.f32 %v3085, %v3507
      %v3524 = vadd.f32 %v3086, %v3508
      %v3525 = vadd.f32 %v3087, %v3509
      %v3526 = vadd.f32 %v3088, %v3510
      %v3527 = vadd.f32 %v3089, %v3511
      %v3528 = vadd.f32 %v3090, %v3512
      %v3529 = vadd.f32 %v3091, %v3513
      %v3530 = vadd.f32 %v3092, %v3514
      %v3531 = vadd.f32 %v3093, %v3515
      %v3532 = vadd.f32 %v3094, %v3516
      %v3533 = vadd.f32 %v3095, %v3517
      %v3534 = vadd.f32 %v3096, %v3518
      %v3535 = vadd.f32 %v3097, %v3519
      %v3536 = vadd.f32 %v3098, %v3520
      %v3537 = vadd.f32 %v3099, %v3521
      %v3538 = vld [vmem:[%s4] sm:$0x8]
      %v3540 = vpack.i.b16 %v3538, %v3538
      %v3542 = vlaneseq
      %v3543 = vshrl.u32 %v3542, 7
      %v3544 = vsub.s32 3, %v3543
      %v3545 = vrot.slane %v3540, %v3544
      %v3546 = vmul.bf16 %v802, %v3545
      %v3547 = vmul.bf16 %v803, %v3545
      %v3548 = vmul.bf16 %v804, %v3545
      %v3549 = vmul.bf16 %v805, %v3545
      %v3550 = vmul.bf16 %v806, %v3545
      %v3551 = vmul.bf16 %v807, %v3545
      %v3552 = vmul.bf16 %v808, %v3545
      %v3553 = vmul.bf16 %v809, %v3545
      %v3555 = vsel %vm842, %v3546, 0
      %v3558 = vsel %vm842, %v3547, 0
      %v3561 = vsel %vm842, %v3548, 0
      %v3564 = vsel %vm842, %v3549, 0
      %v3567 = vsel %vm842, %v3550, 0
      %v3570 = vsel %vm842, %v3551, 0
      %v3573 = vsel %vm842, %v3552, 0
      %v3576 = vsel %vm842, %v3553, 0
      %3578 = vmatprep.subr.bf16.mxu0 0
      %3579 = vmatpush1.bf16.xpose.msra.mxu0 %v924
      %3580 = vmatprep.subr.bf16.mxu0 0
      %3581 = vmatpush1.bf16.xpose.msra.mxu0 %v927
      %3582 = vmatprep.subr.bf16.mxu0 0
      %3583 = vmatpush1.bf16.xpose.msra.mxu0 %v930
      %3584 = vmatprep.subr.bf16.mxu0 0
      %3585 = vmatpush1.bf16.xpose.msra.mxu0 %v933
      %3586 = vmatprep.subr.bf16.mxu0 0
      %3587 = vmatpush1.bf16.xpose.msra.mxu0 %v936
      %3588 = vmatprep.subr.bf16.mxu0 0
      %3589 = vmatpush1.bf16.xpose.msra.mxu0 %v939
      %3590 = vmatprep.subr.bf16.mxu0 0
      %3591 = vmatpush1.bf16.xpose.msra.mxu0 %v942
      %3592 = vmatprep.subr.bf16.mxu0 0
      %3593 = vmatpush1.bf16.xpose.msra.mxu0 %v945
      %3594 = vmatprep.subr.bf16.mxu0 0
      %3595 = vmatpush1.bf16.xpose.msra.mxu0 0
      %3596 = vmatprep.subr.bf16.mxu0 0
      %3597 = vmatpush1.bf16.xpose.msra.mxu0 0
      %3598 = vmatprep.subr.bf16.mxu0 0
      %3599 = vmatpush1.bf16.xpose.msra.mxu0 0
      %3600 = vmatprep.subr.bf16.mxu0 0
      %3601 = vmatpush1.bf16.xpose.msra.mxu0 0
      %3602 = vmatprep.subr.bf16.mxu0 0
      %3603 = vmatpush1.bf16.xpose.msra.mxu0 0
      %3604 = vmatprep.subr.bf16.mxu0 0
      %3605 = vmatpush1.bf16.xpose.msra.mxu0 0
      %3606 = vmatprep.subr.bf16.mxu0 0
      %3607 = vmatpush1.bf16.xpose.msra.mxu0 0
      %3608 = vmatprep.subr.bf16.mxu0 0
      %3609 = vmatpush1.bf16.xpose.msra.mxu0 0
      %3610 = vmatprep.mubr.bf16.mxu0 0
      %3611 = vmatmul.mubr.bf16.gmra.mrb[0].mxu0 %v3555
      %v3612 = vpop.f32.mrb[0].mxu0
      %v3613 = vadd.f32 0.0, %v3612
      %v3614 = vpop.f32.mrb[0].mxu0
      %v3615 = vpop.f32.mrb[0].mxu0
      %v3616 = vadd.f32 0.0, %v3615
      %v3617 = vpop.f32.mrb[0].mxu0
      %3618 = vmatprep.mubr.bf16.mxu0 0
      %3619 = vmatmul.mubr.bf16.gmra.mrb[0].mxu0 %v3558
      %v3620 = vpop.f32.mrb[0].mxu0
      %v3621 = vadd.f32 0.0, %v3620
      %v3622 = vpop.f32.mrb[0].mxu0
      %v3623 = vpop.f32.mrb[0].mxu0
      %v3624 = vadd.f32 0.0, %v3623
      %v3625 = vpop.f32.mrb[0].mxu0
      %3626 = vmatprep.mubr.bf16.mxu0 0
      %3627 = vmatmul.mubr.bf16.gmra.mrb[0].mxu0 %v3561
      %v3628 = vpop.f32.mrb[0].mxu0
      %v3629 = vadd.f32 0.0, %v3628
      %v3630 = vpop.f32.mrb[0].mxu0
      %v3631 = vpop.f32.mrb[0].mxu0
      %v3632 = vadd.f32 0.0, %v3631
      %v3633 = vpop.f32.mrb[0].mxu0
      %3634 = vmatprep.mubr.bf16.mxu0 0
      %3635 = vmatmul.mubr.bf16.gmra.mrb[0].mxu0 %v3564
      %v3636 = vpop.f32.mrb[0].mxu0
      %v3637 = vadd.f32 0.0, %v3636
      %v3638 = vpop.f32.mrb[0].mxu0
      %v3639 = vpop.f32.mrb[0].mxu0
      %v3640 = vadd.f32 0.0, %v3639
      %v3641 = vpop.f32.mrb[0].mxu0
      %3642 = vmatprep.mubr.bf16.mxu0 0
      %3643 = vmatmul.mubr.bf16.gmra.mrb[0].mxu0 %v3567
      %v3644 = vpop.f32.mrb[0].mxu0
      %v3645 = vadd.f32 0.0, %v3644
      %v3646 = vpop.f32.mrb[0].mxu0
      %v3647 = vpop.f32.mrb[0].mxu0
      %v3648 = vadd.f32 0.0, %v3647
      %v3649 = vpop.f32.mrb[0].mxu0
      %3650 = vmatprep.mubr.bf16.mxu0 0
      %3651 = vmatmul.mubr.bf16.gmra.mrb[0].mxu0 %v3570
      %v3652 = vpop.f32.mrb[0].mxu0
      %v3653 = vadd.f32 0.0, %v3652
      %v3654 = vpop.f32.mrb[0].mxu0
      %v3655 = vpop.f32.mrb[0].mxu0
      %v3656 = vadd.f32 0.0, %v3655
      %v3657 = vpop.f32.mrb[0].mxu0
      %3658 = vmatprep.mubr.bf16.mxu0 0
      %3659 = vmatmul.mubr.bf16.gmra.mrb[0].mxu0 %v3573
      %v3660 = vpop.f32.mrb[0].mxu0
      %v3661 = vadd.f32 0.0, %v3660
      %v3662 = vpop.f32.mrb[0].mxu0
      %v3663 = vpop.f32.mrb[0].mxu0
      %v3664 = vadd.f32 0.0, %v3663
      %v3665 = vpop.f32.mrb[0].mxu0
      %3666 = vmatprep.mubr.bf16.mxu0 0
      %3667 = vmatmul.mubr.bf16.gmra.mrb[0].mxu0 %v3576
      %v3668 = vpop.f32.mrb[0].mxu0
      %v3669 = vadd.f32 0.0, %v3668
      %v3670 = vpop.f32.mrb[0].mxu0
      %v3671 = vpop.f32.mrb[0].mxu0
      %v3672 = vadd.f32 0.0, %v3671
      %v3673 = vpop.f32.mrb[0].mxu0
      %3674 = vdwg.mxu0
      %v3675 = vsel %vm882, %v3613, -1e+30
      %v3676 = vsel %vm882, %v3616, -1e+30
      %v3677 = vsel %vm882, %v3621, -1e+30
      %v3678 = vsel %vm882, %v3624, -1e+30
      %v3679 = vsel %vm882, %v3629, -1e+30
      %v3680 = vsel %vm882, %v3632, -1e+30
      %v3681 = vsel %vm882, %v3637, -1e+30
      %v3682 = vsel %vm882, %v3640, -1e+30
      %v3683 = vsel %vm882, %v3645, -1e+30
      %v3684 = vsel %vm882, %v3648, -1e+30
      %v3685 = vsel %vm882, %v3653, -1e+30
      %v3686 = vsel %vm882, %v3656, -1e+30
      %v3687 = vsel %vm882, %v3661, -1e+30
      %v3688 = vsel %vm882, %v3664, -1e+30
      %v3689 = vsel %vm882, %v3669, -1e+30
      %v3690 = vsel %vm882, %v3672, -1e+30
      %3691 = vmax.xlane.f32.xlu0 %v3675
      %v3692 = vpop.xlane.xlu0 %3691
      %3693 = vmax.xlane.f32.xlu0 %v3676
      %v3694 = vpop.xlane.xlu0 %3693
      %3695 = vmax.xlane.f32.xlu0 %v3677
      %v3696 = vpop.xlane.xlu0 %3695
      %3697 = vmax.xlane.f32.xlu0 %v3678
      %v3698 = vpop.xlane.xlu0 %3697
      %3699 = vmax.xlane.f32.xlu0 %v3679
      %v3700 = vpop.xlane.xlu0 %3699
      %3701 = vmax.xlane.f32.xlu0 %v3680
      %v3702 = vpop.xlane.xlu0 %3701
      %3703 = vmax.xlane.f32.xlu0 %v3681
      %v3704 = vpop.xlane.xlu0 %3703
      %3705 = vmax.xlane.f32.xlu0 %v3682
      %v3706 = vpop.xlane.xlu0 %3705
      %3707 = vmax.xlane.f32.xlu0 %v3683
      %v3708 = vpop.xlane.xlu0 %3707
      %3709 = vmax.xlane.f32.xlu0 %v3684
      %v3710 = vpop.xlane.xlu0 %3709
      %3711 = vmax.xlane.f32.xlu0 %v3685
      %v3712 = vpop.xlane.xlu0 %3711
      %3713 = vmax.xlane.f32.xlu0 %v3686
      %v3714 = vpop.xlane.xlu0 %3713
      %3715 = vmax.xlane.f32.xlu0 %v3687
      %v3716 = vpop.xlane.xlu0 %3715
      %3717 = vmax.xlane.f32.xlu0 %v3688
      %v3718 = vpop.xlane.xlu0 %3717
      %3719 = vmax.xlane.f32.xlu0 %v3689
      %v3720 = vpop.xlane.xlu0 %3719
      %3721 = vmax.xlane.f32.xlu0 %v3690
      %v3722 = vpop.xlane.xlu0 %3721
      %v3723 = vsub.f32 %v3675, %v3692
      %v3724 = vsub.f32 %v3676, %v3694
      %v3725 = vsub.f32 %v3677, %v3696
      %v3726 = vsub.f32 %v3678, %v3698
      %v3727 = vsub.f32 %v3679, %v3700
      %v3728 = vsub.f32 %v3680, %v3702
      %v3729 = vsub.f32 %v3681, %v3704
      %v3730 = vsub.f32 %v3682, %v3706
      %v3731 = vsub.f32 %v3683, %v3708
      %v3732 = vsub.f32 %v3684, %v3710
      %v3733 = vsub.f32 %v3685, %v3712
      %v3734 = vsub.f32 %v3686, %v3714
      %v3735 = vsub.f32 %v3687, %v3716
      %v3736 = vsub.f32 %v3688, %v3718
      %v3737 = vsub.f32 %v3689, %v3720
      %v3738 = vsub.f32 %v3690, %v3722
      %v3739 = vmul.f32 %v3723, 1.442695
      %v3740 = vpow.pop %v3739
      %v3741 = vmul.f32 %v3724, 1.442695
      %v3742 = vpow.pop %v3741
      %v3743 = vmul.f32 %v3725, 1.442695
      %v3744 = vpow.pop %v3743
      %v3745 = vmul.f32 %v3726, 1.442695
      %v3746 = vpow.pop %v3745
      %v3747 = vmul.f32 %v3727, 1.442695
      %v3748 = vpow.pop %v3747
      %v3749 = vmul.f32 %v3728, 1.442695
      %v3750 = vpow.pop %v3749
      %v3751 = vmul.f32 %v3729, 1.442695
      %v3752 = vpow.pop %v3751
      %v3753 = vmul.f32 %v3730, 1.442695
      %v3754 = vpow.pop %v3753
      %v3755 = vmul.f32 %v3731, 1.442695
      %v3756 = vpow.pop %v3755
      %v3757 = vmul.f32 %v3732, 1.442695
      %v3758 = vpow.pop %v3757
      %v3759 = vmul.f32 %v3733, 1.442695
      %v3760 = vpow.pop %v3759
      %v3761 = vmul.f32 %v3734, 1.442695
      %v3762 = vpow.pop %v3761
      %v3763 = vmul.f32 %v3735, 1.442695
      %v3764 = vpow.pop %v3763
      %v3765 = vmul.f32 %v3736, 1.442695
      %v3766 = vpow.pop %v3765
      %v3767 = vmul.f32 %v3737, 1.442695
      %v3768 = vpow.pop %v3767
      %v3769 = vmul.f32 %v3738, 1.442695
      %v3770 = vpow.pop %v3769
      %3771 = vadd.xlane.f32.xlu0 %v3740
      %v3772 = vpop.xlane.xlu0 %3771
      %3773 = vadd.xlane.f32.xlu0 %v3742
      %v3774 = vpop.xlane.xlu0 %3773
      %3775 = vadd.xlane.f32.xlu0 %v3744
      %v3776 = vpop.xlane.xlu0 %3775
      %3777 = vadd.xlane.f32.xlu0 %v3746
      %v3778 = vpop.xlane.xlu0 %3777
      %3779 = vadd.xlane.f32.xlu0 %v3748
      %v3780 = vpop.xlane.xlu0 %3779
      %3781 = vadd.xlane.f32.xlu0 %v3750
      %v3782 = vpop.xlane.xlu0 %3781
      %3783 = vadd.xlane.f32.xlu0 %v3752
      %v3784 = vpop.xlane.xlu0 %3783
      %3785 = vadd.xlane.f32.xlu0 %v3754
      %v3786 = vpop.xlane.xlu0 %3785
      %3787 = vadd.xlane.f32.xlu0 %v3756
      %v3788 = vpop.xlane.xlu0 %3787
      %3789 = vadd.xlane.f32.xlu0 %v3758
      %v3790 = vpop.xlane.xlu0 %3789
      %3791 = vadd.xlane.f32.xlu0 %v3760
      %v3792 = vpop.xlane.xlu0 %3791
      %3793 = vadd.xlane.f32.xlu0 %v3762
      %v3794 = vpop.xlane.xlu0 %3793
      %3795 = vadd.xlane.f32.xlu0 %v3764
      %v3796 = vpop.xlane.xlu0 %3795
      %3797 = vadd.xlane.f32.xlu0 %v3766
      %v3798 = vpop.xlane.xlu0 %3797
      %3799 = vadd.xlane.f32.xlu0 %v3768
      %v3800 = vpop.xlane.xlu0 %3799
      %3801 = vadd.xlane.f32.xlu0 %v3770
      %v3802 = vpop.xlane.xlu0 %3801
      %v3803 = vrcp.pop %v3772
      %v3804 = vrcp.pop %v3774
      %v3805 = vrcp.pop %v3776
      %v3806 = vrcp.pop %v3778
      %v3807 = vrcp.pop %v3780
      %v3808 = vrcp.pop %v3782
      %v3809 = vrcp.pop %v3784
      %v3810 = vrcp.pop %v3786
      %v3811 = vrcp.pop %v3788
      %v3812 = vrcp.pop %v3790
      %v3813 = vrcp.pop %v3792
      %v3814 = vrcp.pop %v3794
      %v3815 = vrcp.pop %v3796
      %v3816 = vrcp.pop %v3798
      %v3817 = vrcp.pop %v3800
      %v3818 = vrcp.pop %v3802
      %v3819 = vmul.f32 %v3740, %v3803
      %v3820 = vmul.f32 %v3742, %v3804
      %v3821 = vmul.f32 %v3744, %v3805
      %v3822 = vmul.f32 %v3746, %v3806
      %v3823 = vmul.f32 %v3748, %v3807
      %v3824 = vmul.f32 %v3750, %v3808
      %v3825 = vmul.f32 %v3752, %v3809
      %v3826 = vmul.f32 %v3754, %v3810
      %v3827 = vmul.f32 %v3756, %v3811
      %v3828 = vmul.f32 %v3758, %v3812
      %v3829 = vmul.f32 %v3760, %v3813
      %v3830 = vmul.f32 %v3762, %v3814
      %v3831 = vmul.f32 %v3764, %v3815
      %v3832 = vmul.f32 %v3766, %v3816
      %v3833 = vmul.f32 %v3768, %v3817
      %v3834 = vmul.f32 %v3770, %v3818
      %v3835 = vpack.c.bf16 %v3820, %v3819
      %v3836 = vpack.c.bf16 %v3822, %v3821
      %v3837 = vpack.c.bf16 %v3824, %v3823
      %v3838 = vpack.c.bf16 %v3826, %v3825
      %v3839 = vpack.c.bf16 %v3828, %v3827
      %v3840 = vpack.c.bf16 %v3830, %v3829
      %v3841 = vpack.c.bf16 %v3832, %v3831
      %v3842 = vpack.c.bf16 %v3834, %v3833
      %3843 = vmatprep.subr.bf16.mxu0 0
      %3844 = vmatpush1.bf16.msra.mxu0 %v818
      %3845 = vmatprep.subr.bf16.mxu0 0
      %3846 = vmatpush1.bf16.msra.mxu0 %v819
      %3847 = vmatprep.subr.bf16.mxu0 0
      %3848 = vmatpush1.bf16.msra.mxu0 %v820
      %3849 = vmatprep.subr.bf16.mxu0 0
      %3850 = vmatpush1.bf16.msra.mxu0 %v821
      %3851 = vmatprep.subr.bf16.mxu0 0
      %3852 = vmatpush1.bf16.msra.mxu0 %v822
      %3853 = vmatprep.subr.bf16.mxu0 0
      %3854 = vmatpush1.bf16.msra.mxu0 %v823
      %3855 = vmatprep.subr.bf16.mxu0 0
      %3856 = vmatpush1.bf16.msra.mxu0 %v824
      %3857 = vmatprep.subr.bf16.mxu0 0
      %3858 = vmatpush1.bf16.msra.mxu0 %v825
      %3859 = vmatprep.subr.bf16.mxu0 0
      %3860 = vmatpush1.bf16.msra.mxu0 0
      %3861 = vmatprep.subr.bf16.mxu0 0
      %3862 = vmatpush1.bf16.msra.mxu0 0
      %3863 = vmatprep.subr.bf16.mxu0 0
      %3864 = vmatpush1.bf16.msra.mxu0 0
      %3865 = vmatprep.subr.bf16.mxu0 0
      %3866 = vmatpush1.bf16.msra.mxu0 0
      %3867 = vmatprep.subr.bf16.mxu0 0
      %3868 = vmatpush1.bf16.msra.mxu0 0
      %3869 = vmatprep.subr.bf16.mxu0 0
      %3870 = vmatpush1.bf16.msra.mxu0 0
      %3871 = vmatprep.subr.bf16.mxu0 0
      %3872 = vmatpush1.bf16.msra.mxu0 0
      %3873 = vmatprep.subr.bf16.mxu0 0
      %3874 = vmatpush1.bf16.msra.mxu0 0
      %3875 = vmatprep.mubr.bf16.mxu0 0
      %3876 = vmatmul.mubr.bf16.gmra.mrb[0].mxu0 %v3835
      %v3877 = vpop.f32.mrb[0].mxu0
      %v3878 = vadd.f32 0.0, %v3877
      %v3879 = vpop.f32.mrb[0].mxu0
      %v3880 = vpop.f32.mrb[0].mxu0
      %v3881 = vadd.f32 0.0, %v3880
      %v3882 = vpop.f32.mrb[0].mxu0
      %3883 = vmatprep.mubr.bf16.mxu0 0
      %3884 = vmatmul.mubr.bf16.gmra.mrb[0].mxu0 %v3836
      %v3885 = vpop.f32.mrb[0].mxu0
      %v3886 = vadd.f32 0.0, %v3885
      %v3887 = vpop.f32.mrb[0].mxu0
      %v3888 = vpop.f32.mrb[0].mxu0
      %v3889 = vadd.f32 0.0, %v3888
      %v3890 = vpop.f32.mrb[0].mxu0
      %3891 = vmatprep.mubr.bf16.mxu0 0
      %3892 = vmatmul.mubr.bf16.gmra.mrb[0].mxu0 %v3837
      %v3893 = vpop.f32.mrb[0].mxu0
      %v3894 = vadd.f32 0.0, %v3893
      %v3895 = vpop.f32.mrb[0].mxu0
      %v3896 = vpop.f32.mrb[0].mxu0
      %v3897 = vadd.f32 0.0, %v3896
      %v3898 = vpop.f32.mrb[0].mxu0
      %3899 = vmatprep.mubr.bf16.mxu0 0
      %3900 = vmatmul.mubr.bf16.gmra.mrb[0].mxu0 %v3838
      %v3901 = vpop.f32.mrb[0].mxu0
      %v3902 = vadd.f32 0.0, %v3901
      %v3903 = vpop.f32.mrb[0].mxu0
      %v3904 = vpop.f32.mrb[0].mxu0
      %v3905 = vadd.f32 0.0, %v3904
      %v3906 = vpop.f32.mrb[0].mxu0
      %3907 = vmatprep.mubr.bf16.mxu0 0
      %3908 = vmatmul.mubr.bf16.gmra.mrb[0].mxu0 %v3839
      %v3909 = vpop.f32.mrb[0].mxu0
      %v3910 = vadd.f32 0.0, %v3909
      %v3911 = vpop.f32.mrb[0].mxu0
      %v3912 = vpop.f32.mrb[0].mxu0
      %v3913 = vadd.f32 0.0, %v3912
      %v3914 = vpop.f32.mrb[0].mxu0
      %3915 = vmatprep.mubr.bf16.mxu0 0
      %3916 = vmatmul.mubr.bf16.gmra.mrb[0].mxu0 %v3840
      %v3917 = vpop.f32.mrb[0].mxu0
      %v3918 = vadd.f32 0.0, %v3917
      %v3919 = vpop.f32.mrb[0].mxu0
      %v3920 = vpop.f32.mrb[0].mxu0
      %v3921 = vadd.f32 0.0, %v3920
      %v3922 = vpop.f32.mrb[0].mxu0
      %3923 = vmatprep.mubr.bf16.mxu0 0
      %3924 = vmatmul.mubr.bf16.gmra.mrb[0].mxu0 %v3841
      %v3925 = vpop.f32.mrb[0].mxu0
      %v3926 = vadd.f32 0.0, %v3925
      %v3927 = vpop.f32.mrb[0].mxu0
      %v3928 = vpop.f32.mrb[0].mxu0
      %v3929 = vadd.f32 0.0, %v3928
      %v3930 = vpop.f32.mrb[0].mxu0
      %3931 = vmatprep.mubr.bf16.mxu0 0
      %3932 = vmatmul.mubr.bf16.gmra.mrb[0].mxu0 %v3842
      %v3933 = vpop.f32.mrb[0].mxu0
      %v3934 = vadd.f32 0.0, %v3933
      %v3935 = vpop.f32.mrb[0].mxu0
      %v3936 = vpop.f32.mrb[0].mxu0
      %v3937 = vadd.f32 0.0, %v3936
      %v3938 = vpop.f32.mrb[0].mxu0
      %3939 = vdwg.mxu0
      %v3940 = vld [vmem:[%s5 + $0x6] sm:$0x1]
      %v3941 = vlaneseq
      %v3942 = vshrl.u32 %v3941, 7
      %v3943 = vsub.s32 0, %v3942
      %v3944 = vrot.slane %v3940, %v3943
      %v3945 = vmul.f32 %v3878, %v3944
      %v3946 = vmul.f32 %v3881, %v3944
      %v3947 = vmul.f32 %v3886, %v3944
      %v3948 = vmul.f32 %v3889, %v3944
      %v3949 = vmul.f32 %v3894, %v3944
      %v3950 = vmul.f32 %v3897, %v3944
      %v3951 = vmul.f32 %v3902, %v3944
      %v3952 = vmul.f32 %v3905, %v3944
      %v3953 = vmul.f32 %v3910, %v3944
      %v3954 = vmul.f32 %v3913, %v3944
      %v3955 = vmul.f32 %v3918, %v3944
      %v3956 = vmul.f32 %v3921, %v3944
      %v3957 = vmul.f32 %v3926, %v3944
      %v3958 = vmul.f32 %v3929, %v3944
      %v3959 = vmul.f32 %v3934, %v3944
      %v3960 = vmul.f32 %v3937, %v3944
      %v3961 = vadd.f32 %v3522, %v3945
      %v3962 = vadd.f32 %v3523, %v3946
      %v3963 = vadd.f32 %v3524, %v3947
      %v3964 = vadd.f32 %v3525, %v3948
      %v3965 = vadd.f32 %v3526, %v3949
      %v3966 = vadd.f32 %v3527, %v3950
      %v3967 = vadd.f32 %v3528, %v3951
      %v3968 = vadd.f32 %v3529, %v3952
      %v3969 = vadd.f32 %v3530, %v3953
      %v3970 = vadd.f32 %v3531, %v3954
      %v3971 = vadd.f32 %v3532, %v3955
      %v3972 = vadd.f32 %v3533, %v3956
      %v3973 = vadd.f32 %v3534, %v3957
      %v3974 = vadd.f32 %v3535, %v3958
      %v3975 = vadd.f32 %v3536, %v3959
      %v3976 = vadd.f32 %v3537, %v3960
      %v3977 = vshrl.u32 %v3538, 16
      %v3978 = vpack.i.b16 %v3977, %v3977
      %v3980 = vlaneseq
      %v3981 = vshrl.u32 %v3980, 7
      %v3982 = vsub.s32 3, %v3981
      %v3983 = vrot.slane %v3978, %v3982
      %v3984 = vmul.bf16 %v802, %v3983
      %v3985 = vmul.bf16 %v803, %v3983
      %v3986 = vmul.bf16 %v804, %v3983
      %v3987 = vmul.bf16 %v805, %v3983
      %v3988 = vmul.bf16 %v806, %v3983
      %v3989 = vmul.bf16 %v807, %v3983
      %v3990 = vmul.bf16 %v808, %v3983
      %v3991 = vmul.bf16 %v809, %v3983
      %v3993 = vsel %vm842, %v3984, 0
      %v3996 = vsel %vm842, %v3985, 0
      %v3999 = vsel %vm842, %v3986, 0
      %v4002 = vsel %vm842, %v3987, 0
      %v4005 = vsel %vm842, %v3988, 0
      %v4008 = vsel %vm842, %v3989, 0
      %v4011 = vsel %vm842, %v3990, 0
      %v4014 = vsel %vm842, %v3991, 0
      %4016 = vmatprep.subr.bf16.mxu0 0
      %4017 = vmatpush1.bf16.xpose.msra.mxu0 %v924
      %4018 = vmatprep.subr.bf16.mxu0 0
      %4019 = vmatpush1.bf16.xpose.msra.mxu0 %v927
      %4020 = vmatprep.subr.bf16.mxu0 0
      %4021 = vmatpush1.bf16.xpose.msra.mxu0 %v930
      %4022 = vmatprep.subr.bf16.mxu0 0
      %4023 = vmatpush1.bf16.xpose.msra.mxu0 %v933
      %4024 = vmatprep.subr.bf16.mxu0 0
      %4025 = vmatpush1.bf16.xpose.msra.mxu0 %v936
      %4026 = vmatprep.subr.bf16.mxu0 0
      %4027 = vmatpush1.bf16.xpose.msra.mxu0 %v939
      %4028 = vmatprep.subr.bf16.mxu0 0
      %4029 = vmatpush1.bf16.xpose.msra.mxu0 %v942
      %4030 = vmatprep.subr.bf16.mxu0 0
      %4031 = vmatpush1.bf16.xpose.msra.mxu0 %v945
      %4032 = vmatprep.subr.bf16.mxu0 0
      %4033 = vmatpush1.bf16.xpose.msra.mxu0 0
      %4034 = vmatprep.subr.bf16.mxu0 0
      %4035 = vmatpush1.bf16.xpose.msra.mxu0 0
      %4036 = vmatprep.subr.bf16.mxu0 0
      %4037 = vmatpush1.bf16.xpose.msra.mxu0 0
      %4038 = vmatprep.subr.bf16.mxu0 0
      %4039 = vmatpush1.bf16.xpose.msra.mxu0 0
      %4040 = vmatprep.subr.bf16.mxu0 0
      %4041 = vmatpush1.bf16.xpose.msra.mxu0 0
      %4042 = vmatprep.subr.bf16.mxu0 0
      %4043 = vmatpush1.bf16.xpose.msra.mxu0 0
      %4044 = vmatprep.subr.bf16.mxu0 0
      %4045 = vmatpush1.bf16.xpose.msra.mxu0 0
      %4046 = vmatprep.subr.bf16.mxu0 0
      %4047 = vmatpush1.bf16.xpose.msra.mxu0 0
      %4048 = vmatprep.mubr.bf16.mxu0 0
      %4049 = vmatmul.mubr.bf16.gmra.mrb[0].mxu0 %v3993
      %v4050 = vpop.f32.mrb[0].mxu0
      %v4051 = vadd.f32 0.0, %v4050
      %v4052 = vpop.f32.mrb[0].mxu0
      %v4053 = vpop.f32.mrb[0].mxu0
      %v4054 = vadd.f32 0.0, %v4053
      %v4055 = vpop.f32.mrb[0].mxu0
      %4056 = vmatprep.mubr.bf16.mxu0 0
      %4057 = vmatmul.mubr.bf16.gmra.mrb[0].mxu0 %v3996
      %v4058 = vpop.f32.mrb[0].mxu0
      %v4059 = vadd.f32 0.0, %v4058
      %v4060 = vpop.f32.mrb[0].mxu0
      %v4061 = vpop.f32.mrb[0].mxu0
      %v4062 = vadd.f32 0.0, %v4061
      %v4063 = vpop.f32.mrb[0].mxu0
      %4064 = vmatprep.mubr.bf16.mxu0 0
      %4065 = vmatmul.mubr.bf16.gmra.mrb[0].mxu0 %v3999
      %v4066 = vpop.f32.mrb[0].mxu0
      %v4067 = vadd.f32 0.0, %v4066
      %v4068 = vpop.f32.mrb[0].mxu0
      %v4069 = vpop.f32.mrb[0].mxu0
      %v4070 = vadd.f32 0.0, %v4069
      %v4071 = vpop.f32.mrb[0].mxu0
      %4072 = vmatprep.mubr.bf16.mxu0 0
      %4073 = vmatmul.mubr.bf16.gmra.mrb[0].mxu0 %v4002
      %v4074 = vpop.f32.mrb[0].mxu0
      %v4075 = vadd.f32 0.0, %v4074
      %v4076 = vpop.f32.mrb[0].mxu0
      %v4077 = vpop.f32.mrb[0].mxu0
      %v4078 = vadd.f32 0.0, %v4077
      %v4079 = vpop.f32.mrb[0].mxu0
      %4080 = vmatprep.mubr.bf16.mxu0 0
      %4081 = vmatmul.mubr.bf16.gmra.mrb[0].mxu0 %v4005
      %v4082 = vpop.f32.mrb[0].mxu0
      %v4083 = vadd.f32 0.0, %v4082
      %v4084 = vpop.f32.mrb[0].mxu0
      %v4085 = vpop.f32.mrb[0].mxu0
      %v4086 = vadd.f32 0.0, %v4085
      %v4087 = vpop.f32.mrb[0].mxu0
      %4088 = vmatprep.mubr.bf16.mxu0 0
      %4089 = vmatmul.mubr.bf16.gmra.mrb[0].mxu0 %v4008
      %v4090 = vpop.f32.mrb[0].mxu0
      %v4091 = vadd.f32 0.0, %v4090
      %v4092 = vpop.f32.mrb[0].mxu0
      %v4093 = vpop.f32.mrb[0].mxu0
      %v4094 = vadd.f32 0.0, %v4093
      %v4095 = vpop.f32.mrb[0].mxu0
      %4096 = vmatprep.mubr.bf16.mxu0 0
      %4097 = vmatmul.mubr.bf16.gmra.mrb[0].mxu0 %v4011
      %v4098 = vpop.f32.mrb[0].mxu0
      %v4099 = vadd.f32 0.0, %v4098
      %v4100 = vpop.f32.mrb[0].mxu0
      %v4101 = vpop.f32.mrb[0].mxu0
      %v4102 = vadd.f32 0.0, %v4101
      %v4103 = vpop.f32.mrb[0].mxu0
      %4104 = vmatprep.mubr.bf16.mxu0 0
      %4105 = vmatmul.mubr.bf16.gmra.mrb[0].mxu0 %v4014
      %v4106 = vpop.f32.mrb[0].mxu0
      %v4107 = vadd.f32 0.0, %v4106
      %v4108 = vpop.f32.mrb[0].mxu0
      %v4109 = vpop.f32.mrb[0].mxu0
      %v4110 = vadd.f32 0.0, %v4109
      %v4111 = vpop.f32.mrb[0].mxu0
      %4112 = vdwg.mxu0
      %v4113 = vsel %vm882, %v4051, -1e+30
      %v4114 = vsel %vm882, %v4054, -1e+30
      %v4115 = vsel %vm882, %v4059, -1e+30
      %v4116 = vsel %vm882, %v4062, -1e+30
      %v4117 = vsel %vm882, %v4067, -1e+30
      %v4118 = vsel %vm882, %v4070, -1e+30
      %v4119 = vsel %vm882, %v4075, -1e+30
      %v4120 = vsel %vm882, %v4078, -1e+30
      %v4121 = vsel %vm882, %v4083, -1e+30
      %v4122 = vsel %vm882, %v4086, -1e+30
      %v4123 = vsel %vm882, %v4091, -1e+30
      %v4124 = vsel %vm882, %v4094, -1e+30
      %v4125 = vsel %vm882, %v4099, -1e+30
      %v4126 = vsel %vm882, %v4102, -1e+30
      %v4127 = vsel %vm882, %v4107, -1e+30
      %v4128 = vsel %vm882, %v4110, -1e+30
      %4129 = vmax.xlane.f32.xlu0 %v4113
      %v4130 = vpop.xlane.xlu0 %4129
      %4131 = vmax.xlane.f32.xlu0 %v4114
      %v4132 = vpop.xlane.xlu0 %4131
      %4133 = vmax.xlane.f32.xlu0 %v4115
      %v4134 = vpop.xlane.xlu0 %4133
      %4135 = vmax.xlane.f32.xlu0 %v4116
      %v4136 = vpop.xlane.xlu0 %4135
      %4137 = vmax.xlane.f32.xlu0 %v4117
      %v4138 = vpop.xlane.xlu0 %4137
      %4139 = vmax.xlane.f32.xlu0 %v4118
      %v4140 = vpop.xlane.xlu0 %4139
      %4141 = vmax.xlane.f32.xlu0 %v4119
      %v4142 = vpop.xlane.xlu0 %4141
      %4143 = vmax.xlane.f32.xlu0 %v4120
      %v4144 = vpop.xlane.xlu0 %4143
      %4145 = vmax.xlane.f32.xlu0 %v4121
      %v4146 = vpop.xlane.xlu0 %4145
      %4147 = vmax.xlane.f32.xlu0 %v4122
      %v4148 = vpop.xlane.xlu0 %4147
      %4149 = vmax.xlane.f32.xlu0 %v4123
      %v4150 = vpop.xlane.xlu0 %4149
      %4151 = vmax.xlane.f32.xlu0 %v4124
      %v4152 = vpop.xlane.xlu0 %4151
      %4153 = vmax.xlane.f32.xlu0 %v4125
      %v4154 = vpop.xlane.xlu0 %4153
      %4155 = vmax.xlane.f32.xlu0 %v4126
      %v4156 = vpop.xlane.xlu0 %4155
      %4157 = vmax.xlane.f32.xlu0 %v4127
      %v4158 = vpop.xlane.xlu0 %4157
      %4159 = vmax.xlane.f32.xlu0 %v4128
      %v4160 = vpop.xlane.xlu0 %4159
      %v4161 = vsub.f32 %v4113, %v4130
      %v4162 = vsub.f32 %v4114, %v4132
      %v4163 = vsub.f32 %v4115, %v4134
      %v4164 = vsub.f32 %v4116, %v4136
      %v4165 = vsub.f32 %v4117, %v4138
      %v4166 = vsub.f32 %v4118, %v4140
      %v4167 = vsub.f32 %v4119, %v4142
      %v4168 = vsub.f32 %v4120, %v4144
      %v4169 = vsub.f32 %v4121, %v4146
      %v4170 = vsub.f32 %v4122, %v4148
      %v4171 = vsub.f32 %v4123, %v4150
      %v4172 = vsub.f32 %v4124, %v4152
      %v4173 = vsub.f32 %v4125, %v4154
      %v4174 = vsub.f32 %v4126, %v4156
      %v4175 = vsub.f32 %v4127, %v4158
      %v4176 = vsub.f32 %v4128, %v4160
      %v4177 = vmul.f32 %v4161, 1.442695
      %v4178 = vpow.pop %v4177
      %v4179 = vmul.f32 %v4162, 1.442695
      %v4180 = vpow.pop %v4179
      %v4181 = vmul.f32 %v4163, 1.442695
      %v4182 = vpow.pop %v4181
      %v4183 = vmul.f32 %v4164, 1.442695
      %v4184 = vpow.pop %v4183
      %v4185 = vmul.f32 %v4165, 1.442695
      %v4186 = vpow.pop %v4185
      %v4187 = vmul.f32 %v4166, 1.442695
      %v4188 = vpow.pop %v4187
      %v4189 = vmul.f32 %v4167, 1.442695
      %v4190 = vpow.pop %v4189
      %v4191 = vmul.f32 %v4168, 1.442695
      %v4192 = vpow.pop %v4191
      %v4193 = vmul.f32 %v4169, 1.442695
      %v4194 = vpow.pop %v4193
      %v4195 = vmul.f32 %v4170, 1.442695
      %v4196 = vpow.pop %v4195
      %v4197 = vmul.f32 %v4171, 1.442695
      %v4198 = vpow.pop %v4197
      %v4199 = vmul.f32 %v4172, 1.442695
      %v4200 = vpow.pop %v4199
      %v4201 = vmul.f32 %v4173, 1.442695
      %v4202 = vpow.pop %v4201
      %v4203 = vmul.f32 %v4174, 1.442695
      %v4204 = vpow.pop %v4203
      %v4205 = vmul.f32 %v4175, 1.442695
      %v4206 = vpow.pop %v4205
      %v4207 = vmul.f32 %v4176, 1.442695
      %v4208 = vpow.pop %v4207
      %4209 = vadd.xlane.f32.xlu0 %v4178
      %v4210 = vpop.xlane.xlu0 %4209
      %4211 = vadd.xlane.f32.xlu0 %v4180
      %v4212 = vpop.xlane.xlu0 %4211
      %4213 = vadd.xlane.f32.xlu0 %v4182
      %v4214 = vpop.xlane.xlu0 %4213
      %4215 = vadd.xlane.f32.xlu0 %v4184
      %v4216 = vpop.xlane.xlu0 %4215
      %4217 = vadd.xlane.f32.xlu0 %v4186
      %v4218 = vpop.xlane.xlu0 %4217
      %4219 = vadd.xlane.f32.xlu0 %v4188
      %v4220 = vpop.xlane.xlu0 %4219
      %4221 = vadd.xlane.f32.xlu0 %v4190
      %v4222 = vpop.xlane.xlu0 %4221
      %4223 = vadd.xlane.f32.xlu0 %v4192
      %v4224 = vpop.xlane.xlu0 %4223
      %4225 = vadd.xlane.f32.xlu0 %v4194
      %v4226 = vpop.xlane.xlu0 %4225
      %4227 = vadd.xlane.f32.xlu0 %v4196
      %v4228 = vpop.xlane.xlu0 %4227
      %4229 = vadd.xlane.f32.xlu0 %v4198
      %v4230 = vpop.xlane.xlu0 %4229
      %4231 = vadd.xlane.f32.xlu0 %v4200
      %v4232 = vpop.xlane.xlu0 %4231
      %4233 = vadd.xlane.f32.xlu0 %v4202
      %v4234 = vpop.xlane.xlu0 %4233
      %4235 = vadd.xlane.f32.xlu0 %v4204
      %v4236 = vpop.xlane.xlu0 %4235
      %4237 = vadd.xlane.f32.xlu0 %v4206
      %v4238 = vpop.xlane.xlu0 %4237
      %4239 = vadd.xlane.f32.xlu0 %v4208
      %v4240 = vpop.xlane.xlu0 %4239
      %v4241 = vrcp.pop %v4210
      %v4242 = vrcp.pop %v4212
      %v4243 = vrcp.pop %v4214
      %v4244 = vrcp.pop %v4216
      %v4245 = vrcp.pop %v4218
      %v4246 = vrcp.pop %v4220
      %v4247 = vrcp.pop %v4222
      %v4248 = vrcp.pop %v4224
      %v4249 = vrcp.pop %v4226
      %v4250 = vrcp.pop %v4228
      %v4251 = vrcp.pop %v4230
      %v4252 = vrcp.pop %v4232
      %v4253 = vrcp.pop %v4234
      %v4254 = vrcp.pop %v4236
      %v4255 = vrcp.pop %v4238
      %v4256 = vrcp.pop %v4240
      %v4257 = vmul.f32 %v4178, %v4241
      %v4258 = vmul.f32 %v4180, %v4242
      %v4259 = vmul.f32 %v4182, %v4243
      %v4260 = vmul.f32 %v4184, %v4244
      %v4261 = vmul.f32 %v4186, %v4245
      %v4262 = vmul.f32 %v4188, %v4246
      %v4263 = vmul.f32 %v4190, %v4247
      %v4264 = vmul.f32 %v4192, %v4248
      %v4265 = vmul.f32 %v4194, %v4249
      %v4266 = vmul.f32 %v4196, %v4250
      %v4267 = vmul.f32 %v4198, %v4251
      %v4268 = vmul.f32 %v4200, %v4252
      %v4269 = vmul.f32 %v4202, %v4253
      %v4270 = vmul.f32 %v4204, %v4254
      %v4271 = vmul.f32 %v4206, %v4255
      %v4272 = vmul.f32 %v4208, %v4256
      %v4273 = vpack.c.bf16 %v4258, %v4257
      %v4274 = vpack.c.bf16 %v4260, %v4259
      %v4275 = vpack.c.bf16 %v4262, %v4261
      %v4276 = vpack.c.bf16 %v4264, %v4263
      %v4277 = vpack.c.bf16 %v4266, %v4265
      %v4278 = vpack.c.bf16 %v4268, %v4267
      %v4279 = vpack.c.bf16 %v4270, %v4269
      %v4280 = vpack.c.bf16 %v4272, %v4271
      %4281 = vmatprep.subr.bf16.mxu0 0
      %4282 = vmatpush1.bf16.msra.mxu0 %v818
      %4283 = vmatprep.subr.bf16.mxu0 0
      %4284 = vmatpush1.bf16.msra.mxu0 %v819
      %4285 = vmatprep.subr.bf16.mxu0 0
      %4286 = vmatpush1.bf16.msra.mxu0 %v820
      %4287 = vmatprep.subr.bf16.mxu0 0
      %4288 = vmatpush1.bf16.msra.mxu0 %v821
      %4289 = vmatprep.subr.bf16.mxu0 0
      %4290 = vmatpush1.bf16.msra.mxu0 %v822
      %4291 = vmatprep.subr.bf16.mxu0 0
      %4292 = vmatpush1.bf16.msra.mxu0 %v823
      %4293 = vmatprep.subr.bf16.mxu0 0
      %4294 = vmatpush1.bf16.msra.mxu0 %v824
      %4295 = vmatprep.subr.bf16.mxu0 0
      %4296 = vmatpush1.bf16.msra.mxu0 %v825
      %4297 = vmatprep.subr.bf16.mxu0 0
      %4298 = vmatpush1.bf16.msra.mxu0 0
      %4299 = vmatprep.subr.bf16.mxu0 0
      %4300 = vmatpush1.bf16.msra.mxu0 0
      %4301 = vmatprep.subr.bf16.mxu0 0
      %4302 = vmatpush1.bf16.msra.mxu0 0
      %4303 = vmatprep.subr.bf16.mxu0 0
      %4304 = vmatpush1.bf16.msra.mxu0 0
      %4305 = vmatprep.subr.bf16.mxu0 0
      %4306 = vmatpush1.bf16.msra.mxu0 0
      %4307 = vmatprep.subr.bf16.mxu0 0
      %4308 = vmatpush1.bf16.msra.mxu0 0
      %4309 = vmatprep.subr.bf16.mxu0 0
      %4310 = vmatpush1.bf16.msra.mxu0 0
      %4311 = vmatprep.subr.bf16.mxu0 0
      %4312 = vmatpush1.bf16.msra.mxu0 0
      %4313 = vmatprep.mubr.bf16.mxu0 0
      %4314 = vmatmul.mubr.bf16.gmra.mrb[0].mxu0 %v4273
      %v4315 = vpop.f32.mrb[0].mxu0
      %v4316 = vadd.f32 0.0, %v4315
      %v4317 = vpop.f32.mrb[0].mxu0
      %v4318 = vpop.f32.mrb[0].mxu0
      %v4319 = vadd.f32 0.0, %v4318
      %v4320 = vpop.f32.mrb[0].mxu0
      %4321 = vmatprep.mubr.bf16.mxu0 0
      %4322 = vmatmul.mubr.bf16.gmra.mrb[0].mxu0 %v4274
      %v4323 = vpop.f32.mrb[0].mxu0
      %v4324 = vadd.f32 0.0, %v4323
      %v4325 = vpop.f32.mrb[0].mxu0
      %v4326 = vpop.f32.mrb[0].mxu0
      %v4327 = vadd.f32 0.0, %v4326
      %v4328 = vpop.f32.mrb[0].mxu0
      %4329 = vmatprep.mubr.bf16.mxu0 0
      %4330 = vmatmul.mubr.bf16.gmra.mrb[0].mxu0 %v4275
      %v4331 = vpop.f32.mrb[0].mxu0
      %v4332 = vadd.f32 0.0, %v4331
      %v4333 = vpop.f32.mrb[0].mxu0
      %v4334 = vpop.f32.mrb[0].mxu0
      %v4335 = vadd.f32 0.0, %v4334
      %v4336 = vpop.f32.mrb[0].mxu0
      %4337 = vmatprep.mubr.bf16.mxu0 0
      %4338 = vmatmul.mubr.bf16.gmra.mrb[0].mxu0 %v4276
      %v4339 = vpop.f32.mrb[0].mxu0
      %v4340 = vadd.f32 0.0, %v4339
      %v4341 = vpop.f32.mrb[0].mxu0
      %v4342 = vpop.f32.mrb[0].mxu0
      %v4343 = vadd.f32 0.0, %v4342
      %v4344 = vpop.f32.mrb[0].mxu0
      %4345 = vmatprep.mubr.bf16.mxu0 0
      %4346 = vmatmul.mubr.bf16.gmra.mrb[0].mxu0 %v4277
      %v4347 = vpop.f32.mrb[0].mxu0
      %v4348 = vadd.f32 0.0, %v4347
      %v4349 = vpop.f32.mrb[0].mxu0
      %v4350 = vpop.f32.mrb[0].mxu0
      %v4351 = vadd.f32 0.0, %v4350
      %v4352 = vpop.f32.mrb[0].mxu0
      %4353 = vmatprep.mubr.bf16.mxu0 0
      %4354 = vmatmul.mubr.bf16.gmra.mrb[0].mxu0 %v4278
      %v4355 = vpop.f32.mrb[0].mxu0
      %v4356 = vadd.f32 0.0, %v4355
      %v4357 = vpop.f32.mrb[0].mxu0
      %v4358 = vpop.f32.mrb[0].mxu0
      %v4359 = vadd.f32 0.0, %v4358
      %v4360 = vpop.f32.mrb[0].mxu0
      %4361 = vmatprep.mubr.bf16.mxu0 0
      %4362 = vmatmul.mubr.bf16.gmra.mrb[0].mxu0 %v4279
      %v4363 = vpop.f32.mrb[0].mxu0
      %v4364 = vadd.f32 0.0, %v4363
      %v4365 = vpop.f32.mrb[0].mxu0
      %v4366 = vpop.f32.mrb[0].mxu0
      %v4367 = vadd.f32 0.0, %v4366
      %v4368 = vpop.f32.mrb[0].mxu0
      %4369 = vmatprep.mubr.bf16.mxu0 0
      %4370 = vmatmul.mubr.bf16.gmra.mrb[0].mxu0 %v4280
      %v4371 = vpop.f32.mrb[0].mxu0
      %v4372 = vadd.f32 0.0, %v4371
      %v4373 = vpop.f32.mrb[0].mxu0
      %v4374 = vpop.f32.mrb[0].mxu0
      %v4375 = vadd.f32 0.0, %v4374
      %v4376 = vpop.f32.mrb[0].mxu0
      %4377 = vdwg.mxu0
      %v4378 = vld [vmem:[%s5 + $0x7] sm:$0x1]
      %v4379 = vlaneseq
      %v4380 = vshrl.u32 %v4379, 7
      %v4381 = vsub.s32 0, %v4380
      %v4382 = vrot.slane %v4378, %v4381
      %v4383 = vmul.f32 %v4316, %v4382
      %v4384 = vmul.f32 %v4319, %v4382
      %v4385 = vmul.f32 %v4324, %v4382
      %v4386 = vmul.f32 %v4327, %v4382
      %v4387 = vmul.f32 %v4332, %v4382
      %v4388 = vmul.f32 %v4335, %v4382
      %v4389 = vmul.f32 %v4340, %v4382
      %v4390 = vmul.f32 %v4343, %v4382
      %v4391 = vmul.f32 %v4348, %v4382
      %v4392 = vmul.f32 %v4351, %v4382
      %v4393 = vmul.f32 %v4356, %v4382
      %v4394 = vmul.f32 %v4359, %v4382
      %v4395 = vmul.f32 %v4364, %v4382
      %v4396 = vmul.f32 %v4367, %v4382
      %v4397 = vmul.f32 %v4372, %v4382
      %v4398 = vmul.f32 %v4375, %v4382
      %v4399 = vadd.f32 %v3961, %v4383
      %v4400 = vadd.f32 %v3962, %v4384
      %v4401 = vadd.f32 %v3963, %v4385
      %v4402 = vadd.f32 %v3964, %v4386
      %v4403 = vadd.f32 %v3965, %v4387
      %v4404 = vadd.f32 %v3966, %v4388
      %v4405 = vadd.f32 %v3967, %v4389
      %v4406 = vadd.f32 %v3968, %v4390
      %v4407 = vadd.f32 %v3969, %v4391
      %v4408 = vadd.f32 %v3970, %v4392
      %v4409 = vadd.f32 %v3971, %v4393
      %v4410 = vadd.f32 %v3972, %v4394
      %v4411 = vadd.f32 %v3973, %v4395
      %v4412 = vadd.f32 %v3974, %v4396
      %v4413 = vadd.f32 %v3975, %v4397
      %v4414 = vadd.f32 %v3976, %v4398
      %v4415 = vld [vmem:[%s6] sm:$0x1]
      %v4416 = vmul.f32 %v4415, %v879
      %v4418 = vlaneseq
      %v4419 = vshrl.u32 %v4418, 7
      %v4420 = vsub.s32 0, %v4419
      %v4421 = vrot.slane %v4416, %v4420
      %v4423 = vadd.f32 %v4399, %v4421
      %v4424 = vadd.f32 %v4400, %v4421
      %v4425 = vadd.f32 %v4401, %v4421
      %v4426 = vadd.f32 %v4402, %v4421
      %v4427 = vadd.f32 %v4403, %v4421
      %v4428 = vadd.f32 %v4404, %v4421
      %v4429 = vadd.f32 %v4405, %v4421
      %v4430 = vadd.f32 %v4406, %v4421
      %v4431 = vadd.f32 %v4407, %v4421
      %v4432 = vadd.f32 %v4408, %v4421
      %v4433 = vadd.f32 %v4409, %v4421
      %v4434 = vadd.f32 %v4410, %v4421
      %v4435 = vadd.f32 %v4411, %v4421
      %v4436 = vadd.f32 %v4412, %v4421
      %v4437 = vadd.f32 %v4413, %v4421
      %v4438 = vadd.f32 %v4414, %v4421
      %v4439 = vpack.c.bf16 %v4424, %v4423
      %v4440 = vpack.c.bf16 %v4426, %v4425
      %v4441 = vpack.c.bf16 %v4428, %v4427
      %v4442 = vpack.c.bf16 %v4430, %v4429
      %v4443 = vpack.c.bf16 %v4432, %v4431
      %v4444 = vpack.c.bf16 %v4434, %v4433
      %v4445 = vpack.c.bf16 %v4436, %v4435
      %v4446 = vpack.c.bf16 %v4438, %v4437
      %v4447 = vld [vmem:[%s7] sm:$0xf]
      %v4448 = vld [vmem:[%s7 + $0x4] sm:$0xf]
      %v4449 = vld [vmem:[%s7 + $0x8] sm:$0xf]
      %v4450 = vld [vmem:[%s7 + $0xc] sm:$0xf]
      %v4451 = vld [vmem:[%s8] sm:$0x1]
      %v4453 = vlaneseq
      %v4454 = vshrl.u32 %v4453, 7
      %v4455 = vsub.s32 0, %v4454
      %v4456 = vrot.slane %v4451, %v4455
      %v4462 = vunpack.c.l.b16 %v4447
      %v4463 = vunpack.c.l.b16 %v4448
      %v4464 = vunpack.c.l.b16 %v4449
      %v4465 = vunpack.c.l.b16 %v4450
      %v4466 = vpack.c.b16 %v4463, %v4462
      %v4467 = vpack.c.b16 %v4465, %v4464
      %v4471 = vsel %vm842, %v4439, 0
      %v4474 = vsel %vm842, %v4440, 0
      %v4477 = vsel %vm842, %v4441, 0
      %v4480 = vsel %vm842, %v4442, 0
      %v4483 = vsel %vm842, %v4443, 0
      %v4486 = vsel %vm842, %v4444, 0
      %v4489 = vsel %vm842, %v4445, 0
      %v4492 = vsel %vm842, %v4446, 0
      %4494 = vmatprep.subr.bf16.mxu0 0
      %4495 = vmatpush1.bf16.msra.mxu0 %v4466
      %4496 = vmatprep.subr.bf16.mxu0 0
      %4497 = vmatpush1.bf16.msra.mxu0 %v4467
      %4498 = vmatprep.subr.bf16.mxu0 0
      %4499 = vmatpush1.bf16.msra.mxu0 0
      %4500 = vmatprep.subr.bf16.mxu0 0
      %4501 = vmatpush1.bf16.msra.mxu0 0
      %4502 = vmatprep.subr.bf16.mxu0 0
      %4503 = vmatpush1.bf16.msra.mxu0 0
      %4504 = vmatprep.subr.bf16.mxu0 0
      %4505 = vmatpush1.bf16.msra.mxu0 0
      %4506 = vmatprep.subr.bf16.mxu0 0
      %4507 = vmatpush1.bf16.msra.mxu0 0
      %4508 = vmatprep.subr.bf16.mxu0 0
      %4509 = vmatpush1.bf16.msra.mxu0 0
      %4510 = vmatprep.subr.bf16.mxu0 0
      %4511 = vmatpush1.bf16.msra.mxu0 0
      %4512 = vmatprep.subr.bf16.mxu0 0
      %4513 = vmatpush1.bf16.msra.mxu0 0
      %4514 = vmatprep.subr.bf16.mxu0 0
      %4515 = vmatpush1.bf16.msra.mxu0 0
      %4516 = vmatprep.subr.bf16.mxu0 0
      %4517 = vmatpush1.bf16.msra.mxu0 0
      %4518 = vmatprep.subr.bf16.mxu0 0
      %4519 = vmatpush1.bf16.msra.mxu0 0
      %4520 = vmatprep.subr.bf16.mxu0 0
      %4521 = vmatpush1.bf16.msra.mxu0 0
      %4522 = vmatprep.subr.bf16.mxu0 0
      %4523 = vmatpush1.bf16.msra.mxu0 0
      %4524 = vmatprep.subr.bf16.mxu0 0
      %4525 = vmatpush1.bf16.msra.mxu0 0
      %4526 = vmatprep.mubr.bf16.mxu0 0
      %4527 = vmatmul.mubr.bf16.gmra.mrb[0].mxu0 %v4471
      %v4528 = vpop.f32.mrb[0].mxu0
      %v4529 = vadd.f32 %v4456, %v4528
      %v4530 = vpop.f32.mrb[0].mxu0
      %v4531 = vpop.f32.mrb[0].mxu0
      %v4532 = vadd.f32 %v4456, %v4531
      %v4533 = vpop.f32.mrb[0].mxu0
      %4534 = vmatprep.mubr.bf16.mxu0 0
      %4535 = vmatmul.mubr.bf16.gmra.mrb[0].mxu0 %v4474
      %v4536 = vpop.f32.mrb[0].mxu0
      %v4537 = vadd.f32 %v4456, %v4536
      %v4538 = vpop.f32.mrb[0].mxu0
      %v4539 = vpop.f32.mrb[0].mxu0
      %v4540 = vadd.f32 %v4456, %v4539
      %v4541 = vpop.f32.mrb[0].mxu0
      %4542 = vmatprep.mubr.bf16.mxu0 0
      %4543 = vmatmul.mubr.bf16.gmra.mrb[0].mxu0 %v4477
      %v4544 = vpop.f32.mrb[0].mxu0
      %v4545 = vadd.f32 %v4456, %v4544
      %v4546 = vpop.f32.mrb[0].mxu0
      %v4547 = vpop.f32.mrb[0].mxu0
      %v4548 = vadd.f32 %v4456, %v4547
      %v4549 = vpop.f32.mrb[0].mxu0
      %4550 = vmatprep.mubr.bf16.mxu0 0
      %4551 = vmatmul.mubr.bf16.gmra.mrb[0].mxu0 %v4480
      %v4552 = vpop.f32.mrb[0].mxu0
      %v4553 = vadd.f32 %v4456, %v4552
      %v4554 = vpop.f32.mrb[0].mxu0
      %v4555 = vpop.f32.mrb[0].mxu0
      %v4556 = vadd.f32 %v4456, %v4555
      %v4557 = vpop.f32.mrb[0].mxu0
      %4558 = vmatprep.mubr.bf16.mxu0 0
      %4559 = vmatmul.mubr.bf16.gmra.mrb[0].mxu0 %v4483
      %v4560 = vpop.f32.mrb[0].mxu0
      %v4561 = vadd.f32 %v4456, %v4560
      %v4562 = vpop.f32.mrb[0].mxu0
      %v4563 = vpop.f32.mrb[0].mxu0
      %v4564 = vadd.f32 %v4456, %v4563
      %v4565 = vpop.f32.mrb[0].mxu0
      %4566 = vmatprep.mubr.bf16.mxu0 0
      %4567 = vmatmul.mubr.bf16.gmra.mrb[0].mxu0 %v4486
      %v4568 = vpop.f32.mrb[0].mxu0
      %v4569 = vadd.f32 %v4456, %v4568
      %v4570 = vpop.f32.mrb[0].mxu0
      %v4571 = vpop.f32.mrb[0].mxu0
      %v4572 = vadd.f32 %v4456, %v4571
      %v4573 = vpop.f32.mrb[0].mxu0
      %4574 = vmatprep.mubr.bf16.mxu0 0
      %4575 = vmatmul.mubr.bf16.gmra.mrb[0].mxu0 %v4489
      %v4576 = vpop.f32.mrb[0].mxu0
      %v4577 = vadd.f32 %v4456, %v4576
      %v4578 = vpop.f32.mrb[0].mxu0
      %v4579 = vpop.f32.mrb[0].mxu0
      %v4580 = vadd.f32 %v4456, %v4579
      %v4581 = vpop.f32.mrb[0].mxu0
      %4582 = vmatprep.mubr.bf16.mxu0 0
      %4583 = vmatmul.mubr.bf16.gmra.mrb[0].mxu0 %v4492
      %v4584 = vpop.f32.mrb[0].mxu0
      %v4585 = vadd.f32 %v4456, %v4584
      %v4586 = vpop.f32.mrb[0].mxu0
      %v4587 = vpop.f32.mrb[0].mxu0
      %v4588 = vadd.f32 %v4456, %v4587
      %v4589 = vpop.f32.mrb[0].mxu0
      %4590 = vdwg.mxu0
      %4591 = vst.msk [vmem:[%s354] sm:$0xff] %vm842, %v4529
      %4592 = vst.msk [vmem:[%s354 + $0x8] sm:$0xff] %vm842, %v4532
      %4593 = vst.msk [vmem:[%s354 + $0x10] sm:$0xff] %vm842, %v4537
      %4594 = vst.msk [vmem:[%s354 + $0x18] sm:$0xff] %vm842, %v4540
      %4595 = vst.msk [vmem:[%s354 + $0x20] sm:$0xff] %vm842, %v4545
      %4596 = vst.msk [vmem:[%s354 + $0x28] sm:$0xff] %vm842, %v4548
      %4597 = vst.msk [vmem:[%s354 + $0x30] sm:$0xff] %vm842, %v4553
      %4598 = vst.msk [vmem:[%s354 + $0x38] sm:$0xff] %vm842, %v4556
      %4599 = vst.msk [vmem:[%s354 + $0x40] sm:$0xff] %vm842, %v4561
      %4600 = vst.msk [vmem:[%s354 + $0x48] sm:$0xff] %vm842, %v4564
      %4601 = vst.msk [vmem:[%s354 + $0x50] sm:$0xff] %vm842, %v4569
      %4602 = vst.msk [vmem:[%s354 + $0x58] sm:$0xff] %vm842, %v4572
      %4603 = vst.msk [vmem:[%s354 + $0x60] sm:$0xff] %vm842, %v4577
      %4604 = vst.msk [vmem:[%s354 + $0x68] sm:$0xff] %vm842, %v4580
      %4605 = vst.msk [vmem:[%s354 + $0x70] sm:$0xff] %vm842, %v4585
      %4606 = vst.msk [vmem:[%s354 + $0x78] sm:$0xff] %vm842, %v4588
      %s4607 = smul.u32 16, %s25
      %p4608 = scmp.lt.s32.totalorder %s24, 1
      %s4609 = scalar_select %p4608, %s24, 1
      %p4610 = scmp.lt.s32.totalorder %s4607, 15
      %s4611 = scalar_select %p4610, %s4607, 15
      %s4612 = smul.addr %s4609, 16
      %s4613 = sadd.s32 %s4611, %s4612
      %s4614 = smul.addr %s4613, 8
      %s4615 = scalar_lea.vmem %s9, %s4614
      // Predicated region
      $region61: #{tpu_custom_call.1} parent=55 // pred_check
        %p4616 = pneg %p246
      $region62: #{tpu_custom_call.1} parent=55 // pred_check_branch
        %4618 = sbr.rel (%p4616) target = $region64
      $region63: #{tpu_custom_call.1} parent=55 // pred_region
        %s4619 = smul.u32 16, %s25
      $region64: #{tpu_custom_call.1} parent=55 // pred_fallthru
        _
    $region56: #{tpu_custom_call.1} parent=5 // pred_fallthru
      _
    %p4620 = scmp.le.s32.totalorder 2, %s15
    // Predicated region
    $region65: #{tpu_custom_call.1} parent=5 // pred_check
      %p4621 = pneg %p4620
    $region66: #{tpu_custom_call.1} parent=5 // pred_check_branch
      %4623 = sbr.rel (%p4621) target = $region68
    $region67: #{tpu_custom_call.1} parent=5 // pred_region
      %s4624 = ssub.s32 %s15, 2
      // Predicated region
      $region69: #{tpu_custom_call.1} parent=67 // pred_check
        %p4625 = pneg %p252
      $region70: #{tpu_custom_call.1} parent=67 // pred_check_branch
        %4627 = sbr.rel (%p4625) target = $region72
      $region71: #{tpu_custom_call.1} parent=67 // pred_region
        %s4628 = smul.u32 16, %s27
        %p4629 = scmp.lt.s32.totalorder %s26, 1
        %s4630 = scalar_select %p4629, %s26, 1
        %p4631 = scmp.lt.s32.totalorder %s4628, 15
        %s4632 = scalar_select %p4631, %s4628, 15
        %s4633 = smul.addr %s4630, 16
        %s4634 = sadd.s32 %s4632, %s4633
        %s4635 = smul.addr %s4634, 8
        %s4636 = scalar_lea.vmem %s9, %s4635
      $region72: #{tpu_custom_call.1} parent=67 // pred_fallthru
        _
    $region68: #{tpu_custom_call.1} parent=5 // pred_fallthru
      _
  $region6: #{tpu_custom_call.1} parent=0 // loop_footer
    %s19 = sadd.s32 1, %s15
  $region7: #{tpu_custom_call.1} parent=0 // loop_footer_branch
    %14 = sbr.rel target = $region3
  $region8: #{tpu_custom_call.1} parent=0 // loop_exit
    _

</llo_original>
